<compile_context>
chip_gen: v6e
topology: v6e:2x2x1
jax: 0.10.0
libtpu: 0.0.40
codegen_flags: <defaults>
</compile_context>

<pallas_src>
import functools

import jax
import jax.numpy as jnp
from jax.experimental import pallas as pl
from jax.experimental.pallas import tpu as pltpu

_INV_SQRT2 = 0.7071067811865476
_LN_EPS = 1e-5  # PyTorch nn.LayerNorm default


def _gelu_exact(x):
    # exact (erf) GELU, matching torch.nn.GELU() default
    return 0.5 * x * (1.0 + jax.lax.erf(x * _INV_SQRT2))


def _layernorm(x, g, b):
    mu = jnp.mean(x, axis=-1, keepdims=True)
    var = jnp.mean((x - mu) ** 2, axis=-1, keepdims=True)
    return (x - mu) * jax.lax.rsqrt(var + _LN_EPS) * g + b


# --------------------------------------------------------------------------- #
# One fused Pallas kernel: conditioning + all encoder layers + proj_out +
# logits head.  Every array is small enough to live in VMEM, so a single
# launch covers the whole forward pass.
# --------------------------------------------------------------------------- #
def _maskgit_kernel(
    x_ref, c_ref,
    cond_w_ref, cond_b_ref,
    ln1_g_ref, ln1_b_ref,
    wqkv_ref, bqkv_ref,
    wo_ref, bo_ref,
    ln2_g_ref, ln2_b_ref,
    w1_ref, b1_ref,
    w2_ref, b2_ref,
    lnf_g_ref, lnf_b_ref,
    proj_w_ref, proj_b_ref,
    proj_ln_g_ref, proj_ln_b_ref,
    embT_ref, bias_ref,
    o_ref,
    attn_scratch,
    *, num_heads):
    B, S, D = x_ref.shape
    H = num_heads
    Dh = D // H
    L = ln1_g_ref.shape[0]
    scale = 1.0 / (Dh ** 0.5)
    f32 = jnp.float32

    # conditioning: c @ Wc + bc, broadcast over the sequence, flatten to (B*S, D)
    cond = jnp.dot(c_ref[...], cond_w_ref[...], preferred_element_type=f32) + cond_b_ref[...]
    xf = (x_ref[...].astype(f32) + cond[:, None, :]).reshape(B * S, D)

    for li in range(L):
        # ---- multi-head self-attention (pre-LN), fused QKV projection ----
        h = _layernorm(xf, ln1_g_ref[li], ln1_b_ref[li])
        qkv = jnp.dot(h, wqkv_ref[li], preferred_element_type=f32) + bqkv_ref[li]
        # leading-dim reshape only (lane dim D untouched) -> cheap relayout
        q3 = qkv[:, :D].reshape(B, S, D)
        k3 = qkv[:, D:2 * D].reshape(B, S, D)
        v3 = qkv[:, 2 * D:].reshape(B, S, D)
        # per-head softmax-attention, batched over B via 3-D einsums
        for hh in range(H):
            c0 = hh * Dh
            qh = q3[:, :, c0:c0 + Dh]
            kh = k3[:, :, c0:c0 + Dh]
            vh = v3[:, :, c0:c0 + Dh]
            s = jnp.einsum('bqd,bkd->bqk', qh, kh,
                           preferred_element_type=f32) * scale
            s = s - jnp.max(s, axis=-1, keepdims=True)
            p = jnp.exp(s)
            p = p / jnp.sum(p, axis=-1, keepdims=True)
            attn_scratch[:, :, c0:c0 + Dh] = jnp.einsum(
                'bqk,bkd->bqd', p, vh, preferred_element_type=f32)
        a = jnp.dot(attn_scratch[...].reshape(B * S, D), wo_ref[li],
                    preferred_element_type=f32) + bo_ref[li]
        xf = xf + a

        # ---- MLP (pre-LN) ----
        h = _layernorm(xf, ln2_g_ref[li], ln2_b_ref[li])
        h = _gelu_exact(jnp.dot(h, w1_ref[li], preferred_element_type=f32) + b1_ref[li])
        h = jnp.dot(h, w2_ref[li], preferred_element_type=f32) + b2_ref[li]
        xf = xf + h

    # ---- tail: final LN -> proj_out (Linear -> GELU -> LN) -> logits head ----
    h = _layernorm(xf, lnf_g_ref[...], lnf_b_ref[...])
    h = _gelu_exact(jnp.dot(h, proj_w_ref[...], preferred_element_type=f32) + proj_b_ref[...])
    h = _layernorm(h, proj_ln_g_ref[...], proj_ln_b_ref[...])
    logits = jnp.dot(h, embT_ref[...], preferred_element_type=f32)  # (B*S, V)
    V = embT_ref.shape[1]
    # single lane-dense store of the whole (B, S, V) output
    o_ref[...] = (logits.reshape(B, S, V) + bias_ref[...]).astype(o_ref.dtype)


def maskgit_forward(params, masked_embedding, c, token_embed, *, num_heads):
    B, S, D = masked_embedding.shape
    V = token_embed.shape[0]
    kern = functools.partial(_maskgit_kernel, num_heads=num_heads)
    return pl.pallas_call(
        kern,
        out_shape=jax.ShapeDtypeStruct((B, S, V), jnp.float32),
        scratch_shapes=[pltpu.VMEM((B, S, D), jnp.float32)],
    )(
        masked_embedding, c,
        params["cond_w"], params["cond_b"],
        params["ln1_g"], params["ln1_b"],
        params["wqkv"], params["bqkv"],
        params["wo"], params["bo"],
        params["ln2_g"], params["ln2_b"],
        params["w1"], params["b1"],
        params["w2"], params["b2"],
        params["lnf_g"], params["lnf_b"],
        params["proj_w"], params["proj_b"],
        params["proj_ln_g"], params["proj_ln_b"],
        token_embed.T,          # pre-transposed once in HBM -> (D, V), no in-kernel .T
        params["bias"],
    )


# --------------------------------------------------------------------------- #
# Parameters (deterministic, synthetic), per-layer weights stacked on axis 0
# --------------------------------------------------------------------------- #
def init_params(key, *, n_tokens, n_pos, embed_dim, num_heads, fc_dim, n_layers, c_dim):
    del num_heads
    keys = iter(jax.random.split(key, 8))

    def dense(fan_in, fan_out, batch=None):
        shape = (fan_in, fan_out) if batch is None else (batch, fan_in, fan_out)
        w = 0.02 * jax.random.normal(next(keys), shape, jnp.float32)
        b_shape = (1, fan_out) if batch is None else (batch, 1, fan_out)
        return w, jnp.zeros(b_shape, jnp.float32)

    L, D, F = n_layers, embed_dim, fc_dim
    p = {}
    p["cond_w"], p["cond_b"] = dense(c_dim, D)
    p["ln1_g"] = jnp.ones((L, 1, D), jnp.float32)
    p["ln1_b"] = jnp.zeros((L, 1, D), jnp.float32)
    p["wqkv"], p["bqkv"] = dense(D, 3 * D, batch=L)      # fused q/k/v projection
    p["wo"], p["bo"] = dense(D, D, batch=L)
    p["ln2_g"] = jnp.ones((L, 1, D), jnp.float32)
    p["ln2_b"] = jnp.zeros((L, 1, D), jnp.float32)
    p["w1"], p["b1"] = dense(D, F, batch=L)
    p["w2"], p["b2"] = dense(F, D, batch=L)
    p["lnf_g"] = jnp.ones((1, D), jnp.float32)
    p["lnf_b"] = jnp.zeros((1, D), jnp.float32)
    p["proj_w"], p["proj_b"] = dense(D, D)
    p["proj_ln_g"] = jnp.ones((1, D), jnp.float32)
    p["proj_ln_b"] = jnp.zeros((1, D), jnp.float32)
    p["bias"] = jnp.zeros((n_pos, n_tokens), jnp.float32)  # nn.Parameter(torch.zeros)
    return p


# --------------------------------------------------------------------------- #
# Pure-JAX reference (same math, same parameters)
# --------------------------------------------------------------------------- #
def maskgit_forward_ref(params, masked_embedding, c, token_embed, *, num_heads):
    B, S, D = masked_embedding.shape
    H = num_heads
    Dh = D // H

    def ln(x, g, b):
        mu = jnp.mean(x, axis=-1, keepdims=True)
        var = jnp.mean((x - mu) ** 2, axis=-1, keepdims=True)
        return (x - mu) * jax.lax.rsqrt(var + _LN_EPS) * g + b

    x = masked_embedding + (c @ params["cond_w"] + params["cond_b"])[:, None, :]
    L = params["wqkv"].shape[0]
    for li in range(L):
        h = ln(x, params["ln1_g"][li], params["ln1_b"][li])
        qkv = h @ params["wqkv"][li] + params["bqkv"][li]
        q, k, v = jnp.split(qkv, 3, axis=-1)
        q = q.reshape(B, S, H, Dh).transpose(0, 2, 1, 3)
        k = k.reshape(B, S, H, Dh).transpose(0, 2, 1, 3)
        v = v.reshape(B, S, H, Dh).transpose(0, 2, 1, 3)
        s = jnp.einsum("bhqd,bhkd->bhqk", q, k) / (Dh ** 0.5)
        p = jax.nn.softmax(s, axis=-1)
        a = jnp.einsum("bhqk,bhkd->bhqd", p, v).transpose(0, 2, 1, 3).reshape(B, S, D)
        x = x + (a @ params["wo"][li] + params["bo"][li])
        h = ln(x, params["ln2_g"][li], params["ln2_b"][li])
        h = jax.nn.gelu(h @ params["w1"][li] + params["b1"][li], approximate=False)
        x = x + (h @ params["w2"][li] + params["b2"][li])
    x = ln(x, params["lnf_g"], params["lnf_b"])
    h = jax.nn.gelu(x @ params["proj_w"] + params["proj_b"], approximate=False)
    h = ln(h, params["proj_ln_g"], params["proj_ln_b"])
    return h @ token_embed.T + params["bias"]


# --------------------------------------------------------------------------- #
if __name__ == "__main__":
    # Small config consistent with MaskGITTensor's constructor.
    B = 2
    N_TOKENS = 64     # n_tokens
    N_POS = 16        # n_pos (sequence length)
    EMBED_DIM = 32    # embed_dim
    NUM_HEADS = 4     # num_heads
    FC_DIM = 64       # fc_dim
    N_LAYERS = 2      # n_layers
    C_DIM = 16        # c_dim

    root = jax.random.PRNGKey(0)
    kp, k1, k2, k3 = jax.random.split(root, 4)

    params = init_params(
        kp, n_tokens=N_TOKENS, n_pos=N_POS, embed_dim=EMBED_DIM,
        num_heads=NUM_HEADS, fc_dim=FC_DIM, n_layers=N_LAYERS, c_dim=C_DIM)

    masked_embedding = jax.random.normal(k1, (B, N_POS, EMBED_DIM), jnp.float32)
    c = jax.random.normal(k2, (B, C_DIM), jnp.float32)
    token_embed = jax.random.normal(k3, (N_TOKENS, EMBED_DIM), jnp.float32)

    logits = maskgit_forward(params, masked_embedding, c, token_embed,
                             num_heads=NUM_HEADS)
    logits = jax.block_until_ready(logits)

    ref = maskgit_forward_ref(params, masked_embedding, c, token_embed,
                              num_heads=NUM_HEADS)
    ref = jax.block_until_ready(ref)

    assert logits.shape == (B, N_POS, N_TOKENS)
    assert jnp.allclose(logits, ref, rtol=1e-3, atol=1e-3), (
        float(jnp.max(jnp.abs(logits - ref))))

    print("KERNEL_OK")
</pallas_src>

<mosaic_0001>
module attributes {stable_mosaic.version = 11 : i64} {
  func.func @_maskgit_kernel(%arg0: memref<2x16x32xf32, #tpu.memory_space<vmem>>, %arg1: memref<2x16xf32, #tpu.memory_space<vmem>>, %arg2: memref<16x32xf32, #tpu.memory_space<vmem>>, %arg3: memref<1x32xf32, #tpu.memory_space<vmem>>, %arg4: memref<2x1x32xf32, #tpu.memory_space<vmem>>, %arg5: memref<2x1x32xf32, #tpu.memory_space<vmem>>, %arg6: memref<2x32x96xf32, #tpu.memory_space<vmem>>, %arg7: memref<2x1x96xf32, #tpu.memory_space<vmem>>, %arg8: memref<2x32x32xf32, #tpu.memory_space<vmem>>, %arg9: memref<2x1x32xf32, #tpu.memory_space<vmem>>, %arg10: memref<2x1x32xf32, #tpu.memory_space<vmem>>, %arg11: memref<2x1x32xf32, #tpu.memory_space<vmem>>, %arg12: memref<2x32x64xf32, #tpu.memory_space<vmem>>, %arg13: memref<2x1x64xf32, #tpu.memory_space<vmem>>, %arg14: memref<2x64x32xf32, #tpu.memory_space<vmem>>, %arg15: memref<2x1x32xf32, #tpu.memory_space<vmem>>, %arg16: memref<1x32xf32, #tpu.memory_space<vmem>>, %arg17: memref<1x32xf32, #tpu.memory_space<vmem>>, %arg18: memref<32x32xf32, #tpu.memory_space<vmem>>, %arg19: memref<1x32xf32, #tpu.memory_space<vmem>>, %arg20: memref<1x32xf32, #tpu.memory_space<vmem>>, %arg21: memref<1x32xf32, #tpu.memory_space<vmem>>, %arg22: memref<32x64xf32, #tpu.memory_space<vmem>>, %arg23: memref<16x64xf32, #tpu.memory_space<vmem>>, %arg24: memref<2x16x64xf32, #tpu.memory_space<vmem>>, %arg25: memref<2x16x32xf32, #tpu.memory_space<vmem>>) attributes {dimension_semantics = [], scalar_prefetch = 0 : i64, scratch_operands = 1 : i64, tpu.core_type = #tpu.core_type<tc>} {
    %c0 = arith.constant 0 : index
    %c0_0 = arith.constant 0 : index
    %0 = vector.load %arg1[%c0, %c0_0] : memref<2x16xf32, #tpu.memory_space<vmem>>, vector<2x16xf32>
    %c0_1 = arith.constant 0 : index
    %c0_2 = arith.constant 0 : index
    %1 = vector.load %arg2[%c0_1, %c0_2] : memref<16x32xf32, #tpu.memory_space<vmem>>, vector<16x32xf32>
    %cst = arith.constant dense<0.000000e+00> : vector<2x32xf32>
    %2 = tpu.matmul %0, %1, %cst {dimension_numbers = #tpu.dot_dimension_numbers<[1], [0], [0], [1], [0, 0, 1, 1], [], []>} : vector<2x16xf32>, vector<16x32xf32>, vector<2x32xf32> -> vector<2x32xf32>
    %c0_3 = arith.constant 0 : index
    %c0_4 = arith.constant 0 : index
    %3 = vector.load %arg3[%c0_3, %c0_4] : memref<1x32xf32, #tpu.memory_space<vmem>>, vector<1x32xf32>
    %4 = vector.broadcast %3 : vector<1x32xf32> to vector<2x32xf32>
    %5 = arith.addf %2, %4 : vector<2x32xf32>
    %c0_5 = arith.constant 0 : index
    %c0_6 = arith.constant 0 : index
    %c0_7 = arith.constant 0 : index
    %6 = vector.load %arg0[%c0_5, %c0_6, %c0_7] : memref<2x16x32xf32, #tpu.memory_space<vmem>>, vector<2x16x32xf32>
    %7 = vector.shape_cast %5 : vector<2x32xf32> to vector<2x1x32xf32>
    %8 = vector.broadcast %7 : vector<2x1x32xf32> to vector<2x16x32xf32>
    %9 = arith.addf %6, %8 : vector<2x16x32xf32>
    %10 = vector.shape_cast %9 : vector<2x16x32xf32> to vector<32x32xf32>
    %c0_8 = arith.constant 0 : index
    %c0_9 = arith.constant 0 : index
    %c0_10 = arith.constant 0 : index
    %11 = vector.load %arg4[%c0_8, %c0_9, %c0_10] : memref<2x1x32xf32, #tpu.memory_space<vmem>>, vector<1x1x32xf32>
    %12 = vector.shape_cast %11 : vector<1x1x32xf32> to vector<1x32xf32>
    %c0_11 = arith.constant 0 : index
    %c0_12 = arith.constant 0 : index
    %c0_13 = arith.constant 0 : index
    %13 = vector.load %arg5[%c0_11, %c0_12, %c0_13] : memref<2x1x32xf32, #tpu.memory_space<vmem>>, vector<1x1x32xf32>
    %14 = vector.shape_cast %13 : vector<1x1x32xf32> to vector<1x32xf32>
    %cst_14 = arith.constant dense<0.000000e+00> : vector<32xf32>
    %15 = vector.multi_reduction <add>, %10, %cst_14 [1] : vector<32x32xf32> to vector<32xf32>
    %16 = vector.shape_cast %15 : vector<32xf32> to vector<32x1xf32>
    %cst_15 = arith.constant 3.200000e+01 : f32
    %17 = vector.broadcast %cst_15 : f32 to vector<32x1xf32>
    %18 = arith.divf %16, %17 : vector<32x1xf32>
    %19 = vector.broadcast %18 : vector<32x1xf32> to vector<32x32xf32>
    %20 = arith.subf %10, %19 : vector<32x32xf32>
    %21 = arith.mulf %20, %20 : vector<32x32xf32>
    %cst_16 = arith.constant dense<0.000000e+00> : vector<32xf32>
    %22 = vector.multi_reduction <add>, %21, %cst_16 [1] : vector<32x32xf32> to vector<32xf32>
    %23 = vector.shape_cast %22 : vector<32xf32> to vector<32x1xf32>
    %cst_17 = arith.constant 3.200000e+01 : f32
    %24 = vector.broadcast %cst_17 : f32 to vector<32x1xf32>
    %25 = arith.divf %23, %24 : vector<32x1xf32>
    %26 = vector.broadcast %18 : vector<32x1xf32> to vector<32x32xf32>
    %27 = arith.subf %10, %26 : vector<32x32xf32>
    %cst_18 = arith.constant 9.99999974E-6 : f32
    %28 = vector.broadcast %cst_18 : f32 to vector<32x1xf32>
    %29 = arith.addf %25, %28 : vector<32x1xf32>
    %30 = math.rsqrt %29 : vector<32x1xf32>
    %31 = vector.broadcast %30 : vector<32x1xf32> to vector<32x32xf32>
    %32 = arith.mulf %27, %31 : vector<32x32xf32>
    %33 = vector.broadcast %12 : vector<1x32xf32> to vector<32x32xf32>
    %34 = arith.mulf %32, %33 : vector<32x32xf32>
    %35 = vector.broadcast %14 : vector<1x32xf32> to vector<32x32xf32>
    %36 = arith.addf %34, %35 : vector<32x32xf32>
    %c0_19 = arith.constant 0 : index
    %c0_20 = arith.constant 0 : index
    %c0_21 = arith.constant 0 : index
    %37 = vector.load %arg6[%c0_19, %c0_20, %c0_21] : memref<2x32x96xf32, #tpu.memory_space<vmem>>, vector<1x32x96xf32>
    %38 = vector.shape_cast %37 : vector<1x32x96xf32> to vector<32x96xf32>
    %cst_22 = arith.constant dense<0.000000e+00> : vector<32x96xf32>
    %39 = tpu.matmul %36, %38, %cst_22 {dimension_numbers = #tpu.dot_dimension_numbers<[1], [0], [0], [1], [0, 0, 1, 1], [], []>} : vector<32x32xf32>, vector<32x96xf32>, vector<32x96xf32> -> vector<32x96xf32>
    %c0_23 = arith.constant 0 : index
    %c0_24 = arith.constant 0 : index
    %c0_25 = arith.constant 0 : index
    %40 = vector.load %arg7[%c0_23, %c0_24, %c0_25] : memref<2x1x96xf32, #tpu.memory_space<vmem>>, vector<1x1x96xf32>
    %41 = vector.shape_cast %40 : vector<1x1x96xf32> to vector<1x96xf32>
    %42 = vector.broadcast %41 : vector<1x96xf32> to vector<32x96xf32>
    %43 = arith.addf %39, %42 : vector<32x96xf32>
    %44 = vector.extract_strided_slice %43 {offsets = [0, 0], sizes = [32, 32], strides = [1, 1]} : vector<32x96xf32> to vector<32x32xf32>
    %45 = vector.shape_cast %44 : vector<32x32xf32> to vector<2x16x32xf32>
    %46 = vector.extract_strided_slice %43 {offsets = [0, 32], sizes = [32, 32], strides = [1, 1]} : vector<32x96xf32> to vector<32x32xf32>
    %47 = vector.shape_cast %46 : vector<32x32xf32> to vector<2x16x32xf32>
    %48 = vector.extract_strided_slice %43 {offsets = [0, 64], sizes = [32, 32], strides = [1, 1]} : vector<32x96xf32> to vector<32x32xf32>
    %49 = vector.shape_cast %48 : vector<32x32xf32> to vector<2x16x32xf32>
    %50 = vector.extract_strided_slice %45 {offsets = [0, 0, 0], sizes = [2, 16, 8], strides = [1, 1, 1]} : vector<2x16x32xf32> to vector<2x16x8xf32>
    %51 = vector.extract_strided_slice %47 {offsets = [0, 0, 0], sizes = [2, 16, 8], strides = [1, 1, 1]} : vector<2x16x32xf32> to vector<2x16x8xf32>
    %52 = vector.extract_strided_slice %49 {offsets = [0, 0, 0], sizes = [2, 16, 8], strides = [1, 1, 1]} : vector<2x16x32xf32> to vector<2x16x8xf32>
    "tpu.trace_start"() <{level = 10 : i32, message = "bqd,bkd->bqk"}> : () -> ()
    %cst_26 = arith.constant dense<0.000000e+00> : vector<2x16x16xf32>
    %53 = tpu.matmul %50, %51, %cst_26 {dimension_numbers = #tpu.dot_dimension_numbers<[2], [2], [1], [1], [0, 0, 0, 1, 1, 1], [0], [0]>} : vector<2x16x8xf32>, vector<2x16x8xf32>, vector<2x16x16xf32> -> vector<2x16x16xf32>
    "tpu.trace_stop"() : () -> ()
    %cst_27 = arith.constant 0.353553385 : f32
    %54 = vector.broadcast %cst_27 : f32 to vector<2x16x16xf32>
    %55 = arith.mulf %53, %54 : vector<2x16x16xf32>
    %cst_28 = arith.constant dense<0xFF800000> : vector<2x16xf32>
    %56 = vector.multi_reduction <maximumf>, %55, %cst_28 [2] : vector<2x16x16xf32> to vector<2x16xf32>
    %57 = vector.shape_cast %56 : vector<2x16xf32> to vector<2x16x1xf32>
    %58 = vector.broadcast %57 : vector<2x16x1xf32> to vector<2x16x16xf32>
    %59 = arith.subf %55, %58 : vector<2x16x16xf32>
    %60 = math.exp %59 : vector<2x16x16xf32>
    %cst_29 = arith.constant dense<0.000000e+00> : vector<2x16xf32>
    %61 = vector.multi_reduction <add>, %60, %cst_29 [2] : vector<2x16x16xf32> to vector<2x16xf32>
    %62 = vector.shape_cast %61 : vector<2x16xf32> to vector<2x16x1xf32>
    %63 = vector.broadcast %62 : vector<2x16x1xf32> to vector<2x16x16xf32>
    %64 = arith.divf %60, %63 : vector<2x16x16xf32>
    "tpu.trace_start"() <{level = 10 : i32, message = "bqk,bkd->bqd"}> : () -> ()
    %cst_30 = arith.constant dense<0.000000e+00> : vector<2x16x8xf32>
    %65 = tpu.matmul %64, %52, %cst_30 {dimension_numbers = #tpu.dot_dimension_numbers<[2], [1], [1], [2], [0, 0, 0, 1, 1, 2], [0], [0]>} : vector<2x16x16xf32>, vector<2x16x8xf32>, vector<2x16x8xf32> -> vector<2x16x8xf32>
    "tpu.trace_stop"() : () -> ()
    %c0_31 = arith.constant 0 : index
    %c0_32 = arith.constant 0 : index
    %c0_33 = arith.constant 0 : index
    %66 = vector.load %arg25[%c0_31, %c0_32, %c0_33] : memref<2x16x32xf32, #tpu.memory_space<vmem>>, vector<2x16x8xf32>
    tpu.vector_store %arg25[%c0_31, %c0_32, %c0_33], %65 {strides = array<i32>} : memref<2x16x32xf32, #tpu.memory_space<vmem>>, vector<2x16x8xf32>,
    %67 = vector.extract_strided_slice %45 {offsets = [0, 0, 8], sizes = [2, 16, 8], strides = [1, 1, 1]} : vector<2x16x32xf32> to vector<2x16x8xf32>
    %68 = vector.extract_strided_slice %47 {offsets = [0, 0, 8], sizes = [2, 16, 8], strides = [1, 1, 1]} : vector<2x16x32xf32> to vector<2x16x8xf32>
    %69 = vector.extract_strided_slice %49 {offsets = [0, 0, 8], sizes = [2, 16, 8], strides = [1, 1, 1]} : vector<2x16x32xf32> to vector<2x16x8xf32>
    "tpu.trace_start"() <{level = 10 : i32, message = "bqd,bkd->bqk"}> : () -> ()
    %cst_34 = arith.constant dense<0.000000e+00> : vector<2x16x16xf32>
    %70 = tpu.matmul %67, %68, %cst_34 {dimension_numbers = #tpu.dot_dimension_numbers<[2], [2], [1], [1], [0, 0, 0, 1, 1, 1], [0], [0]>} : vector<2x16x8xf32>, vector<2x16x8xf32>, vector<2x16x16xf32> -> vector<2x16x16xf32>
    "tpu.trace_stop"() : () -> ()
    %cst_35 = arith.constant 0.353553385 : f32
    %71 = vector.broadcast %cst_35 : f32 to vector<2x16x16xf32>
    %72 = arith.mulf %70, %71 : vector<2x16x16xf32>
    %cst_36 = arith.constant dense<0xFF800000> : vector<2x16xf32>
    %73 = vector.multi_reduction <maximumf>, %72, %cst_36 [2] : vector<2x16x16xf32> to vector<2x16xf32>
    %74 = vector.shape_cast %73 : vector<2x16xf32> to vector<2x16x1xf32>
    %75 = vector.broadcast %74 : vector<2x16x1xf32> to vector<2x16x16xf32>
    %76 = arith.subf %72, %75 : vector<2x16x16xf32>
    %77 = math.exp %76 : vector<2x16x16xf32>
    %cst_37 = arith.constant dense<0.000000e+00> : vector<2x16xf32>
    %78 = vector.multi_reduction <add>, %77, %cst_37 [2] : vector<2x16x16xf32> to vector<2x16xf32>
    %79 = vector.shape_cast %78 : vector<2x16xf32> to vector<2x16x1xf32>
    %80 = vector.broadcast %79 : vector<2x16x1xf32> to vector<2x16x16xf32>
    %81 = arith.divf %77, %80 : vector<2x16x16xf32>
    "tpu.trace_start"() <{level = 10 : i32, message = "bqk,bkd->bqd"}> : () -> ()
    %cst_38 = arith.constant dense<0.000000e+00> : vector<2x16x8xf32>
    %82 = tpu.matmul %81, %69, %cst_38 {dimension_numbers = #tpu.dot_dimension_numbers<[2], [1], [1], [2], [0, 0, 0, 1, 1, 2], [0], [0]>} : vector<2x16x16xf32>, vector<2x16x8xf32>, vector<2x16x8xf32> -> vector<2x16x8xf32>
    "tpu.trace_stop"() : () -> ()
    %c0_39 = arith.constant 0 : index
    %c0_40 = arith.constant 0 : index
    %c8 = arith.constant 8 : index
    %83 = vector.load %arg25[%c0_39, %c0_40, %c8] : memref<2x16x32xf32, #tpu.memory_space<vmem>>, vector<2x16x8xf32>
    tpu.vector_store %arg25[%c0_39, %c0_40, %c8], %82 {strides = array<i32>} : memref<2x16x32xf32, #tpu.memory_space<vmem>>, vector<2x16x8xf32>,
    %84 = vector.extract_strided_slice %45 {offsets = [0, 0, 16], sizes = [2, 16, 8], strides = [1, 1, 1]} : vector<2x16x32xf32> to vector<2x16x8xf32>
    %85 = vector.extract_strided_slice %47 {offsets = [0, 0, 16], sizes = [2, 16, 8], strides = [1, 1, 1]} : vector<2x16x32xf32> to vector<2x16x8xf32>
    %86 = vector.extract_strided_slice %49 {offsets = [0, 0, 16], sizes = [2, 16, 8], strides = [1, 1, 1]} : vector<2x16x32xf32> to vector<2x16x8xf32>
    "tpu.trace_start"() <{level = 10 : i32, message = "bqd,bkd->bqk"}> : () -> ()
    %cst_41 = arith.constant dense<0.000000e+00> : vector<2x16x16xf32>
    %87 = tpu.matmul %84, %85, %cst_41 {dimension_numbers = #tpu.dot_dimension_numbers<[2], [2], [1], [1], [0, 0, 0, 1, 1, 1], [0], [0]>} : vector<2x16x8xf32>, vector<2x16x8xf32>, vector<2x16x16xf32> -> vector<2x16x16xf32>
    "tpu.trace_stop"() : () -> ()
    %cst_42 = arith.constant 0.353553385 : f32
    %88 = vector.broadcast %cst_42 : f32 to vector<2x16x16xf32>
    %89 = arith.mulf %87, %88 : vector<2x16x16xf32>
    %cst_43 = arith.constant dense<0xFF800000> : vector<2x16xf32>
    %90 = vector.multi_reduction <maximumf>, %89, %cst_43 [2] : vector<2x16x16xf32> to vector<2x16xf32>
    %91 = vector.shape_cast %90 : vector<2x16xf32> to vector<2x16x1xf32>
    %92 = vector.broadcast %91 : vector<2x16x1xf32> to vector<2x16x16xf32>
    %93 = arith.subf %89, %92 : vector<2x16x16xf32>
    %94 = math.exp %93 : vector<2x16x16xf32>
    %cst_44 = arith.constant dense<0.000000e+00> : vector<2x16xf32>
    %95 = vector.multi_reduction <add>, %94, %cst_44 [2] : vector<2x16x16xf32> to vector<2x16xf32>
    %96 = vector.shape_cast %95 : vector<2x16xf32> to vector<2x16x1xf32>
    %97 = vector.broadcast %96 : vector<2x16x1xf32> to vector<2x16x16xf32>
    %98 = arith.divf %94, %97 : vector<2x16x16xf32>
    "tpu.trace_start"() <{level = 10 : i32, message = "bqk,bkd->bqd"}> : () -> ()
    %cst_45 = arith.constant dense<0.000000e+00> : vector<2x16x8xf32>
    %99 = tpu.matmul %98, %86, %cst_45 {dimension_numbers = #tpu.dot_dimension_numbers<[2], [1], [1], [2], [0, 0, 0, 1, 1, 2], [0], [0]>} : vector<2x16x16xf32>, vector<2x16x8xf32>, vector<2x16x8xf32> -> vector<2x16x8xf32>
    "tpu.trace_stop"() : () -> ()
    %c0_46 = arith.constant 0 : index
    %c0_47 = arith.constant 0 : index
    %c16 = arith.constant 16 : index
    %100 = vector.load %arg25[%c0_46, %c0_47, %c16] : memref<2x16x32xf32, #tpu.memory_space<vmem>>, vector<2x16x8xf32>
    tpu.vector_store %arg25[%c0_46, %c0_47, %c16], %99 {strides = array<i32>} : memref<2x16x32xf32, #tpu.memory_space<vmem>>, vector<2x16x8xf32>,
    %101 = vector.extract_strided_slice %45 {offsets = [0, 0, 24], sizes = [2, 16, 8], strides = [1, 1, 1]} : vector<2x16x32xf32> to vector<2x16x8xf32>
    %102 = vector.extract_strided_slice %47 {offsets = [0, 0, 24], sizes = [2, 16, 8], strides = [1, 1, 1]} : vector<2x16x32xf32> to vector<2x16x8xf32>
    %103 = vector.extract_strided_slice %49 {offsets = [0, 0, 24], sizes = [2, 16, 8], strides = [1, 1, 1]} : vector<2x16x32xf32> to vector<2x16x8xf32>
    "tpu.trace_start"() <{level = 10 : i32, message = "bqd,bkd->bqk"}> : () -> ()
    %cst_48 = arith.constant dense<0.000000e+00> : vector<2x16x16xf32>
    %104 = tpu.matmul %101, %102, %cst_48 {dimension_numbers = #tpu.dot_dimension_numbers<[2], [2], [1], [1], [0, 0, 0, 1, 1, 1], [0], [0]>} : vector<2x16x8xf32>, vector<2x16x8xf32>, vector<2x16x16xf32> -> vector<2x16x16xf32>
    "tpu.trace_stop"() : () -> ()
    %cst_49 = arith.constant 0.353553385 : f32
    %105 = vector.broadcast %cst_49 : f32 to vector<2x16x16xf32>
    %106 = arith.mulf %104, %105 : vector<2x16x16xf32>
    %cst_50 = arith.constant dense<0xFF800000> : vector<2x16xf32>
    %107 = vector.multi_reduction <maximumf>, %106, %cst_50 [2] : vector<2x16x16xf32> to vector<2x16xf32>
    %108 = vector.shape_cast %107 : vector<2x16xf32> to vector<2x16x1xf32>
    %109 = vector.broadcast %108 : vector<2x16x1xf32> to vector<2x16x16xf32>
    %110 = arith.subf %106, %109 : vector<2x16x16xf32>
    %111 = math.exp %110 : vector<2x16x16xf32>
    %cst_51 = arith.constant dense<0.000000e+00> : vector<2x16xf32>
    %112 = vector.multi_reduction <add>, %111, %cst_51 [2] : vector<2x16x16xf32> to vector<2x16xf32>
    %113 = vector.shape_cast %112 : vector<2x16xf32> to vector<2x16x1xf32>
    %114 = vector.broadcast %113 : vector<2x16x1xf32> to vector<2x16x16xf32>
    %115 = arith.divf %111, %114 : vector<2x16x16xf32>
    "tpu.trace_start"() <{level = 10 : i32, message = "bqk,bkd->bqd"}> : () -> ()
    %cst_52 = arith.constant dense<0.000000e+00> : vector<2x16x8xf32>
    %116 = tpu.matmul %115, %103, %cst_52 {dimension_numbers = #tpu.dot_dimension_numbers<[2], [1], [1], [2], [0, 0, 0, 1, 1, 2], [0], [0]>} : vector<2x16x16xf32>, vector<2x16x8xf32>, vector<2x16x8xf32> -> vector<2x16x8xf32>
    "tpu.trace_stop"() : () -> ()
    %c0_53 = arith.constant 0 : index
    %c0_54 = arith.constant 0 : index
    %c24 = arith.constant 24 : index
    %117 = vector.load %arg25[%c0_53, %c0_54, %c24] : memref<2x16x32xf32, #tpu.memory_space<vmem>>, vector<2x16x8xf32>
    tpu.vector_store %arg25[%c0_53, %c0_54, %c24], %116 {strides = array<i32>} : memref<2x16x32xf32, #tpu.memory_space<vmem>>, vector<2x16x8xf32>,
    %c0_55 = arith.constant 0 : index
    %c0_56 = arith.constant 0 : index
    %c0_57 = arith.constant 0 : index
    %118 = vector.load %arg25[%c0_55, %c0_56, %c0_57] : memref<2x16x32xf32, #tpu.memory_space<vmem>>, vector<2x16x32xf32>
    %119 = vector.shape_cast %118 : vector<2x16x32xf32> to vector<32x32xf32>
    %c0_58 = arith.constant 0 : index
    %c0_59 = arith.constant 0 : index
    %c0_60 = arith.constant 0 : index
    %120 = vector.load %arg8[%c0_58, %c0_59, %c0_60] : memref<2x32x32xf32, #tpu.memory_space<vmem>>, vector<1x32x32xf32>
    %121 = vector.shape_cast %120 : vector<1x32x32xf32> to vector<32x32xf32>
    %cst_61 = arith.constant dense<0.000000e+00> : vector<32x32xf32>
    %122 = tpu.matmul %119, %121, %cst_61 {dimension_numbers = #tpu.dot_dimension_numbers<[1], [0], [0], [1], [0, 0, 1, 1], [], []>} : vector<32x32xf32>, vector<32x32xf32>, vector<32x32xf32> -> vector<32x32xf32>
    %c0_62 = arith.constant 0 : index
    %c0_63 = arith.constant 0 : index
    %c0_64 = arith.constant 0 : index
    %123 = vector.load %arg9[%c0_62, %c0_63, %c0_64] : memref<2x1x32xf32, #tpu.memory_space<vmem>>, vector<1x1x32xf32>
    %124 = vector.shape_cast %123 : vector<1x1x32xf32> to vector<1x32xf32>
    %125 = vector.broadcast %124 : vector<1x32xf32> to vector<32x32xf32>
    %126 = arith.addf %122, %125 : vector<32x32xf32>
    %127 = arith.addf %10, %126 : vector<32x32xf32>
    %c0_65 = arith.constant 0 : index
    %c0_66 = arith.constant 0 : index
    %c0_67 = arith.constant 0 : index
    %128 = vector.load %arg10[%c0_65, %c0_66, %c0_67] : memref<2x1x32xf32, #tpu.memory_space<vmem>>, vector<1x1x32xf32>
    %129 = vector.shape_cast %128 : vector<1x1x32xf32> to vector<1x32xf32>
    %c0_68 = arith.constant 0 : index
    %c0_69 = arith.constant 0 : index
    %c0_70 = arith.constant 0 : index
    %130 = vector.load %arg11[%c0_68, %c0_69, %c0_70] : memref<2x1x32xf32, #tpu.memory_space<vmem>>, vector<1x1x32xf32>
    %131 = vector.shape_cast %130 : vector<1x1x32xf32> to vector<1x32xf32>
    %cst_71 = arith.constant dense<0.000000e+00> : vector<32xf32>
    %132 = vector.multi_reduction <add>, %127, %cst_71 [1] : vector<32x32xf32> to vector<32xf32>
    %133 = vector.shape_cast %132 : vector<32xf32> to vector<32x1xf32>
    %cst_72 = arith.constant 3.200000e+01 : f32
    %134 = vector.broadcast %cst_72 : f32 to vector<32x1xf32>
    %135 = arith.divf %133, %134 : vector<32x1xf32>
    %136 = vector.broadcast %135 : vector<32x1xf32> to vector<32x32xf32>
    %137 = arith.subf %127, %136 : vector<32x32xf32>
    %138 = arith.mulf %137, %137 : vector<32x32xf32>
    %cst_73 = arith.constant dense<0.000000e+00> : vector<32xf32>
    %139 = vector.multi_reduction <add>, %138, %cst_73 [1] : vector<32x32xf32> to vector<32xf32>
    %140 = vector.shape_cast %139 : vector<32xf32> to vector<32x1xf32>
    %cst_74 = arith.constant 3.200000e+01 : f32
    %141 = vector.broadcast %cst_74 : f32 to vector<32x1xf32>
    %142 = arith.divf %140, %141 : vector<32x1xf32>
    %143 = vector.broadcast %135 : vector<32x1xf32> to vector<32x32xf32>
    %144 = arith.subf %127, %143 : vector<32x32xf32>
    %cst_75 = arith.constant 9.99999974E-6 : f32
    %145 = vector.broadcast %cst_75 : f32 to vector<32x1xf32>
    %146 = arith.addf %142, %145 : vector<32x1xf32>
    %147 = math.rsqrt %146 : vector<32x1xf32>
    %148 = vector.broadcast %147 : vector<32x1xf32> to vector<32x32xf32>
    %149 = arith.mulf %144, %148 : vector<32x32xf32>
    %150 = vector.broadcast %129 : vector<1x32xf32> to vector<32x32xf32>
    %151 = arith.mulf %149, %150 : vector<32x32xf32>
    %152 = vector.broadcast %131 : vector<1x32xf32> to vector<32x32xf32>
    %153 = arith.addf %151, %152 : vector<32x32xf32>
    %c0_76 = arith.constant 0 : index
    %c0_77 = arith.constant 0 : index
    %c0_78 = arith.constant 0 : index
    %154 = vector.load %arg12[%c0_76, %c0_77, %c0_78] : memref<2x32x64xf32, #tpu.memory_space<vmem>>, vector<1x32x64xf32>
    %155 = vector.shape_cast %154 : vector<1x32x64xf32> to vector<32x64xf32>
    %cst_79 = arith.constant dense<0.000000e+00> : vector<32x64xf32>
    %156 = tpu.matmul %153, %155, %cst_79 {dimension_numbers = #tpu.dot_dimension_numbers<[1], [0], [0], [1], [0, 0, 1, 1], [], []>} : vector<32x32xf32>, vector<32x64xf32>, vector<32x64xf32> -> vector<32x64xf32>
    %c0_80 = arith.constant 0 : index
    %c0_81 = arith.constant 0 : index
    %c0_82 = arith.constant 0 : index
    %157 = vector.load %arg13[%c0_80, %c0_81, %c0_82] : memref<2x1x64xf32, #tpu.memory_space<vmem>>, vector<1x1x64xf32>
    %158 = vector.shape_cast %157 : vector<1x1x64xf32> to vector<1x64xf32>
    %159 = vector.broadcast %158 : vector<1x64xf32> to vector<32x64xf32>
    %160 = arith.addf %156, %159 : vector<32x64xf32>
    %cst_83 = arith.constant 5.000000e-01 : f32
    %161 = vector.broadcast %cst_83 : f32 to vector<32x64xf32>
    %162 = arith.mulf %161, %160 : vector<32x64xf32>
    %cst_84 = arith.constant 0.707106769 : f32
    %163 = vector.broadcast %cst_84 : f32 to vector<32x64xf32>
    %164 = arith.mulf %160, %163 : vector<32x64xf32>
    %165 = math.erf %164 : vector<32x64xf32>
    %cst_85 = arith.constant 1.000000e+00 : f32
    %166 = vector.broadcast %cst_85 : f32 to vector<32x64xf32>
    %167 = arith.addf %166, %165 : vector<32x64xf32>
    %168 = arith.mulf %162, %167 : vector<32x64xf32>
    %c0_86 = arith.constant 0 : index
    %c0_87 = arith.constant 0 : index
    %c0_88 = arith.constant 0 : index
    %169 = vector.load %arg14[%c0_86, %c0_87, %c0_88] : memref<2x64x32xf32, #tpu.memory_space<vmem>>, vector<1x64x32xf32>
    %170 = vector.shape_cast %169 : vector<1x64x32xf32> to vector<64x32xf32>
    %cst_89 = arith.constant dense<0.000000e+00> : vector<32x32xf32>
    %171 = tpu.matmul %168, %170, %cst_89 {dimension_numbers = #tpu.dot_dimension_numbers<[1], [0], [0], [1], [0, 0, 1, 1], [], []>} : vector<32x64xf32>, vector<64x32xf32>, vector<32x32xf32> -> vector<32x32xf32>
    %c0_90 = arith.constant 0 : index
    %c0_91 = arith.constant 0 : index
    %c0_92 = arith.constant 0 : index
    %172 = vector.load %arg15[%c0_90, %c0_91, %c0_92] : memref<2x1x32xf32, #tpu.memory_space<vmem>>, vector<1x1x32xf32>
    %173 = vector.shape_cast %172 : vector<1x1x32xf32> to vector<1x32xf32>
    %174 = vector.broadcast %173 : vector<1x32xf32> to vector<32x32xf32>
    %175 = arith.addf %171, %174 : vector<32x32xf32>
    %176 = arith.addf %127, %175 : vector<32x32xf32>
    %c1 = arith.constant 1 : index
    %c0_93 = arith.constant 0 : index
    %c0_94 = arith.constant 0 : index
    %177 = vector.load %arg4[%c1, %c0_93, %c0_94] : memref<2x1x32xf32, #tpu.memory_space<vmem>>, vector<1x1x32xf32>
    %178 = vector.shape_cast %177 : vector<1x1x32xf32> to vector<1x32xf32>
    %c1_95 = arith.constant 1 : index
    %c0_96 = arith.constant 0 : index
    %c0_97 = arith.constant 0 : index
    %179 = vector.load %arg5[%c1_95, %c0_96, %c0_97] : memref<2x1x32xf32, #tpu.memory_space<vmem>>, vector<1x1x32xf32>
    %180 = vector.shape_cast %179 : vector<1x1x32xf32> to vector<1x32xf32>
    %cst_98 = arith.constant dense<0.000000e+00> : vector<32xf32>
    %181 = vector.multi_reduction <add>, %176, %cst_98 [1] : vector<32x32xf32> to vector<32xf32>
    %182 = vector.shape_cast %181 : vector<32xf32> to vector<32x1xf32>
    %cst_99 = arith.constant 3.200000e+01 : f32
    %183 = vector.broadcast %cst_99 : f32 to vector<32x1xf32>
    %184 = arith.divf %182, %183 : vector<32x1xf32>
    %185 = vector.broadcast %184 : vector<32x1xf32> to vector<32x32xf32>
    %186 = arith.subf %176, %185 : vector<32x32xf32>
    %187 = arith.mulf %186, %186 : vector<32x32xf32>
    %cst_100 = arith.constant dense<0.000000e+00> : vector<32xf32>
    %188 = vector.multi_reduction <add>, %187, %cst_100 [1] : vector<32x32xf32> to vector<32xf32>
    %189 = vector.shape_cast %188 : vector<32xf32> to vector<32x1xf32>
    %cst_101 = arith.constant 3.200000e+01 : f32
    %190 = vector.broadcast %cst_101 : f32 to vector<32x1xf32>
    %191 = arith.divf %189, %190 : vector<32x1xf32>
    %192 = vector.broadcast %184 : vector<32x1xf32> to vector<32x32xf32>
    %193 = arith.subf %176, %192 : vector<32x32xf32>
    %cst_102 = arith.constant 9.99999974E-6 : f32
    %194 = vector.broadcast %cst_102 : f32 to vector<32x1xf32>
    %195 = arith.addf %191, %194 : vector<32x1xf32>
    %196 = math.rsqrt %195 : vector<32x1xf32>
    %197 = vector.broadcast %196 : vector<32x1xf32> to vector<32x32xf32>
    %198 = arith.mulf %193, %197 : vector<32x32xf32>
    %199 = vector.broadcast %178 : vector<1x32xf32> to vector<32x32xf32>
    %200 = arith.mulf %198, %199 : vector<32x32xf32>
    %201 = vector.broadcast %180 : vector<1x32xf32> to vector<32x32xf32>
    %202 = arith.addf %200, %201 : vector<32x32xf32>
    %c1_103 = arith.constant 1 : index
    %c0_104 = arith.constant 0 : index
    %c0_105 = arith.constant 0 : index
    %203 = vector.load %arg6[%c1_103, %c0_104, %c0_105] : memref<2x32x96xf32, #tpu.memory_space<vmem>>, vector<1x32x96xf32>
    %204 = vector.shape_cast %203 : vector<1x32x96xf32> to vector<32x96xf32>
    %cst_106 = arith.constant dense<0.000000e+00> : vector<32x96xf32>
    %205 = tpu.matmul %202, %204, %cst_106 {dimension_numbers = #tpu.dot_dimension_numbers<[1], [0], [0], [1], [0, 0, 1, 1], [], []>} : vector<32x32xf32>, vector<32x96xf32>, vector<32x96xf32> -> vector<32x96xf32>
    %c1_107 = arith.constant 1 : index
    %c0_108 = arith.constant 0 : index
    %c0_109 = arith.constant 0 : index
    %206 = vector.load %arg7[%c1_107, %c0_108, %c0_109] : memref<2x1x96xf32, #tpu.memory_space<vmem>>, vector<1x1x96xf32>
    %207 = vector.shape_cast %206 : vector<1x1x96xf32> to vector<1x96xf32>
    %208 = vector.broadcast %207 : vector<1x96xf32> to vector<32x96xf32>
    %209 = arith.addf %205, %208 : vector<32x96xf32>
    %210 = vector.extract_strided_slice %209 {offsets = [0, 0], sizes = [32, 32], strides = [1, 1]} : vector<32x96xf32> to vector<32x32xf32>
    %211 = vector.shape_cast %210 : vector<32x32xf32> to vector<2x16x32xf32>
    %212 = vector.extract_strided_slice %209 {offsets = [0, 32], sizes = [32, 32], strides = [1, 1]} : vector<32x96xf32> to vector<32x32xf32>
    %213 = vector.shape_cast %212 : vector<32x32xf32> to vector<2x16x32xf32>
    %214 = vector.extract_strided_slice %209 {offsets = [0, 64], sizes = [32, 32], strides = [1, 1]} : vector<32x96xf32> to vector<32x32xf32>
    %215 = vector.shape_cast %214 : vector<32x32xf32> to vector<2x16x32xf32>
    %216 = vector.extract_strided_slice %211 {offsets = [0, 0, 0], sizes = [2, 16, 8], strides = [1, 1, 1]} : vector<2x16x32xf32> to vector<2x16x8xf32>
    %217 = vector.extract_strided_slice %213 {offsets = [0, 0, 0], sizes = [2, 16, 8], strides = [1, 1, 1]} : vector<2x16x32xf32> to vector<2x16x8xf32>
    %218 = vector.extract_strided_slice %215 {offsets = [0, 0, 0], sizes = [2, 16, 8], strides = [1, 1, 1]} : vector<2x16x32xf32> to vector<2x16x8xf32>
    "tpu.trace_start"() <{level = 10 : i32, message = "bqd,bkd->bqk"}> : () -> ()
    %cst_110 = arith.constant dense<0.000000e+00> : vector<2x16x16xf32>
    %219 = tpu.matmul %216, %217, %cst_110 {dimension_numbers = #tpu.dot_dimension_numbers<[2], [2], [1], [1], [0, 0, 0, 1, 1, 1], [0], [0]>} : vector<2x16x8xf32>, vector<2x16x8xf32>, vector<2x16x16xf32> -> vector<2x16x16xf32>
    "tpu.trace_stop"() : () -> ()
    %cst_111 = arith.constant 0.353553385 : f32
    %220 = vector.broadcast %cst_111 : f32 to vector<2x16x16xf32>
    %221 = arith.mulf %219, %220 : vector<2x16x16xf32>
    %cst_112 = arith.constant dense<0xFF800000> : vector<2x16xf32>
    %222 = vector.multi_reduction <maximumf>, %221, %cst_112 [2] : vector<2x16x16xf32> to vector<2x16xf32>
    %223 = vector.shape_cast %222 : vector<2x16xf32> to vector<2x16x1xf32>
    %224 = vector.broadcast %223 : vector<2x16x1xf32> to vector<2x16x16xf32>
    %225 = arith.subf %221, %224 : vector<2x16x16xf32>
    %226 = math.exp %225 : vector<2x16x16xf32>
    %cst_113 = arith.constant dense<0.000000e+00> : vector<2x16xf32>
    %227 = vector.multi_reduction <add>, %226, %cst_113 [2] : vector<2x16x16xf32> to vector<2x16xf32>
    %228 = vector.shape_cast %227 : vector<2x16xf32> to vector<2x16x1xf32>
    %229 = vector.broadcast %228 : vector<2x16x1xf32> to vector<2x16x16xf32>
    %230 = arith.divf %226, %229 : vector<2x16x16xf32>
    "tpu.trace_start"() <{level = 10 : i32, message = "bqk,bkd->bqd"}> : () -> ()
    %cst_114 = arith.constant dense<0.000000e+00> : vector<2x16x8xf32>
    %231 = tpu.matmul %230, %218, %cst_114 {dimension_numbers = #tpu.dot_dimension_numbers<[2], [1], [1], [2], [0, 0, 0, 1, 1, 2], [0], [0]>} : vector<2x16x16xf32>, vector<2x16x8xf32>, vector<2x16x8xf32> -> vector<2x16x8xf32>
    "tpu.trace_stop"() : () -> ()
    %c0_115 = arith.constant 0 : index
    %c0_116 = arith.constant 0 : index
    %c0_117 = arith.constant 0 : index
    %232 = vector.load %arg25[%c0_115, %c0_116, %c0_117] : memref<2x16x32xf32, #tpu.memory_space<vmem>>, vector<2x16x8xf32>
    tpu.vector_store %arg25[%c0_115, %c0_116, %c0_117], %231 {strides = array<i32>} : memref<2x16x32xf32, #tpu.memory_space<vmem>>, vector<2x16x8xf32>,
    %233 = vector.extract_strided_slice %211 {offsets = [0, 0, 8], sizes = [2, 16, 8], strides = [1, 1, 1]} : vector<2x16x32xf32> to vector<2x16x8xf32>
    %234 = vector.extract_strided_slice %213 {offsets = [0, 0, 8], sizes = [2, 16, 8], strides = [1, 1, 1]} : vector<2x16x32xf32> to vector<2x16x8xf32>
    %235 = vector.extract_strided_slice %215 {offsets = [0, 0, 8], sizes = [2, 16, 8], strides = [1, 1, 1]} : vector<2x16x32xf32> to vector<2x16x8xf32>
    "tpu.trace_start"() <{level = 10 : i32, message = "bqd,bkd->bqk"}> : () -> ()
    %cst_118 = arith.constant dense<0.000000e+00> : vector<2x16x16xf32>
    %236 = tpu.matmul %233, %234, %cst_118 {dimension_numbers = #tpu.dot_dimension_numbers<[2], [2], [1], [1], [0, 0, 0, 1, 1, 1], [0], [0]>} : vector<2x16x8xf32>, vector<2x16x8xf32>, vector<2x16x16xf32> -> vector<2x16x16xf32>
    "tpu.trace_stop"() : () -> ()
    %cst_119 = arith.constant 0.353553385 : f32
    %237 = vector.broadcast %cst_119 : f32 to vector<2x16x16xf32>
    %238 = arith.mulf %236, %237 : vector<2x16x16xf32>
    %cst_120 = arith.constant dense<0xFF800000> : vector<2x16xf32>
    %239 = vector.multi_reduction <maximumf>, %238, %cst_120 [2] : vector<2x16x16xf32> to vector<2x16xf32>
    %240 = vector.shape_cast %239 : vector<2x16xf32> to vector<2x16x1xf32>
    %241 = vector.broadcast %240 : vector<2x16x1xf32> to vector<2x16x16xf32>
    %242 = arith.subf %238, %241 : vector<2x16x16xf32>
    %243 = math.exp %242 : vector<2x16x16xf32>
    %cst_121 = arith.constant dense<0.000000e+00> : vector<2x16xf32>
    %244 = vector.multi_reduction <add>, %243, %cst_121 [2] : vector<2x16x16xf32> to vector<2x16xf32>
    %245 = vector.shape_cast %244 : vector<2x16xf32> to vector<2x16x1xf32>
    %246 = vector.broadcast %245 : vector<2x16x1xf32> to vector<2x16x16xf32>
    %247 = arith.divf %243, %246 : vector<2x16x16xf32>
    "tpu.trace_start"() <{level = 10 : i32, message = "bqk,bkd->bqd"}> : () -> ()
    %cst_122 = arith.constant dense<0.000000e+00> : vector<2x16x8xf32>
    %248 = tpu.matmul %247, %235, %cst_122 {dimension_numbers = #tpu.dot_dimension_numbers<[2], [1], [1], [2], [0, 0, 0, 1, 1, 2], [0], [0]>} : vector<2x16x16xf32>, vector<2x16x8xf32>, vector<2x16x8xf32> -> vector<2x16x8xf32>
    "tpu.trace_stop"() : () -> ()
    %c0_123 = arith.constant 0 : index
    %c0_124 = arith.constant 0 : index
    %c8_125 = arith.constant 8 : index
    %249 = vector.load %arg25[%c0_123, %c0_124, %c8_125] : memref<2x16x32xf32, #tpu.memory_space<vmem>>, vector<2x16x8xf32>
    tpu.vector_store %arg25[%c0_123, %c0_124, %c8_125], %248 {strides = array<i32>} : memref<2x16x32xf32, #tpu.memory_space<vmem>>, vector<2x16x8xf32>,
    %250 = vector.extract_strided_slice %211 {offsets = [0, 0, 16], sizes = [2, 16, 8], strides = [1, 1, 1]} : vector<2x16x32xf32> to vector<2x16x8xf32>
    %251 = vector.extract_strided_slice %213 {offsets = [0, 0, 16], sizes = [2, 16, 8], strides = [1, 1, 1]} : vector<2x16x32xf32> to vector<2x16x8xf32>
    %252 = vector.extract_strided_slice %215 {offsets = [0, 0, 16], sizes = [2, 16, 8], strides = [1, 1, 1]} : vector<2x16x32xf32> to vector<2x16x8xf32>
    "tpu.trace_start"() <{level = 10 : i32, message = "bqd,bkd->bqk"}> : () -> ()
    %cst_126 = arith.constant dense<0.000000e+00> : vector<2x16x16xf32>
    %253 = tpu.matmul %250, %251, %cst_126 {dimension_numbers = #tpu.dot_dimension_numbers<[2], [2], [1], [1], [0, 0, 0, 1, 1, 1], [0], [0]>} : vector<2x16x8xf32>, vector<2x16x8xf32>, vector<2x16x16xf32> -> vector<2x16x16xf32>
    "tpu.trace_stop"() : () -> ()
    %cst_127 = arith.constant 0.353553385 : f32
    %254 = vector.broadcast %cst_127 : f32 to vector<2x16x16xf32>
    %255 = arith.mulf %253, %254 : vector<2x16x16xf32>
    %cst_128 = arith.constant dense<0xFF800000> : vector<2x16xf32>
    %256 = vector.multi_reduction <maximumf>, %255, %cst_128 [2] : vector<2x16x16xf32> to vector<2x16xf32>
    %257 = vector.shape_cast %256 : vector<2x16xf32> to vector<2x16x1xf32>
    %258 = vector.broadcast %257 : vector<2x16x1xf32> to vector<2x16x16xf32>
    %259 = arith.subf %255, %258 : vector<2x16x16xf32>
    %260 = math.exp %259 : vector<2x16x16xf32>
    %cst_129 = arith.constant dense<0.000000e+00> : vector<2x16xf32>
    %261 = vector.multi_reduction <add>, %260, %cst_129 [2] : vector<2x16x16xf32> to vector<2x16xf32>
    %262 = vector.shape_cast %261 : vector<2x16xf32> to vector<2x16x1xf32>
    %263 = vector.broadcast %262 : vector<2x16x1xf32> to vector<2x16x16xf32>
    %264 = arith.divf %260, %263 : vector<2x16x16xf32>
    "tpu.trace_start"() <{level = 10 : i32, message = "bqk,bkd->bqd"}> : () -> ()
    %cst_130 = arith.constant dense<0.000000e+00> : vector<2x16x8xf32>
    %265 = tpu.matmul %264, %252, %cst_130 {dimension_numbers = #tpu.dot_dimension_numbers<[2], [1], [1], [2], [0, 0, 0, 1, 1, 2], [0], [0]>} : vector<2x16x16xf32>, vector<2x16x8xf32>, vector<2x16x8xf32> -> vector<2x16x8xf32>
    "tpu.trace_stop"() : () -> ()
    %c0_131 = arith.constant 0 : index
    %c0_132 = arith.constant 0 : index
    %c16_133 = arith.constant 16 : index
    %266 = vector.load %arg25[%c0_131, %c0_132, %c16_133] : memref<2x16x32xf32, #tpu.memory_space<vmem>>, vector<2x16x8xf32>
    tpu.vector_store %arg25[%c0_131, %c0_132, %c16_133], %265 {strides = array<i32>} : memref<2x16x32xf32, #tpu.memory_space<vmem>>, vector<2x16x8xf32>,
    %267 = vector.extract_strided_slice %211 {offsets = [0, 0, 24], sizes = [2, 16, 8], strides = [1, 1, 1]} : vector<2x16x32xf32> to vector<2x16x8xf32>
    %268 = vector.extract_strided_slice %213 {offsets = [0, 0, 24], sizes = [2, 16, 8], strides = [1, 1, 1]} : vector<2x16x32xf32> to vector<2x16x8xf32>
    %269 = vector.extract_strided_slice %215 {offsets = [0, 0, 24], sizes = [2, 16, 8], strides = [1, 1, 1]} : vector<2x16x32xf32> to vector<2x16x8xf32>
    "tpu.trace_start"() <{level = 10 : i32, message = "bqd,bkd->bqk"}> : () -> ()
    %cst_134 = arith.constant dense<0.000000e+00> : vector<2x16x16xf32>
    %270 = tpu.matmul %267, %268, %cst_134 {dimension_numbers = #tpu.dot_dimension_numbers<[2], [2], [1], [1], [0, 0, 0, 1, 1, 1], [0], [0]>} : vector<2x16x8xf32>, vector<2x16x8xf32>, vector<2x16x16xf32> -> vector<2x16x16xf32>
    "tpu.trace_stop"() : () -> ()
    %cst_135 = arith.constant 0.353553385 : f32
    %271 = vector.broadcast %cst_135 : f32 to vector<2x16x16xf32>
    %272 = arith.mulf %270, %271 : vector<2x16x16xf32>
    %cst_136 = arith.constant dense<0xFF800000> : vector<2x16xf32>
    %273 = vector.multi_reduction <maximumf>, %272, %cst_136 [2] : vector<2x16x16xf32> to vector<2x16xf32>
    %274 = vector.shape_cast %273 : vector<2x16xf32> to vector<2x16x1xf32>
    %275 = vector.broadcast %274 : vector<2x16x1xf32> to vector<2x16x16xf32>
    %276 = arith.subf %272, %275 : vector<2x16x16xf32>
    %277 = math.exp %276 : vector<2x16x16xf32>
    %cst_137 = arith.constant dense<0.000000e+00> : vector<2x16xf32>
    %278 = vector.multi_reduction <add>, %277, %cst_137 [2] : vector<2x16x16xf32> to vector<2x16xf32>
    %279 = vector.shape_cast %278 : vector<2x16xf32> to vector<2x16x1xf32>
    %280 = vector.broadcast %279 : vector<2x16x1xf32> to vector<2x16x16xf32>
    %281 = arith.divf %277, %280 : vector<2x16x16xf32>
    "tpu.trace_start"() <{level = 10 : i32, message = "bqk,bkd->bqd"}> : () -> ()
    %cst_138 = arith.constant dense<0.000000e+00> : vector<2x16x8xf32>
    %282 = tpu.matmul %281, %269, %cst_138 {dimension_numbers = #tpu.dot_dimension_numbers<[2], [1], [1], [2], [0, 0, 0, 1, 1, 2], [0], [0]>} : vector<2x16x16xf32>, vector<2x16x8xf32>, vector<2x16x8xf32> -> vector<2x16x8xf32>
    "tpu.trace_stop"() : () -> ()
    %c0_139 = arith.constant 0 : index
    %c0_140 = arith.constant 0 : index
    %c24_141 = arith.constant 24 : index
    %283 = vector.load %arg25[%c0_139, %c0_140, %c24_141] : memref<2x16x32xf32, #tpu.memory_space<vmem>>, vector<2x16x8xf32>
    tpu.vector_store %arg25[%c0_139, %c0_140, %c24_141], %282 {strides = array<i32>} : memref<2x16x32xf32, #tpu.memory_space<vmem>>, vector<2x16x8xf32>,
    %c0_142 = arith.constant 0 : index
    %c0_143 = arith.constant 0 : index
    %c0_144 = arith.constant 0 : index
    %284 = vector.load %arg25[%c0_142, %c0_143, %c0_144] : memref<2x16x32xf32, #tpu.memory_space<vmem>>, vector<2x16x32xf32>
    %285 = vector.shape_cast %284 : vector<2x16x32xf32> to vector<32x32xf32>
    %c1_145 = arith.constant 1 : index
    %c0_146 = arith.constant 0 : index
    %c0_147 = arith.constant 0 : index
    %286 = vector.load %arg8[%c1_145, %c0_146, %c0_147] : memref<2x32x32xf32, #tpu.memory_space<vmem>>, vector<1x32x32xf32>
    %287 = vector.shape_cast %286 : vector<1x32x32xf32> to vector<32x32xf32>
    %cst_148 = arith.constant dense<0.000000e+00> : vector<32x32xf32>
    %288 = tpu.matmul %285, %287, %cst_148 {dimension_numbers = #tpu.dot_dimension_numbers<[1], [0], [0], [1], [0, 0, 1, 1], [], []>} : vector<32x32xf32>, vector<32x32xf32>, vector<32x32xf32> -> vector<32x32xf32>
    %c1_149 = arith.constant 1 : index
    %c0_150 = arith.constant 0 : index
    %c0_151 = arith.constant 0 : index
    %289 = vector.load %arg9[%c1_149, %c0_150, %c0_151] : memref<2x1x32xf32, #tpu.memory_space<vmem>>, vector<1x1x32xf32>
    %290 = vector.shape_cast %289 : vector<1x1x32xf32> to vector<1x32xf32>
    %291 = vector.broadcast %290 : vector<1x32xf32> to vector<32x32xf32>
    %292 = arith.addf %288, %291 : vector<32x32xf32>
    %293 = arith.addf %176, %292 : vector<32x32xf32>
    %c1_152 = arith.constant 1 : index
    %c0_153 = arith.constant 0 : index
    %c0_154 = arith.constant 0 : index
    %294 = vector.load %arg10[%c1_152, %c0_153, %c0_154] : memref<2x1x32xf32, #tpu.memory_space<vmem>>, vector<1x1x32xf32>
    %295 = vector.shape_cast %294 : vector<1x1x32xf32> to vector<1x32xf32>
    %c1_155 = arith.constant 1 : index
    %c0_156 = arith.constant 0 : index
    %c0_157 = arith.constant 0 : index
    %296 = vector.load %arg11[%c1_155, %c0_156, %c0_157] : memref<2x1x32xf32, #tpu.memory_space<vmem>>, vector<1x1x32xf32>
    %297 = vector.shape_cast %296 : vector<1x1x32xf32> to vector<1x32xf32>
    %cst_158 = arith.constant dense<0.000000e+00> : vector<32xf32>
    %298 = vector.multi_reduction <add>, %293, %cst_158 [1] : vector<32x32xf32> to vector<32xf32>
    %299 = vector.shape_cast %298 : vector<32xf32> to vector<32x1xf32>
    %cst_159 = arith.constant 3.200000e+01 : f32
    %300 = vector.broadcast %cst_159 : f32 to vector<32x1xf32>
    %301 = arith.divf %299, %300 : vector<32x1xf32>
    %302 = vector.broadcast %301 : vector<32x1xf32> to vector<32x32xf32>
    %303 = arith.subf %293, %302 : vector<32x32xf32>
    %304 = arith.mulf %303, %303 : vector<32x32xf32>
    %cst_160 = arith.constant dense<0.000000e+00> : vector<32xf32>
    %305 = vector.multi_reduction <add>, %304, %cst_160 [1] : vector<32x32xf32> to vector<32xf32>
    %306 = vector.shape_cast %305 : vector<32xf32> to vector<32x1xf32>
    %cst_161 = arith.constant 3.200000e+01 : f32
    %307 = vector.broadcast %cst_161 : f32 to vector<32x1xf32>
    %308 = arith.divf %306, %307 : vector<32x1xf32>
    %309 = vector.broadcast %301 : vector<32x1xf32> to vector<32x32xf32>
    %310 = arith.subf %293, %309 : vector<32x32xf32>
    %cst_162 = arith.constant 9.99999974E-6 : f32
    %311 = vector.broadcast %cst_162 : f32 to vector<32x1xf32>
    %312 = arith.addf %308, %311 : vector<32x1xf32>
    %313 = math.rsqrt %312 : vector<32x1xf32>
    %314 = vector.broadcast %313 : vector<32x1xf32> to vector<32x32xf32>
    %315 = arith.mulf %310, %314 : vector<32x32xf32>
    %316 = vector.broadcast %295 : vector<1x32xf32> to vector<32x32xf32>
    %317 = arith.mulf %315, %316 : vector<32x32xf32>
    %318 = vector.broadcast %297 : vector<1x32xf32> to vector<32x32xf32>
    %319 = arith.addf %317, %318 : vector<32x32xf32>
    %c1_163 = arith.constant 1 : index
    %c0_164 = arith.constant 0 : index
    %c0_165 = arith.constant 0 : index
    %320 = vector.load %arg12[%c1_163, %c0_164, %c0_165] : memref<2x32x64xf32, #tpu.memory_space<vmem>>, vector<1x32x64xf32>
    %321 = vector.shape_cast %320 : vector<1x32x64xf32> to vector<32x64xf32>
    %cst_166 = arith.constant dense<0.000000e+00> : vector<32x64xf32>
    %322 = tpu.matmul %319, %321, %cst_166 {dimension_numbers = #tpu.dot_dimension_numbers<[1], [0], [0], [1], [0, 0, 1, 1], [], []>} : vector<32x32xf32>, vector<32x64xf32>, vector<32x64xf32> -> vector<32x64xf32>
    %c1_167 = arith.constant 1 : index
    %c0_168 = arith.constant 0 : index
    %c0_169 = arith.constant 0 : index
    %323 = vector.load %arg13[%c1_167, %c0_168, %c0_169] : memref<2x1x64xf32, #tpu.memory_space<vmem>>, vector<1x1x64xf32>
    %324 = vector.shape_cast %323 : vector<1x1x64xf32> to vector<1x64xf32>
    %325 = vector.broadcast %324 : vector<1x64xf32> to vector<32x64xf32>
    %326 = arith.addf %322, %325 : vector<32x64xf32>
    %cst_170 = arith.constant 5.000000e-01 : f32
    %327 = vector.broadcast %cst_170 : f32 to vector<32x64xf32>
    %328 = arith.mulf %327, %326 : vector<32x64xf32>
    %cst_171 = arith.constant 0.707106769 : f32
    %329 = vector.broadcast %cst_171 : f32 to vector<32x64xf32>
    %330 = arith.mulf %326, %329 : vector<32x64xf32>
    %331 = math.erf %330 : vector<32x64xf32>
    %cst_172 = arith.constant 1.000000e+00 : f32
    %332 = vector.broadcast %cst_172 : f32 to vector<32x64xf32>
    %333 = arith.addf %332, %331 : vector<32x64xf32>
    %334 = arith.mulf %328, %333 : vector<32x64xf32>
    %c1_173 = arith.constant 1 : index
    %c0_174 = arith.constant 0 : index
    %c0_175 = arith.constant 0 : index
    %335 = vector.load %arg14[%c1_173, %c0_174, %c0_175] : memref<2x64x32xf32, #tpu.memory_space<vmem>>, vector<1x64x32xf32>
    %336 = vector.shape_cast %335 : vector<1x64x32xf32> to vector<64x32xf32>
    %cst_176 = arith.constant dense<0.000000e+00> : vector<32x32xf32>
    %337 = tpu.matmul %334, %336, %cst_176 {dimension_numbers = #tpu.dot_dimension_numbers<[1], [0], [0], [1], [0, 0, 1, 1], [], []>} : vector<32x64xf32>, vector<64x32xf32>, vector<32x32xf32> -> vector<32x32xf32>
    %c1_177 = arith.constant 1 : index
    %c0_178 = arith.constant 0 : index
    %c0_179 = arith.constant 0 : index
    %338 = vector.load %arg15[%c1_177, %c0_178, %c0_179] : memref<2x1x32xf32, #tpu.memory_space<vmem>>, vector<1x1x32xf32>
    %339 = vector.shape_cast %338 : vector<1x1x32xf32> to vector<1x32xf32>
    %340 = vector.broadcast %339 : vector<1x32xf32> to vector<32x32xf32>
    %341 = arith.addf %337, %340 : vector<32x32xf32>
    %342 = arith.addf %293, %341 : vector<32x32xf32>
    %c0_180 = arith.constant 0 : index
    %c0_181 = arith.constant 0 : index
    %343 = vector.load %arg16[%c0_180, %c0_181] : memref<1x32xf32, #tpu.memory_space<vmem>>, vector<1x32xf32>
    %c0_182 = arith.constant 0 : index
    %c0_183 = arith.constant 0 : index
    %344 = vector.load %arg17[%c0_182, %c0_183] : memref<1x32xf32, #tpu.memory_space<vmem>>, vector<1x32xf32>
    %cst_184 = arith.constant dense<0.000000e+00> : vector<32xf32>
    %345 = vector.multi_reduction <add>, %342, %cst_184 [1] : vector<32x32xf32> to vector<32xf32>
    %346 = vector.shape_cast %345 : vector<32xf32> to vector<32x1xf32>
    %cst_185 = arith.constant 3.200000e+01 : f32
    %347 = vector.broadcast %cst_185 : f32 to vector<32x1xf32>
    %348 = arith.divf %346, %347 : vector<32x1xf32>
    %349 = vector.broadcast %348 : vector<32x1xf32> to vector<32x32xf32>
    %350 = arith.subf %342, %349 : vector<32x32xf32>
    %351 = arith.mulf %350, %350 : vector<32x32xf32>
    %cst_186 = arith.constant dense<0.000000e+00> : vector<32xf32>
    %352 = vector.multi_reduction <add>, %351, %cst_186 [1] : vector<32x32xf32> to vector<32xf32>
    %353 = vector.shape_cast %352 : vector<32xf32> to vector<32x1xf32>
    %cst_187 = arith.constant 3.200000e+01 : f32
    %354 = vector.broadcast %cst_187 : f32 to vector<32x1xf32>
    %355 = arith.divf %353, %354 : vector<32x1xf32>
    %356 = vector.broadcast %348 : vector<32x1xf32> to vector<32x32xf32>
    %357 = arith.subf %342, %356 : vector<32x32xf32>
    %cst_188 = arith.constant 9.99999974E-6 : f32
    %358 = vector.broadcast %cst_188 : f32 to vector<32x1xf32>
    %359 = arith.addf %355, %358 : vector<32x1xf32>
    %360 = math.rsqrt %359 : vector<32x1xf32>
    %361 = vector.broadcast %360 : vector<32x1xf32> to vector<32x32xf32>
    %362 = arith.mulf %357, %361 : vector<32x32xf32>
    %363 = vector.broadcast %343 : vector<1x32xf32> to vector<32x32xf32>
    %364 = arith.mulf %362, %363 : vector<32x32xf32>
    %365 = vector.broadcast %344 : vector<1x32xf32> to vector<32x32xf32>
    %366 = arith.addf %364, %365 : vector<32x32xf32>
    %c0_189 = arith.constant 0 : index
    %c0_190 = arith.constant 0 : index
    %367 = vector.load %arg18[%c0_189, %c0_190] : memref<32x32xf32, #tpu.memory_space<vmem>>, vector<32x32xf32>
    %cst_191 = arith.constant dense<0.000000e+00> : vector<32x32xf32>
    %368 = tpu.matmul %366, %367, %cst_191 {dimension_numbers = #tpu.dot_dimension_numbers<[1], [0], [0], [1], [0, 0, 1, 1], [], []>} : vector<32x32xf32>, vector<32x32xf32>, vector<32x32xf32> -> vector<32x32xf32>
    %c0_192 = arith.constant 0 : index
    %c0_193 = arith.constant 0 : index
    %369 = vector.load %arg19[%c0_192, %c0_193] : memref<1x32xf32, #tpu.memory_space<vmem>>, vector<1x32xf32>
    %370 = vector.broadcast %369 : vector<1x32xf32> to vector<32x32xf32>
    %371 = arith.addf %368, %370 : vector<32x32xf32>
    %cst_194 = arith.constant 5.000000e-01 : f32
    %372 = vector.broadcast %cst_194 : f32 to vector<32x32xf32>
    %373 = arith.mulf %372, %371 : vector<32x32xf32>
    %cst_195 = arith.constant 0.707106769 : f32
    %374 = vector.broadcast %cst_195 : f32 to vector<32x32xf32>
    %375 = arith.mulf %371, %374 : vector<32x32xf32>
    %376 = math.erf %375 : vector<32x32xf32>
    %cst_196 = arith.constant 1.000000e+00 : f32
    %377 = vector.broadcast %cst_196 : f32 to vector<32x32xf32>
    %378 = arith.addf %377, %376 : vector<32x32xf32>
    %379 = arith.mulf %373, %378 : vector<32x32xf32>
    %c0_197 = arith.constant 0 : index
    %c0_198 = arith.constant 0 : index
    %380 = vector.load %arg20[%c0_197, %c0_198] : memref<1x32xf32, #tpu.memory_space<vmem>>, vector<1x32xf32>
    %c0_199 = arith.constant 0 : index
    %c0_200 = arith.constant 0 : index
    %381 = vector.load %arg21[%c0_199, %c0_200] : memref<1x32xf32, #tpu.memory_space<vmem>>, vector<1x32xf32>
    %cst_201 = arith.constant dense<0.000000e+00> : vector<32xf32>
    %382 = vector.multi_reduction <add>, %379, %cst_201 [1] : vector<32x32xf32> to vector<32xf32>
    %383 = vector.shape_cast %382 : vector<32xf32> to vector<32x1xf32>
    %cst_202 = arith.constant 3.200000e+01 : f32
    %384 = vector.broadcast %cst_202 : f32 to vector<32x1xf32>
    %385 = arith.divf %383, %384 : vector<32x1xf32>
    %386 = vector.broadcast %385 : vector<32x1xf32> to vector<32x32xf32>
    %387 = arith.subf %379, %386 : vector<32x32xf32>
    %388 = arith.mulf %387, %387 : vector<32x32xf32>
    %cst_203 = arith.constant dense<0.000000e+00> : vector<32xf32>
    %389 = vector.multi_reduction <add>, %388, %cst_203 [1] : vector<32x32xf32> to vector<32xf32>
    %390 = vector.shape_cast %389 : vector<32xf32> to vector<32x1xf32>
    %cst_204 = arith.constant 3.200000e+01 : f32
    %391 = vector.broadcast %cst_204 : f32 to vector<32x1xf32>
    %392 = arith.divf %390, %391 : vector<32x1xf32>
    %393 = vector.broadcast %385 : vector<32x1xf32> to vector<32x32xf32>
    %394 = arith.subf %379, %393 : vector<32x32xf32>
    %cst_205 = arith.constant 9.99999974E-6 : f32
    %395 = vector.broadcast %cst_205 : f32 to vector<32x1xf32>
    %396 = arith.addf %392, %395 : vector<32x1xf32>
    %397 = math.rsqrt %396 : vector<32x1xf32>
    %398 = vector.broadcast %397 : vector<32x1xf32> to vector<32x32xf32>
    %399 = arith.mulf %394, %398 : vector<32x32xf32>
    %400 = vector.broadcast %380 : vector<1x32xf32> to vector<32x32xf32>
    %401 = arith.mulf %399, %400 : vector<32x32xf32>
    %402 = vector.broadcast %381 : vector<1x32xf32> to vector<32x32xf32>
    %403 = arith.addf %401, %402 : vector<32x32xf32>
    %c0_206 = arith.constant 0 : index
    %c0_207 = arith.constant 0 : index
    %404 = vector.load %arg22[%c0_206, %c0_207] : memref<32x64xf32, #tpu.memory_space<vmem>>, vector<32x64xf32>
    %cst_208 = arith.constant dense<0.000000e+00> : vector<32x64xf32>
    %405 = tpu.matmul %403, %404, %cst_208 {dimension_numbers = #tpu.dot_dimension_numbers<[1], [0], [0], [1], [0, 0, 1, 1], [], []>} : vector<32x32xf32>, vector<32x64xf32>, vector<32x64xf32> -> vector<32x64xf32>
    %406 = vector.shape_cast %405 : vector<32x64xf32> to vector<2x16x64xf32>
    %c0_209 = arith.constant 0 : index
    %c0_210 = arith.constant 0 : index
    %407 = vector.load %arg23[%c0_209, %c0_210] : memref<16x64xf32, #tpu.memory_space<vmem>>, vector<16x64xf32>
    %408 = vector.shape_cast %407 : vector<16x64xf32> to vector<1x16x64xf32>
    %409 = vector.broadcast %408 : vector<1x16x64xf32> to vector<2x16x64xf32>
    %410 = arith.addf %406, %409 : vector<2x16x64xf32>
    %c0_211 = arith.constant 0 : index
    %c0_212 = arith.constant 0 : index
    %c0_213 = arith.constant 0 : index
    %411 = vector.load %arg24[%c0_211, %c0_212, %c0_213] : memref<2x16x64xf32, #tpu.memory_space<vmem>>, vector<2x16x64xf32>
    tpu.vector_store %arg24[%c0_211, %c0_212, %c0_213], %410 {strides = array<i32>} : memref<2x16x64xf32, #tpu.memory_space<vmem>>, vector<2x16x64xf32>,
    return
  }
}

</mosaic_0001>

<llo_original>
// kernel: tpu_custom_call.1
$region0: #{tpu_custom_call.1}
  #allocation0 [shape = 'u32[]', space=smem, size = 0x4, offset = 0x4, fixed_abs, tag = 'smem constant byte address 0x4 - core index']
  #allocation1 [shape = 'u32[144,128]{1,0:T(1,128)}', space=vmem, size = 0x12000, scoped, tag = 'internal scratch']
  #allocation2 [shape = 'f32[2,16,32]{2,1,0:T(8,128)}', space=vmem, size = 0x4000, scoped, tag = 'scratch operand']
  %s0 = inlined_call_operand.hbm [shape: f32[2,16,32], index: 0, kind: input, shape index: {}]
  %s1 = inlined_call_operand.hbm [shape: f32[2,16], index: 1, kind: input, shape index: {}]
  %s2 = inlined_call_operand.hbm [shape: f32[16,32], index: 2, kind: input, shape index: {}]
  %s3 = inlined_call_operand.hbm [shape: f32[1,32], index: 3, kind: input, shape index: {}]
  %s4 = inlined_call_operand.hbm [shape: f32[2,1,32], index: 4, kind: input, shape index: {}]
  %s5 = inlined_call_operand.hbm [shape: f32[2,1,32], index: 5, kind: input, shape index: {}]
  %s6 = inlined_call_operand.vmem [shape: f32[2,32,96], index: 6, kind: input, shape index: {}]
  %s7 = inlined_call_operand.hbm [shape: f32[2,1,96], index: 7, kind: input, shape index: {}]
  %s8 = inlined_call_operand.vmem [shape: f32[2,32,32], index: 8, kind: input, shape index: {}]
  %s9 = inlined_call_operand.hbm [shape: f32[2,1,32], index: 9, kind: input, shape index: {}]
  %s10 = inlined_call_operand.hbm [shape: f32[2,1,32], index: 10, kind: input, shape index: {}]
  %s11 = inlined_call_operand.hbm [shape: f32[2,1,32], index: 11, kind: input, shape index: {}]
  %s12 = inlined_call_operand.vmem [shape: f32[2,32,64], index: 12, kind: input, shape index: {}]
  %s13 = inlined_call_operand.hbm [shape: f32[2,1,64], index: 13, kind: input, shape index: {}]
  %s14 = inlined_call_operand.vmem [shape: f32[2,64,32], index: 14, kind: input, shape index: {}]
  %s15 = inlined_call_operand.hbm [shape: f32[2,1,32], index: 15, kind: input, shape index: {}]
  %s16 = inlined_call_operand.hbm [shape: f32[1,32], index: 16, kind: input, shape index: {}]
  %s17 = inlined_call_operand.hbm [shape: f32[1,32], index: 17, kind: input, shape index: {}]
  %s18 = inlined_call_operand.vmem [shape: f32[32,32], index: 18, kind: input, shape index: {}]
  %s19 = inlined_call_operand.hbm [shape: f32[1,32], index: 19, kind: input, shape index: {}]
  %s20 = inlined_call_operand.vmem [shape: f32[1,32], index: 20, kind: input, shape index: {}]
  %s21 = inlined_call_operand.vmem [shape: f32[1,32], index: 21, kind: input, shape index: {}]
  %s22 = inlined_call_operand.hbm [shape: f32[32,64], index: 22, kind: input, shape index: {}]
  %s23 = inlined_call_operand.hbm [shape: f32[16,64], index: 23, kind: input, shape index: {}]
  %s24 = inlined_call_operand.hbm [shape: f32[2,16,64], index: 24, kind: output, shape index: {}]
  %s25 = sld [smem:[#allocation0]]
  $region174: #{tpu_custom_call.1} parent=0
    _
  %s27 = ssub.s32 1, %s25
  %s28 = scalar_select 0, %s27, %s25
  $region1: #{tpu_custom_call.1} parent=0
    #allocation3 [shape = 'u8[16384]{0}', space=vmem, size = 0x4000, scoped, tag = 'input window, operand 0, single buffered']
    #allocation4 [shape = 's32[1]{0}', space=sflag, size = 0x4, scoped, tag = 'scoped memory for tpu_custom_call.1']
    #allocation5 [shape = 's32[1]{0}', space=sflag, size = 0x4, scoped, tag = 'scoped memory for tpu_custom_call.1']
    #allocation6 [shape = 'u8[1024]{0}', space=vmem, size = 0x400, scoped, tag = 'input window, operand 1, single buffered']
    #allocation7 [shape = 's32[1]{0}', space=sflag, size = 0x4, scoped, tag = 'scoped memory for tpu_custom_call.1']
    #allocation8 [shape = 'u8[8192]{0}', space=vmem, size = 0x2000, scoped, tag = 'input window, operand 2, single buffered']
    #allocation9 [shape = 'u8[512]{0}', space=vmem, size = 0x400, scoped, tag = 'input window, operand 3, single buffered']
    #allocation10 [shape = 's32[1]{0}', space=sflag, size = 0x4, scoped, tag = 'scoped memory for tpu_custom_call.1']
    #allocation11 [shape = 'u8[1024]{0}', space=vmem, size = 0x400, scoped, tag = 'input window, operand 4, single buffered']
    #allocation12 [shape = 'u8[1024]{0}', space=vmem, size = 0x400, scoped, tag = 'input window, operand 5, single buffered']
    #allocation13 [shape = 's32[1]{0}', space=sflag, size = 0x4, scoped, tag = 'scoped memory for tpu_custom_call.1']
    #allocation14 [shape = 'u8[1024]{0}', space=vmem, size = 0x400, scoped, tag = 'input window, operand 7, single buffered']
    #allocation15 [shape = 'u8[1024]{0}', space=vmem, size = 0x400, scoped, tag = 'input window, operand 9, single buffered']
    #allocation16 [shape = 's32[1]{0}', space=sflag, size = 0x4, scoped, tag = 'scoped memory for tpu_custom_call.1']
    #allocation17 [shape = 'u8[1024]{0}', space=vmem, size = 0x400, scoped, tag = 'input window, operand 10, single buffered']
    #allocation18 [shape = 'u8[1024]{0}', space=vmem, size = 0x400, scoped, tag = 'input window, operand 11, single buffered']
    #allocation19 [shape = 's32[1]{0}', space=sflag, size = 0x4, scoped, tag = 'scoped memory for tpu_custom_call.1']
    #allocation20 [shape = 'u8[1024]{0}', space=vmem, size = 0x400, scoped, tag = 'input window, operand 13, single buffered']
    #allocation21 [shape = 'u8[1024]{0}', space=vmem, size = 0x400, scoped, tag = 'input window, operand 15, single buffered']
    #allocation22 [shape = 's32[1]{0}', space=sflag, size = 0x4, scoped, tag = 'scoped memory for tpu_custom_call.1']
    #allocation23 [shape = 'u8[512]{0}', space=vmem, size = 0x400, scoped, tag = 'input window, operand 16, single buffered']
    #allocation24 [shape = 'u8[512]{0}', space=vmem, size = 0x400, scoped, tag = 'input window, operand 17, single buffered']
    #allocation25 [shape = 's32[1]{0}', space=sflag, size = 0x4, scoped, tag = 'scoped memory for tpu_custom_call.1']
    #allocation26 [shape = 'u8[512]{0}', space=vmem, size = 0x400, scoped, tag = 'input window, operand 19, single buffered']
    #allocation27 [shape = 'u8[16384]{0}', space=vmem, size = 0x4000, scoped, tag = 'input window, operand 22, single buffered']
    #allocation28 [shape = 's32[1]{0}', space=sflag, size = 0x4, scoped, tag = 'scoped memory for tpu_custom_call.1']
    #allocation29 [shape = 'u8[8192]{0}', space=vmem, size = 0x2000, scoped, tag = 'input window, operand 23, single buffered']
    #allocation30 [shape = 'u8[16384]{0}', space=vmem, size = 0x4000, scoped, tag = 'output window, operand 0, single buffered']
    %29 = vsyncpa [#allocation4], 0
    %30 = vsyncpa [#allocation7], 0
    %31 = vsyncpa [#allocation10], 0
    %32 = vsyncpa [#allocation13], 0
    %33 = vsyncpa [#allocation16], 0
    %34 = vsyncpa [#allocation19], 0
    %35 = vsyncpa [#allocation22], 0
    %36 = vsyncpa [#allocation25], 0
    %37 = vsyncpa [#allocation28], 0
    %38 = vsyncpa [#allocation5], 0
    // Predicated region
    $region2: #{tpu_custom_call.1} parent=1 // pred_check
      _
    $region3: #{tpu_custom_call.1} parent=1 // pred_check_branch
      %40 = sbr.rel (0) target = $region5
    $region4: #{tpu_custom_call.1} parent=1 // pred_region
      %s42 = ssub.s32 512, 512
      %43 = vsyncadd [#allocation4], %s42
      %s44 = sshll.u32 [#allocation3], 4
      %s45 = int_to_ptr.vmem [resolvable:$true] %s44
      %50 = dma.hbm_to_vmem [thread:$0]  %s0, 512, %s45, [#allocation4], 128, 128, 8
    $region5: #{tpu_custom_call.1} parent=1 // pred_fallthru
      _
    // Predicated region
    $region6: #{tpu_custom_call.1} parent=1 // pred_check
      _
    $region7: #{tpu_custom_call.1} parent=1 // pred_check_branch
      %52 = sbr.rel (0) target = $region9
    $region8: #{tpu_custom_call.1} parent=1 // pred_region
      %s54 = ssub.s32 32, 32
      %55 = vsyncadd [#allocation7], %s54
      %s57 = sshll.u32 [#allocation6], 4
      %s58 = int_to_ptr.vmem [resolvable:$true] %s57
      %60 = dma.hbm_to_vmem [thread:$0]  %s1, 32, %s58, [#allocation7]
    $region9: #{tpu_custom_call.1} parent=1 // pred_fallthru
      _
    // Predicated region
    $region10: #{tpu_custom_call.1} parent=1 // pred_check
      _
    $region11: #{tpu_custom_call.1} parent=1 // pred_check_branch
      %62 = sbr.rel (0) target = $region13
    $region12: #{tpu_custom_call.1} parent=1 // pred_region
      %s64 = ssub.s32 256, 256
      %65 = vsyncadd [#allocation7], %s64
      %s66 = sshll.u32 [#allocation8], 4
      %s67 = int_to_ptr.vmem [resolvable:$true] %s66
      %72 = dma.hbm_to_vmem [thread:$0]  %s2, 256, %s67, [#allocation7], 128, 128, 8
    $region13: #{tpu_custom_call.1} parent=1 // pred_fallthru
      _
    // Predicated region
    $region14: #{tpu_custom_call.1} parent=1 // pred_check
      _
    $region15: #{tpu_custom_call.1} parent=1 // pred_check_branch
      %74 = sbr.rel (0) target = $region17
    $region16: #{tpu_custom_call.1} parent=1 // pred_region
      %s76 = ssub.s32 16, 16
      %77 = vsyncadd [#allocation10], %s76
      %s79 = sshll.u32 [#allocation9], 4
      %s80 = int_to_ptr.vmem [resolvable:$true] %s79
      %82 = dma.hbm_to_vmem [thread:$0]  %s3, 16, %s80, [#allocation10]
    $region17: #{tpu_custom_call.1} parent=1 // pred_fallthru
      _
    // Predicated region
    $region18: #{tpu_custom_call.1} parent=1 // pred_check
      _
    $region19: #{tpu_custom_call.1} parent=1 // pred_check_branch
      %84 = sbr.rel (0) target = $region21
    $region20: #{tpu_custom_call.1} parent=1 // pred_region
      %s86 = ssub.s32 32, 32
      %87 = vsyncadd [#allocation10], %s86
      %s88 = sshll.u32 [#allocation11], 4
      %s89 = int_to_ptr.vmem [resolvable:$true] %s88
      %94 = dma.hbm_to_vmem [thread:$0]  %s4, 32, %s89, [#allocation10], 16, 16, 1
    $region21: #{tpu_custom_call.1} parent=1 // pred_fallthru
      _
    // Predicated region
    $region22: #{tpu_custom_call.1} parent=1 // pred_check
      _
    $region23: #{tpu_custom_call.1} parent=1 // pred_check_branch
      %96 = sbr.rel (0) target = $region25
    $region24: #{tpu_custom_call.1} parent=1 // pred_region
      %s98 = ssub.s32 32, 32
      %99 = vsyncadd [#allocation13], %s98
      %s100 = sshll.u32 [#allocation12], 4
      %s101 = int_to_ptr.vmem [resolvable:$true] %s100
      %106 = dma.hbm_to_vmem [thread:$0]  %s5, 32, %s101, [#allocation13], 16, 16, 1
    $region25: #{tpu_custom_call.1} parent=1 // pred_fallthru
      _
    // Predicated region
    $region26: #{tpu_custom_call.1} parent=1 // pred_check
      _
    $region27: #{tpu_custom_call.1} parent=1 // pred_check_branch
      %108 = sbr.rel (0) target = $region29
    $region28: #{tpu_custom_call.1} parent=1 // pred_region
      _
    $region29: #{tpu_custom_call.1} parent=1 // pred_fallthru
      _
    // Predicated region
    $region30: #{tpu_custom_call.1} parent=1 // pred_check
      _
    $region31: #{tpu_custom_call.1} parent=1 // pred_check_branch
      %110 = sbr.rel (0) target = $region33
    $region32: #{tpu_custom_call.1} parent=1 // pred_region
      %s112 = ssub.s32 32, 32
      %113 = vsyncadd [#allocation13], %s112
      %s114 = sshll.u32 [#allocation14], 4
      %s115 = int_to_ptr.vmem [resolvable:$true] %s114
      %120 = dma.hbm_to_vmem [thread:$0]  %s7, 32, %s115, [#allocation13], 16, 16, 1
    $region33: #{tpu_custom_call.1} parent=1 // pred_fallthru
      _
    // Predicated region
    $region34: #{tpu_custom_call.1} parent=1 // pred_check
      _
    $region35: #{tpu_custom_call.1} parent=1 // pred_check_branch
      %122 = sbr.rel (0) target = $region37
    $region36: #{tpu_custom_call.1} parent=1 // pred_region
      _
    $region37: #{tpu_custom_call.1} parent=1 // pred_fallthru
      _
    // Predicated region
    $region38: #{tpu_custom_call.1} parent=1 // pred_check
      _
    $region39: #{tpu_custom_call.1} parent=1 // pred_check_branch
      %124 = sbr.rel (0) target = $region41
    $region40: #{tpu_custom_call.1} parent=1 // pred_region
      %s126 = ssub.s32 32, 32
      %127 = vsyncadd [#allocation16], %s126
      %s128 = sshll.u32 [#allocation15], 4
      %s129 = int_to_ptr.vmem [resolvable:$true] %s128
      %134 = dma.hbm_to_vmem [thread:$0]  %s9, 32, %s129, [#allocation16], 16, 16, 1
    $region41: #{tpu_custom_call.1} parent=1 // pred_fallthru
      _
    // Predicated region
    $region42: #{tpu_custom_call.1} parent=1 // pred_check
      _
    $region43: #{tpu_custom_call.1} parent=1 // pred_check_branch
      %136 = sbr.rel (0) target = $region45
    $region44: #{tpu_custom_call.1} parent=1 // pred_region
      %s138 = ssub.s32 32, 32
      %139 = vsyncadd [#allocation16], %s138
      %s140 = sshll.u32 [#allocation17], 4
      %s141 = int_to_ptr.vmem [resolvable:$true] %s140
      %146 = dma.hbm_to_vmem [thread:$0]  %s10, 32, %s141, [#allocation16], 16, 16, 1
    $region45: #{tpu_custom_call.1} parent=1 // pred_fallthru
      _
    // Predicated region
    $region46: #{tpu_custom_call.1} parent=1 // pred_check
      _
    $region47: #{tpu_custom_call.1} parent=1 // pred_check_branch
      %148 = sbr.rel (0) target = $region49
    $region48: #{tpu_custom_call.1} parent=1 // pred_region
      %s150 = ssub.s32 32, 32
      %151 = vsyncadd [#allocation19], %s150
      %s152 = sshll.u32 [#allocation18], 4
      %s153 = int_to_ptr.vmem [resolvable:$true] %s152
      %158 = dma.hbm_to_vmem [thread:$0]  %s11, 32, %s153, [#allocation19], 16, 16, 1
    $region49: #{tpu_custom_call.1} parent=1 // pred_fallthru
      _
    // Predicated region
    $region50: #{tpu_custom_call.1} parent=1 // pred_check
      _
    $region51: #{tpu_custom_call.1} parent=1 // pred_check_branch
      %160 = sbr.rel (0) target = $region53
    $region52: #{tpu_custom_call.1} parent=1 // pred_region
      _
    $region53: #{tpu_custom_call.1} parent=1 // pred_fallthru
      _
    // Predicated region
    $region54: #{tpu_custom_call.1} parent=1 // pred_check
      _
    $region55: #{tpu_custom_call.1} parent=1 // pred_check_branch
      %162 = sbr.rel (0) target = $region57
    $region56: #{tpu_custom_call.1} parent=1 // pred_region
      %s164 = ssub.s32 32, 32
      %165 = vsyncadd [#allocation19], %s164
      %s166 = sshll.u32 [#allocation20], 4
      %s167 = int_to_ptr.vmem [resolvable:$true] %s166
      %172 = dma.hbm_to_vmem [thread:$0]  %s13, 32, %s167, [#allocation19], 16, 16, 1
    $region57: #{tpu_custom_call.1} parent=1 // pred_fallthru
      _
    // Predicated region
    $region58: #{tpu_custom_call.1} parent=1 // pred_check
      _
    $region59: #{tpu_custom_call.1} parent=1 // pred_check_branch
      %174 = sbr.rel (0) target = $region61
    $region60: #{tpu_custom_call.1} parent=1 // pred_region
      _
    $region61: #{tpu_custom_call.1} parent=1 // pred_fallthru
      _
    // Predicated region
    $region62: #{tpu_custom_call.1} parent=1 // pred_check
      _
    $region63: #{tpu_custom_call.1} parent=1 // pred_check_branch
      %176 = sbr.rel (0) target = $region65
    $region64: #{tpu_custom_call.1} parent=1 // pred_region
      %s178 = ssub.s32 32, 32
      %179 = vsyncadd [#allocation22], %s178
      %s180 = sshll.u32 [#allocation21], 4
      %s181 = int_to_ptr.vmem [resolvable:$true] %s180
      %186 = dma.hbm_to_vmem [thread:$0]  %s15, 32, %s181, [#allocation22], 16, 16, 1
    $region65: #{tpu_custom_call.1} parent=1 // pred_fallthru
      _
    // Predicated region
    $region66: #{tpu_custom_call.1} parent=1 // pred_check
      _
    $region67: #{tpu_custom_call.1} parent=1 // pred_check_branch
      %188 = sbr.rel (0) target = $region69
    $region68: #{tpu_custom_call.1} parent=1 // pred_region
      %s190 = ssub.s32 16, 16
      %191 = vsyncadd [#allocation22], %s190
      %s193 = sshll.u32 [#allocation23], 4
      %s194 = int_to_ptr.vmem [resolvable:$true] %s193
      %196 = dma.hbm_to_vmem [thread:$0]  %s16, 16, %s194, [#allocation22]
    $region69: #{tpu_custom_call.1} parent=1 // pred_fallthru
      _
    // Predicated region
    $region70: #{tpu_custom_call.1} parent=1 // pred_check
      _
    $region71: #{tpu_custom_call.1} parent=1 // pred_check_branch
      %198 = sbr.rel (0) target = $region73
    $region72: #{tpu_custom_call.1} parent=1 // pred_region
      %s200 = ssub.s32 16, 16
      %201 = vsyncadd [#allocation25], %s200
      %s203 = sshll.u32 [#allocation24], 4
      %s204 = int_to_ptr.vmem [resolvable:$true] %s203
      %206 = dma.hbm_to_vmem [thread:$0]  %s17, 16, %s204, [#allocation25]
    $region73: #{tpu_custom_call.1} parent=1 // pred_fallthru
      _
    // Predicated region
    $region74: #{tpu_custom_call.1} parent=1 // pred_check
      _
    $region75: #{tpu_custom_call.1} parent=1 // pred_check_branch
      %208 = sbr.rel (0) target = $region77
    $region76: #{tpu_custom_call.1} parent=1 // pred_region
      _
    $region77: #{tpu_custom_call.1} parent=1 // pred_fallthru
      _
    // Predicated region
    $region78: #{tpu_custom_call.1} parent=1 // pred_check
      _
    $region79: #{tpu_custom_call.1} parent=1 // pred_check_branch
      %210 = sbr.rel (0) target = $region81
    $region80: #{tpu_custom_call.1} parent=1 // pred_region
      %s212 = ssub.s32 16, 16
      %213 = vsyncadd [#allocation25], %s212
      %s215 = sshll.u32 [#allocation26], 4
      %s216 = int_to_ptr.vmem [resolvable:$true] %s215
      %218 = dma.hbm_to_vmem [thread:$0]  %s19, 16, %s216, [#allocation25]
    $region81: #{tpu_custom_call.1} parent=1 // pred_fallthru
      _
    // Predicated region
    $region82: #{tpu_custom_call.1} parent=1 // pred_check
      _
    $region83: #{tpu_custom_call.1} parent=1 // pred_check_branch
      %220 = sbr.rel (0) target = $region85
    $region84: #{tpu_custom_call.1} parent=1 // pred_region
      _
    $region85: #{tpu_custom_call.1} parent=1 // pred_fallthru
      _
    // Predicated region
    $region86: #{tpu_custom_call.1} parent=1 // pred_check
      _
    $region87: #{tpu_custom_call.1} parent=1 // pred_check_branch
      %222 = sbr.rel (0) target = $region89
    $region88: #{tpu_custom_call.1} parent=1 // pred_region
      _
    $region89: #{tpu_custom_call.1} parent=1 // pred_fallthru
      _
    // Predicated region
    $region90: #{tpu_custom_call.1} parent=1 // pred_check
      _
    $region91: #{tpu_custom_call.1} parent=1 // pred_check_branch
      %224 = sbr.rel (0) target = $region93
    $region92: #{tpu_custom_call.1} parent=1 // pred_region
      %s226 = ssub.s32 512, 512
      %227 = vsyncadd [#allocation28], %s226
      %s228 = sshll.u32 [#allocation27], 4
      %s229 = int_to_ptr.vmem [resolvable:$true] %s228
      %234 = dma.hbm_to_vmem [thread:$0]  %s22, 512, %s229, [#allocation28], 128, 128, 8
    $region93: #{tpu_custom_call.1} parent=1 // pred_fallthru
      _
    // Predicated region
    $region94: #{tpu_custom_call.1} parent=1 // pred_check
      _
    $region95: #{tpu_custom_call.1} parent=1 // pred_check_branch
      %236 = sbr.rel (0) target = $region97
    $region96: #{tpu_custom_call.1} parent=1 // pred_region
      %s238 = ssub.s32 256, 256
      %239 = vsyncadd [#allocation28], %s238
      %s240 = sshll.u32 [#allocation29], 4
      %s241 = int_to_ptr.vmem [resolvable:$true] %s240
      %246 = dma.hbm_to_vmem [thread:$0]  %s23, 256, %s241, [#allocation28], 128, 128, 8
    $region97: #{tpu_custom_call.1} parent=1 // pred_fallthru
      _
    // Predicated region
    $region98: #{tpu_custom_call.1} parent=1 // pred_check
      _
    $region99: #{tpu_custom_call.1} parent=1 // pred_check_branch
      %248 = sbr.rel (0) target = $region101
    $region100: #{tpu_custom_call.1} parent=1 // pred_region
      %249 = dma.done [#allocation4], 512
    $region101: #{tpu_custom_call.1} parent=1 // pred_fallthru
      _
    // Predicated region
    $region102: #{tpu_custom_call.1} parent=1 // pred_check
      _
    $region103: #{tpu_custom_call.1} parent=1 // pred_check_branch
      %251 = sbr.rel (0) target = $region105
    $region104: #{tpu_custom_call.1} parent=1 // pred_region
      %252 = dma.done [#allocation7], 32
    $region105: #{tpu_custom_call.1} parent=1 // pred_fallthru
      _
    // Predicated region
    $region106: #{tpu_custom_call.1} parent=1 // pred_check
      _
    $region107: #{tpu_custom_call.1} parent=1 // pred_check_branch
      %254 = sbr.rel (0) target = $region109
    $region108: #{tpu_custom_call.1} parent=1 // pred_region
      %255 = dma.done [#allocation7], 256
    $region109: #{tpu_custom_call.1} parent=1 // pred_fallthru
      _
    // Predicated region
    $region110: #{tpu_custom_call.1} parent=1 // pred_check
      _
    $region111: #{tpu_custom_call.1} parent=1 // pred_check_branch
      %257 = sbr.rel (0) target = $region113
    $region112: #{tpu_custom_call.1} parent=1 // pred_region
      %258 = dma.done [#allocation10], 16
    $region113: #{tpu_custom_call.1} parent=1 // pred_fallthru
      _
    // Predicated region
    $region114: #{tpu_custom_call.1} parent=1 // pred_check
      _
    $region115: #{tpu_custom_call.1} parent=1 // pred_check_branch
      %260 = sbr.rel (0) target = $region117
    $region116: #{tpu_custom_call.1} parent=1 // pred_region
      %261 = dma.done [#allocation10], 32
    $region117: #{tpu_custom_call.1} parent=1 // pred_fallthru
      _
    // Predicated region
    $region118: #{tpu_custom_call.1} parent=1 // pred_check
      _
    $region119: #{tpu_custom_call.1} parent=1 // pred_check_branch
      %263 = sbr.rel (0) target = $region121
    $region120: #{tpu_custom_call.1} parent=1 // pred_region
      %264 = dma.done [#allocation13], 32
    $region121: #{tpu_custom_call.1} parent=1 // pred_fallthru
      _
    // Predicated region
    $region122: #{tpu_custom_call.1} parent=1 // pred_check
      _
    $region123: #{tpu_custom_call.1} parent=1 // pred_check_branch
      %266 = sbr.rel (0) target = $region125
    $region124: #{tpu_custom_call.1} parent=1 // pred_region
      %267 = dma.done [#allocation13], 32
    $region125: #{tpu_custom_call.1} parent=1 // pred_fallthru
      _
    // Predicated region
    $region126: #{tpu_custom_call.1} parent=1 // pred_check
      _
    $region127: #{tpu_custom_call.1} parent=1 // pred_check_branch
      %269 = sbr.rel (0) target = $region129
    $region128: #{tpu_custom_call.1} parent=1 // pred_region
      %270 = dma.done [#allocation16], 32
    $region129: #{tpu_custom_call.1} parent=1 // pred_fallthru
      _
    // Predicated region
    $region130: #{tpu_custom_call.1} parent=1 // pred_check
      _
    $region131: #{tpu_custom_call.1} parent=1 // pred_check_branch
      %272 = sbr.rel (0) target = $region133
    $region132: #{tpu_custom_call.1} parent=1 // pred_region
      %273 = dma.done [#allocation16], 32
    $region133: #{tpu_custom_call.1} parent=1 // pred_fallthru
      _
    // Predicated region
    $region134: #{tpu_custom_call.1} parent=1 // pred_check
      _
    $region135: #{tpu_custom_call.1} parent=1 // pred_check_branch
      %275 = sbr.rel (0) target = $region137
    $region136: #{tpu_custom_call.1} parent=1 // pred_region
      %276 = dma.done [#allocation19], 32
    $region137: #{tpu_custom_call.1} parent=1 // pred_fallthru
      _
    // Predicated region
    $region138: #{tpu_custom_call.1} parent=1 // pred_check
      _
    $region139: #{tpu_custom_call.1} parent=1 // pred_check_branch
      %278 = sbr.rel (0) target = $region141
    $region140: #{tpu_custom_call.1} parent=1 // pred_region
      %279 = dma.done [#allocation19], 32
    $region141: #{tpu_custom_call.1} parent=1 // pred_fallthru
      _
    // Predicated region
    $region142: #{tpu_custom_call.1} parent=1 // pred_check
      _
    $region143: #{tpu_custom_call.1} parent=1 // pred_check_branch
      %281 = sbr.rel (0) target = $region145
    $region144: #{tpu_custom_call.1} parent=1 // pred_region
      %282 = dma.done [#allocation22], 32
    $region145: #{tpu_custom_call.1} parent=1 // pred_fallthru
      _
    // Predicated region
    $region146: #{tpu_custom_call.1} parent=1 // pred_check
      _
    $region147: #{tpu_custom_call.1} parent=1 // pred_check_branch
      %284 = sbr.rel (0) target = $region149
    $region148: #{tpu_custom_call.1} parent=1 // pred_region
      %285 = dma.done [#allocation22], 16
    $region149: #{tpu_custom_call.1} parent=1 // pred_fallthru
      _
    // Predicated region
    $region150: #{tpu_custom_call.1} parent=1 // pred_check
      _
    $region151: #{tpu_custom_call.1} parent=1 // pred_check_branch
      %287 = sbr.rel (0) target = $region153
    $region152: #{tpu_custom_call.1} parent=1 // pred_region
      %288 = dma.done [#allocation25], 16
    $region153: #{tpu_custom_call.1} parent=1 // pred_fallthru
      _
    // Predicated region
    $region154: #{tpu_custom_call.1} parent=1 // pred_check
      _
    $region155: #{tpu_custom_call.1} parent=1 // pred_check_branch
      %290 = sbr.rel (0) target = $region157
    $region156: #{tpu_custom_call.1} parent=1 // pred_region
      %291 = dma.done [#allocation25], 16
    $region157: #{tpu_custom_call.1} parent=1 // pred_fallthru
      _
    // Predicated region
    $region158: #{tpu_custom_call.1} parent=1 // pred_check
      _
    $region159: #{tpu_custom_call.1} parent=1 // pred_check_branch
      %293 = sbr.rel (0) target = $region161
    $region160: #{tpu_custom_call.1} parent=1 // pred_region
      %294 = dma.done [#allocation28], 512
    $region161: #{tpu_custom_call.1} parent=1 // pred_fallthru
      _
    // Predicated region
    $region162: #{tpu_custom_call.1} parent=1 // pred_check
      _
    $region163: #{tpu_custom_call.1} parent=1 // pred_check_branch
      %296 = sbr.rel (0) target = $region165
    $region164: #{tpu_custom_call.1} parent=1 // pred_region
      %297 = dma.done [#allocation28], 256
    $region165: #{tpu_custom_call.1} parent=1 // pred_fallthru
      _
    %v298 = vld [vmem:[#allocation6] sm:$0x3]
    %v299 = vld [vmem:[#allocation8] sm:$0xff]
    %v300 = vld [vmem:[#allocation8 + $0x8] sm:$0xff]
    %v301 = vld [vmem:[#allocation9] sm:$0x1]
    %v303 = vlaneseq
    %v304 = vshrl.u32 %v303, 7
    %v305 = vsub.s32 0, %v304
    %v306 = vrot.slane %v301, %v305
    %vm308 = vcmask 130048
    %v310 = vsel %vm308, %v298, 0
    %312 = vmatprep.subr.mxu0 0.0
    %313 = vmatpush1.msra.mxu0 0.0
    %314 = vmatprep.subr.mxu0 0.0
    %315 = vmatpush1.msra.mxu0 0.0
    %316 = vmatprep.subr.mxu0 0.0
    %317 = vmatpush1.msra.mxu0 0.0
    %318 = vmatprep.subr.mxu0 0.0
    %319 = vmatpush1.msra.mxu0 0.0
    %320 = vmatprep.subr.mxu0 0.0
    %321 = vmatpush1.msra.mxu0 0.0
    %322 = vmatprep.subr.mxu0 0.0
    %323 = vmatpush1.msra.mxu0 0.0
    %324 = vmatprep.subr.mxu0 0.0
    %325 = vmatpush1.msra.mxu0 0.0
    %326 = vmatprep.subr.mxu0 0.0
    %327 = vmatpush1.msra.mxu0 0.0
    %328 = vmatprep.subr.mxu0 0.0
    %329 = vmatpush1.msra.mxu0 0.0
    %330 = vmatprep.subr.mxu0 0.0
    %331 = vmatpush1.msra.mxu0 0.0
    %332 = vmatprep.subr.mxu0 0.0
    %333 = vmatpush1.msra.mxu0 0.0
    %334 = vmatprep.subr.mxu0 0.0
    %335 = vmatpush1.msra.mxu0 0.0
    %336 = vmatprep.subr.mxu0 0.0
    %337 = vmatpush1.msra.mxu0 0.0
    %338 = vmatprep.subr.mxu0 0.0
    %339 = vmatpush1.msra.mxu0 0.0
    %340 = vmatprep.subr.mxu0 0.0
    %341 = vmatpush1.msra.mxu0 %v300
    %342 = vmatprep.subr.mxu0 0.0
    %343 = vmatpush1.msra.mxu0 %v299
    %344 = vmatprep.subr.mxu0 0.0
    %345 = vmatpush2.msra.mxu0 0.0
    %346 = vmatprep.subr.mxu0 0.0
    %347 = vmatpush2.msra.mxu0 0.0
    %348 = vmatprep.subr.mxu0 0.0
    %349 = vmatpush2.msra.mxu0 0.0
    %350 = vmatprep.subr.mxu0 0.0
    %351 = vmatpush2.msra.mxu0 0.0
    %352 = vmatprep.subr.mxu0 0.0
    %353 = vmatpush2.msra.mxu0 0.0
    %354 = vmatprep.subr.mxu0 0.0
    %355 = vmatpush2.msra.mxu0 0.0
    %356 = vmatprep.subr.mxu0 0.0
    %357 = vmatpush2.msra.mxu0 0.0
    %358 = vmatprep.subr.mxu0 0.0
    %359 = vmatpush2.msra.mxu0 0.0
    %360 = vmatprep.subr.mxu0 0.0
    %361 = vmatpush2.msra.mxu0 0.0
    %362 = vmatprep.subr.mxu0 0.0
    %363 = vmatpush2.msra.mxu0 0.0
    %364 = vmatprep.subr.mxu0 0.0
    %365 = vmatpush2.msra.mxu0 0.0
    %366 = vmatprep.subr.mxu0 0.0
    %367 = vmatpush2.msra.mxu0 0.0
    %368 = vmatprep.subr.mxu0 0.0
    %369 = vmatpush2.msra.mxu0 0.0
    %370 = vmatprep.subr.mxu0 0.0
    %371 = vmatpush2.msra.mxu0 0.0
    %372 = vmatprep.subr.mxu0 0.0
    %373 = vmatpush2.msra.mxu0 0.0
    %374 = vmatprep.subr.mxu0 0.0
    %375 = vmatpush2.msra.mxu0 0.0
    %376 = vmatprep.mubr.f32.mxu0 0.0
    %377 = vmatmul.mubr.f32.gmra.mxu0 %v310
    %v378 = vpop.f32.mrf.mxu0
    %v379 = vadd.f32 %v306, %v378
    %v380 = vpop.f32.mrf.mxu0
    %381 = vdwg.mxu0
    %v382 = vld [vmem:[#allocation3] sm:$0xff]
    %v383 = vld [vmem:[#allocation3 + $0x8] sm:$0xff]
    %v384 = vld [vmem:[#allocation3 + $0x10] sm:$0xff]
    %v385 = vld [vmem:[#allocation3 + $0x18] sm:$0xff]
    %v388 = vunpack.c.l.s4 1966171168
    %v389 = vunpack.c.0.s8 %v388
    %v390 = vlaneseq
    %v391 = vshrl.u32 %v390, 7
    %v392 = vsub.s32 %v389, %v391
    %v393 = vrot.slane %v379, %v392
    %v394 = vcombine.high %v393, %v393
    %v396 = vunpack.c.l.s4 1966171168
    %v397 = vunpack.c.0.s8 %v396
    %v398 = vlaneseq
    %v399 = vshrl.u32 %v398, 7
    %v400 = vsub.s32 %v397, %v399
    %v401 = vrot.slane %v393, %v400
    %v403 = vunpack.c.l.s4 1966171168
    %v404 = vunpack.c.0.s8 %v403
    %v405 = vlaneseq
    %v406 = vshrl.u32 %v405, 7
    %v407 = vsub.s32 %v404, %v406
    %v408 = vrot.slane %v394, %v407
    %v409 = vlaneseq
    %v410 = vshrl.u32 %v409, 7
    %v411 = vsub.s32 0, %v410
    %v412 = vrot.slane %v401, %v411
    %v413 = vlaneseq
    %v414 = vshrl.u32 %v413, 7
    %v415 = vsub.s32 0, %v414
    %v416 = vrot.slane %v408, %v415
    %v419 = vadd.f32 %v382, %v412
    %v420 = vadd.f32 %v383, %v412
    %v421 = vadd.f32 %v384, %v416
    %v422 = vadd.f32 %v385, %v416
    %v423 = vld [vmem:[#allocation11] sm:$0x1]
    %v424 = vld [vmem:[#allocation12] sm:$0x1]
    %vm425 = vcmask 261120
    %v426 = vsel %vm425, %v419, 0.0
    %427 = vadd.xlane.f32.xlu0 %v426
    %v428 = vpop.xlane.xlu0 %427
    %v429 = vsel %vm425, %v420, 0.0
    %430 = vadd.xlane.f32.xlu0 %v429
    %v431 = vpop.xlane.xlu0 %430
    %v432 = vsel %vm425, %v421, 0.0
    %433 = vadd.xlane.f32.xlu0 %v432
    %v434 = vpop.xlane.xlu0 %433
    %v435 = vsel %vm425, %v422, 0.0
    %436 = vadd.xlane.f32.xlu0 %v435
    %v437 = vpop.xlane.xlu0 %436
    %v438 = vrcp.pop 32.0
    %v439 = vmul.f32 %v428, %v438
    %v440 = vmul.f32 %v431, %v438
    %v441 = vmul.f32 %v434, %v438
    %v442 = vmul.f32 %v437, %v438
    %v443 = vsub.f32 %v419, %v439
    %v444 = vsub.f32 %v420, %v440
    %v445 = vsub.f32 %v421, %v441
    %v446 = vsub.f32 %v422, %v442
    %v447 = vmul.f32 %v443, %v443
    %v448 = vmul.f32 %v444, %v444
    %v449 = vmul.f32 %v445, %v445
    %v450 = vmul.f32 %v446, %v446
    %v451 = vsel %vm425, %v447, 0.0
    %452 = vadd.xlane.f32.xlu0 %v451
    %v453 = vpop.xlane.xlu0 %452
    %v454 = vsel %vm425, %v448, 0.0
    %455 = vadd.xlane.f32.xlu0 %v454
    %v456 = vpop.xlane.xlu0 %455
    %v457 = vsel %vm425, %v449, 0.0
    %458 = vadd.xlane.f32.xlu0 %v457
    %v459 = vpop.xlane.xlu0 %458
    %v460 = vsel %vm425, %v450, 0.0
    %461 = vadd.xlane.f32.xlu0 %v460
    %v462 = vpop.xlane.xlu0 %461
    %v463 = vmul.f32 %v453, %v438
    %v464 = vmul.f32 %v456, %v438
    %v465 = vmul.f32 %v459, %v438
    %v466 = vmul.f32 %v462, %v438
    %v467 = vadd.f32 %v463, 1e-05
    %v468 = vadd.f32 %v464, 1e-05
    %v469 = vadd.f32 %v465, 1e-05
    %v470 = vadd.f32 %v466, 1e-05
    %v471 = vrsqrt.pop %v467
    %v472 = vrsqrt.pop %v468
    %v473 = vrsqrt.pop %v469
    %v474 = vrsqrt.pop %v470
    %v475 = vmul.f32 %v443, %v471
    %v476 = vmul.f32 %v444, %v472
    %v477 = vmul.f32 %v445, %v473
    %v478 = vmul.f32 %v446, %v474
    %v480 = vlaneseq
    %v481 = vshrl.u32 %v480, 7
    %v482 = vsub.s32 0, %v481
    %v483 = vrot.slane %v423, %v482
    %v485 = vmul.f32 %v475, %v483
    %v486 = vmul.f32 %v476, %v483
    %v487 = vmul.f32 %v477, %v483
    %v488 = vmul.f32 %v478, %v483
    %v490 = vlaneseq
    %v491 = vshrl.u32 %v490, 7
    %v492 = vsub.s32 0, %v491
    %v493 = vrot.slane %v424, %v492
    %v495 = vadd.f32 %v485, %v493
    %v496 = vadd.f32 %v486, %v493
    %v497 = vadd.f32 %v487, %v493
    %v498 = vadd.f32 %v488, %v493
    %v499 = vld [vmem:[%s6] sm:$0xff]
    %v500 = vld [vmem:[%s6 + $0x8] sm:$0xff]
    %v501 = vld [vmem:[%s6 + $0x10] sm:$0xff]
    %v502 = vld [vmem:[%s6 + $0x18] sm:$0xff]
    %v503 = vld [vmem:[#allocation14] sm:$0x1]
    %v505 = vlaneseq
    %v506 = vshrl.u32 %v505, 7
    %v507 = vsub.s32 0, %v506
    %v508 = vrot.slane %v503, %v507
    %v511 = vsel %vm425, %v495, 0
    %v514 = vsel %vm425, %v496, 0
    %v517 = vsel %vm425, %v497, 0
    %v520 = vsel %vm425, %v498, 0
    %522 = vmatprep.subr.mxu0 0.0
    %523 = vmatpush1.msra.mxu0 0.0
    %524 = vmatprep.subr.mxu0 0.0
    %525 = vmatpush1.msra.mxu0 0.0
    %526 = vmatprep.subr.mxu0 0.0
    %527 = vmatpush1.msra.mxu0 0.0
    %528 = vmatprep.subr.mxu0 0.0
    %529 = vmatpush1.msra.mxu0 0.0
    %530 = vmatprep.subr.mxu0 0.0
    %531 = vmatpush1.msra.mxu0 0.0
    %532 = vmatprep.subr.mxu0 0.0
    %533 = vmatpush1.msra.mxu0 0.0
    %534 = vmatprep.subr.mxu0 0.0
    %535 = vmatpush1.msra.mxu0 0.0
    %536 = vmatprep.subr.mxu0 0.0
    %537 = vmatpush1.msra.mxu0 0.0
    %538 = vmatprep.subr.mxu0 0.0
    %539 = vmatpush1.msra.mxu0 0.0
    %540 = vmatprep.subr.mxu0 0.0
    %541 = vmatpush1.msra.mxu0 0.0
    %542 = vmatprep.subr.mxu0 0.0
    %543 = vmatpush1.msra.mxu0 0.0
    %544 = vmatprep.subr.mxu0 0.0
    %545 = vmatpush1.msra.mxu0 0.0
    %546 = vmatprep.subr.mxu0 0.0
    %547 = vmatpush1.msra.mxu0 %v502
    %548 = vmatprep.subr.mxu0 0.0
    %549 = vmatpush1.msra.mxu0 %v501
    %550 = vmatprep.subr.mxu0 0.0
    %551 = vmatpush1.msra.mxu0 %v500
    %552 = vmatprep.subr.mxu0 0.0
    %553 = vmatpush1.msra.mxu0 %v499
    %554 = vmatprep.subr.mxu0 0.0
    %555 = vmatpush2.msra.mxu0 0.0
    %556 = vmatprep.subr.mxu0 0.0
    %557 = vmatpush2.msra.mxu0 0.0
    %558 = vmatprep.subr.mxu0 0.0
    %559 = vmatpush2.msra.mxu0 0.0
    %560 = vmatprep.subr.mxu0 0.0
    %561 = vmatpush2.msra.mxu0 0.0
    %562 = vmatprep.subr.mxu0 0.0
    %563 = vmatpush2.msra.mxu0 0.0
    %564 = vmatprep.subr.mxu0 0.0
    %565 = vmatpush2.msra.mxu0 0.0
    %566 = vmatprep.subr.mxu0 0.0
    %567 = vmatpush2.msra.mxu0 0.0
    %568 = vmatprep.subr.mxu0 0.0
    %569 = vmatpush2.msra.mxu0 0.0
    %570 = vmatprep.subr.mxu0 0.0
    %571 = vmatpush2.msra.mxu0 0.0
    %572 = vmatprep.subr.mxu0 0.0
    %573 = vmatpush2.msra.mxu0 0.0
    %574 = vmatprep.subr.mxu0 0.0
    %575 = vmatpush2.msra.mxu0 0.0
    %576 = vmatprep.subr.mxu0 0.0
    %577 = vmatpush2.msra.mxu0 0.0
    %578 = vmatprep.subr.mxu0 0.0
    %579 = vmatpush2.msra.mxu0 0.0
    %580 = vmatprep.subr.mxu0 0.0
    %581 = vmatpush2.msra.mxu0 0.0
    %582 = vmatprep.subr.mxu0 0.0
    %583 = vmatpush2.msra.mxu0 0.0
    %584 = vmatprep.subr.mxu0 0.0
    %585 = vmatpush2.msra.mxu0 0.0
    %586 = vmatprep.mubr.f32.mxu0 0.0
    %587 = vmatmul.mubr.f32.gmra.mxu0 %v511
    %v588 = vpop.f32.mrf.mxu0
    %v589 = vadd.f32 %v508, %v588
    %v590 = vpop.f32.mrf.mxu0
    %591 = vmatprep.mubr.f32.mxu0 0.0
    %592 = vmatmul.mubr.f32.gmra.mxu0 %v514
    %v593 = vpop.f32.mrf.mxu0
    %v594 = vadd.f32 %v508, %v593
    %v595 = vpop.f32.mrf.mxu0
    %596 = vmatprep.mubr.f32.mxu0 0.0
    %597 = vmatmul.mubr.f32.gmra.mxu0 %v517
    %v598 = vpop.f32.mrf.mxu0
    %v599 = vadd.f32 %v508, %v598
    %v600 = vpop.f32.mrf.mxu0
    %601 = vmatprep.mubr.f32.mxu0 0.0
    %602 = vmatmul.mubr.f32.gmra.mxu0 %v520
    %v603 = vpop.f32.mrf.mxu0
    %v604 = vadd.f32 %v508, %v603
    %v605 = vpop.f32.mrf.mxu0
    %606 = vdwg.mxu0
    %609 = vrot.lane.b32.xlu0 %v589, 96
    %v610 = vpop.permute.xlu0 %609
    %611 = vrot.lane.b32.xlu0 %v594, 96
    %v612 = vpop.permute.xlu0 %611
    %vm613 = vcmask 64512
    %v614 = vsel %vm613, %v589, 0
    %v616 = vsel %vm613, %v594, 0
    %v618 = vsel %vm613, %v610, 0
    %v620 = vsel %vm613, %v612, 0
    %622 = vmatprep.subr.mxu0 0.0
    %623 = vmatpush1.xpose.msra.mxu0 0.0
    %624 = vmatprep.subr.mxu0 0.0
    %625 = vmatpush1.xpose.msra.mxu0 0.0
    %626 = vmatprep.subr.mxu0 0.0
    %627 = vmatpush1.xpose.msra.mxu0 0.0
    %628 = vmatprep.subr.mxu0 0.0
    %629 = vmatpush1.xpose.msra.mxu0 0.0
    %630 = vmatprep.subr.mxu0 0.0
    %631 = vmatpush1.xpose.msra.mxu0 0.0
    %632 = vmatprep.subr.mxu0 0.0
    %633 = vmatpush1.xpose.msra.mxu0 0.0
    %634 = vmatprep.subr.mxu0 0.0
    %635 = vmatpush1.xpose.msra.mxu0 0.0
    %636 = vmatprep.subr.mxu0 0.0
    %637 = vmatpush1.xpose.msra.mxu0 0.0
    %638 = vmatprep.subr.mxu0 0.0
    %639 = vmatpush1.xpose.msra.mxu0 0.0
    %640 = vmatprep.subr.mxu0 0.0
    %641 = vmatpush1.xpose.msra.mxu0 0.0
    %642 = vmatprep.subr.mxu0 0.0
    %643 = vmatpush1.xpose.msra.mxu0 0.0
    %644 = vmatprep.subr.mxu0 0.0
    %645 = vmatpush1.xpose.msra.mxu0 0.0
    %646 = vmatprep.subr.mxu0 0.0
    %647 = vmatpush1.xpose.msra.mxu0 0.0
    %648 = vmatprep.subr.mxu0 0.0
    %649 = vmatpush1.xpose.msra.mxu0 0.0
    %650 = vmatprep.subr.mxu0 0.0
    %651 = vmatpush1.xpose.msra.mxu0 %v620
    %652 = vmatprep.subr.mxu0 0.0
    %653 = vmatpush1.xpose.msra.mxu0 %v618
    %654 = vmatprep.subr.mxu0 0.0
    %655 = vmatpush2.xpose.msra.mxu0 0.0
    %656 = vmatprep.subr.mxu0 0.0
    %657 = vmatpush2.xpose.msra.mxu0 0.0
    %658 = vmatprep.subr.mxu0 0.0
    %659 = vmatpush2.xpose.msra.mxu0 0.0
    %660 = vmatprep.subr.mxu0 0.0
    %661 = vmatpush2.xpose.msra.mxu0 0.0
    %662 = vmatprep.subr.mxu0 0.0
    %663 = vmatpush2.xpose.msra.mxu0 0.0
    %664 = vmatprep.subr.mxu0 0.0
    %665 = vmatpush2.xpose.msra.mxu0 0.0
    %666 = vmatprep.subr.mxu0 0.0
    %667 = vmatpush2.xpose.msra.mxu0 0.0
    %668 = vmatprep.subr.mxu0 0.0
    %669 = vmatpush2.xpose.msra.mxu0 0.0
    %670 = vmatprep.subr.mxu0 0.0
    %671 = vmatpush2.xpose.msra.mxu0 0.0
    %672 = vmatprep.subr.mxu0 0.0
    %673 = vmatpush2.xpose.msra.mxu0 0.0
    %674 = vmatprep.subr.mxu0 0.0
    %675 = vmatpush2.xpose.msra.mxu0 0.0
    %676 = vmatprep.subr.mxu0 0.0
    %677 = vmatpush2.xpose.msra.mxu0 0.0
    %678 = vmatprep.subr.mxu0 0.0
    %679 = vmatpush2.xpose.msra.mxu0 0.0
    %680 = vmatprep.subr.mxu0 0.0
    %681 = vmatpush2.xpose.msra.mxu0 0.0
    %682 = vmatprep.subr.mxu0 0.0
    %683 = vmatpush2.xpose.msra.mxu0 0.0
    %684 = vmatprep.subr.mxu0 0.0
    %685 = vmatpush2.xpose.msra.mxu0 0.0
    %686 = vmatprep.mubr.f32.mxu0 0.0
    %687 = vmatmul.mubr.f32.gmra.mxu0 %v614
    %v688 = vpop.f32.mrf.mxu0
    %v689 = vadd.f32 0.0, %v688
    %v690 = vpop.f32.mrf.mxu0
    %691 = vmatprep.mubr.f32.mxu0 0.0
    %692 = vmatmul.mubr.f32.gmra.mxu0 %v616
    %v693 = vpop.f32.mrf.mxu0
    %v694 = vadd.f32 0.0, %v693
    %v695 = vpop.f32.mrf.mxu0
    %696 = vdwg.mxu0
    %699 = vrot.lane.b32.xlu0 %v599, 96
    %v700 = vpop.permute.xlu0 %699
    %701 = vrot.lane.b32.xlu0 %v604, 96
    %v702 = vpop.permute.xlu0 %701
    %v703 = vsel %vm613, %v599, 0
    %v705 = vsel %vm613, %v604, 0
    %v707 = vsel %vm613, %v700, 0
    %v709 = vsel %vm613, %v702, 0
    %711 = vmatprep.subr.mxu0 0.0
    %712 = vmatpush1.xpose.msra.mxu0 0.0
    %713 = vmatprep.subr.mxu0 0.0
    %714 = vmatpush1.xpose.msra.mxu0 0.0
    %715 = vmatprep.subr.mxu0 0.0
    %716 = vmatpush1.xpose.msra.mxu0 0.0
    %717 = vmatprep.subr.mxu0 0.0
    %718 = vmatpush1.xpose.msra.mxu0 0.0
    %719 = vmatprep.subr.mxu0 0.0
    %720 = vmatpush1.xpose.msra.mxu0 0.0
    %721 = vmatprep.subr.mxu0 0.0
    %722 = vmatpush1.xpose.msra.mxu0 0.0
    %723 = vmatprep.subr.mxu0 0.0
    %724 = vmatpush1.xpose.msra.mxu0 0.0
    %725 = vmatprep.subr.mxu0 0.0
    %726 = vmatpush1.xpose.msra.mxu0 0.0
    %727 = vmatprep.subr.mxu0 0.0
    %728 = vmatpush1.xpose.msra.mxu0 0.0
    %729 = vmatprep.subr.mxu0 0.0
    %730 = vmatpush1.xpose.msra.mxu0 0.0
    %731 = vmatprep.subr.mxu0 0.0
    %732 = vmatpush1.xpose.msra.mxu0 0.0
    %733 = vmatprep.subr.mxu0 0.0
    %734 = vmatpush1.xpose.msra.mxu0 0.0
    %735 = vmatprep.subr.mxu0 0.0
    %736 = vmatpush1.xpose.msra.mxu0 0.0
    %737 = vmatprep.subr.mxu0 0.0
    %738 = vmatpush1.xpose.msra.mxu0 0.0
    %739 = vmatprep.subr.mxu0 0.0
    %740 = vmatpush1.xpose.msra.mxu0 %v709
    %741 = vmatprep.subr.mxu0 0.0
    %742 = vmatpush1.xpose.msra.mxu0 %v707
    %743 = vmatprep.subr.mxu0 0.0
    %744 = vmatpush2.xpose.msra.mxu0 0.0
    %745 = vmatprep.subr.mxu0 0.0
    %746 = vmatpush2.xpose.msra.mxu0 0.0
    %747 = vmatprep.subr.mxu0 0.0
    %748 = vmatpush2.xpose.msra.mxu0 0.0
    %749 = vmatprep.subr.mxu0 0.0
    %750 = vmatpush2.xpose.msra.mxu0 0.0
    %751 = vmatprep.subr.mxu0 0.0
    %752 = vmatpush2.xpose.msra.mxu0 0.0
    %753 = vmatprep.subr.mxu0 0.0
    %754 = vmatpush2.xpose.msra.mxu0 0.0
    %755 = vmatprep.subr.mxu0 0.0
    %756 = vmatpush2.xpose.msra.mxu0 0.0
    %757 = vmatprep.subr.mxu0 0.0
    %758 = vmatpush2.xpose.msra.mxu0 0.0
    %759 = vmatprep.subr.mxu0 0.0
    %760 = vmatpush2.xpose.msra.mxu0 0.0
    %761 = vmatprep.subr.mxu0 0.0
    %762 = vmatpush2.xpose.msra.mxu0 0.0
    %763 = vmatprep.subr.mxu0 0.0
    %764 = vmatpush2.xpose.msra.mxu0 0.0
    %765 = vmatprep.subr.mxu0 0.0
    %766 = vmatpush2.xpose.msra.mxu0 0.0
    %767 = vmatprep.subr.mxu0 0.0
    %768 = vmatpush2.xpose.msra.mxu0 0.0
    %769 = vmatprep.subr.mxu0 0.0
    %770 = vmatpush2.xpose.msra.mxu0 0.0
    %771 = vmatprep.subr.mxu0 0.0
    %772 = vmatpush2.xpose.msra.mxu0 0.0
    %773 = vmatprep.subr.mxu0 0.0
    %774 = vmatpush2.xpose.msra.mxu0 0.0
    %775 = vmatprep.mubr.f32.mxu0 0.0
    %776 = vmatmul.mubr.f32.gmra.mxu0 %v703
    %v777 = vpop.f32.mrf.mxu0
    %v778 = vadd.f32 0.0, %v777
    %v779 = vpop.f32.mrf.mxu0
    %780 = vmatprep.mubr.f32.mxu0 0.0
    %781 = vmatmul.mubr.f32.gmra.mxu0 %v705
    %v782 = vpop.f32.mrf.mxu0
    %v783 = vadd.f32 0.0, %v782
    %v784 = vpop.f32.mrf.mxu0
    %785 = vdwg.mxu0
    %v786 = vmul.f32 %v689, 0.35355338
    %v787 = vmul.f32 %v694, 0.35355338
    %v788 = vmul.f32 %v778, 0.35355338
    %v789 = vmul.f32 %v783, 0.35355338
    %v790 = vsel %vm308, %v786, -inf
    %791 = vmax.xlane.f32.xlu0 %v790
    %v792 = vpop.xlane.xlu0 %791
    %v793 = vsel %vm308, %v787, -inf
    %794 = vmax.xlane.f32.xlu0 %v793
    %v795 = vpop.xlane.xlu0 %794
    %v796 = vsel %vm308, %v788, -inf
    %797 = vmax.xlane.f32.xlu0 %v796
    %v798 = vpop.xlane.xlu0 %797
    %v799 = vsel %vm308, %v789, -inf
    %800 = vmax.xlane.f32.xlu0 %v799
    %v801 = vpop.xlane.xlu0 %800
    %v802 = vsub.f32 %v786, %v792
    %v803 = vsub.f32 %v787, %v795
    %v804 = vsub.f32 %v788, %v798
    %v805 = vsub.f32 %v789, %v801
    %v806 = vmul.f32 %v802, 1.442695
    %v807 = vpow.pop %v806
    %v808 = vmul.f32 %v803, 1.442695
    %v809 = vpow.pop %v808
    %v810 = vmul.f32 %v804, 1.442695
    %v811 = vpow.pop %v810
    %v812 = vmul.f32 %v805, 1.442695
    %v813 = vpow.pop %v812
    %v814 = vsel %vm308, %v807, 0.0
    %815 = vadd.xlane.f32.xlu0 %v814
    %v816 = vpop.xlane.xlu0 %815
    %v817 = vsel %vm308, %v809, 0.0
    %818 = vadd.xlane.f32.xlu0 %v817
    %v819 = vpop.xlane.xlu0 %818
    %v820 = vsel %vm308, %v811, 0.0
    %821 = vadd.xlane.f32.xlu0 %v820
    %v822 = vpop.xlane.xlu0 %821
    %v823 = vsel %vm308, %v813, 0.0
    %824 = vadd.xlane.f32.xlu0 %v823
    %v825 = vpop.xlane.xlu0 %824
    %v826 = vrcp.pop %v816
    %v827 = vmul.f32 %v807, %v826
    %v828 = vrcp.pop %v819
    %v829 = vmul.f32 %v809, %v828
    %v830 = vrcp.pop %v822
    %v831 = vmul.f32 %v811, %v830
    %v832 = vrcp.pop %v825
    %v833 = vmul.f32 %v813, %v832
    %834 = vrot.lane.b32.xlu0 %v589, 64
    %v835 = vpop.permute.xlu0 %834
    %836 = vrot.lane.b32.xlu0 %v594, 64
    %v837 = vpop.permute.xlu0 %836
    %v841 = vsel %vm308, %v827, 0
    %v844 = vsel %vm308, %v829, 0
    %846 = vmatprep.subr.mxu0 0.0
    %847 = vmatpush1.msra.mxu0 0.0
    %848 = vmatprep.subr.mxu0 0.0
    %849 = vmatpush1.msra.mxu0 0.0
    %850 = vmatprep.subr.mxu0 0.0
    %851 = vmatpush1.msra.mxu0 0.0
    %852 = vmatprep.subr.mxu0 0.0
    %853 = vmatpush1.msra.mxu0 0.0
    %854 = vmatprep.subr.mxu0 0.0
    %855 = vmatpush1.msra.mxu0 0.0
    %856 = vmatprep.subr.mxu0 0.0
    %857 = vmatpush1.msra.mxu0 0.0
    %858 = vmatprep.subr.mxu0 0.0
    %859 = vmatpush1.msra.mxu0 0.0
    %860 = vmatprep.subr.mxu0 0.0
    %861 = vmatpush1.msra.mxu0 0.0
    %862 = vmatprep.subr.mxu0 0.0
    %863 = vmatpush1.msra.mxu0 0.0
    %864 = vmatprep.subr.mxu0 0.0
    %865 = vmatpush1.msra.mxu0 0.0
    %866 = vmatprep.subr.mxu0 0.0
    %867 = vmatpush1.msra.mxu0 0.0
    %868 = vmatprep.subr.mxu0 0.0
    %869 = vmatpush1.msra.mxu0 0.0
    %870 = vmatprep.subr.mxu0 0.0
    %871 = vmatpush1.msra.mxu0 0.0
    %872 = vmatprep.subr.mxu0 0.0
    %873 = vmatpush1.msra.mxu0 0.0
    %874 = vmatprep.subr.mxu0 0.0
    %875 = vmatpush1.msra.mxu0 %v837
    %876 = vmatprep.subr.mxu0 0.0
    %877 = vmatpush1.msra.mxu0 %v835
    %878 = vmatprep.subr.mxu0 0.0
    %879 = vmatpush2.msra.mxu0 0.0
    %880 = vmatprep.subr.mxu0 0.0
    %881 = vmatpush2.msra.mxu0 0.0
    %882 = vmatprep.subr.mxu0 0.0
    %883 = vmatpush2.msra.mxu0 0.0
    %884 = vmatprep.subr.mxu0 0.0
    %885 = vmatpush2.msra.mxu0 0.0
    %886 = vmatprep.subr.mxu0 0.0
    %887 = vmatpush2.msra.mxu0 0.0
    %888 = vmatprep.subr.mxu0 0.0
    %889 = vmatpush2.msra.mxu0 0.0
    %890 = vmatprep.subr.mxu0 0.0
    %891 = vmatpush2.msra.mxu0 0.0
    %892 = vmatprep.subr.mxu0 0.0
    %893 = vmatpush2.msra.mxu0 0.0
    %894 = vmatprep.subr.mxu0 0.0
    %895 = vmatpush2.msra.mxu0 0.0
    %896 = vmatprep.subr.mxu0 0.0
    %897 = vmatpush2.msra.mxu0 0.0
    %898 = vmatprep.subr.mxu0 0.0
    %899 = vmatpush2.msra.mxu0 0.0
    %900 = vmatprep.subr.mxu0 0.0
    %901 = vmatpush2.msra.mxu0 0.0
    %902 = vmatprep.subr.mxu0 0.0
    %903 = vmatpush2.msra.mxu0 0.0
    %904 = vmatprep.subr.mxu0 0.0
    %905 = vmatpush2.msra.mxu0 0.0
    %906 = vmatprep.subr.mxu0 0.0
    %907 = vmatpush2.msra.mxu0 0.0
    %908 = vmatprep.subr.mxu0 0.0
    %909 = vmatpush2.msra.mxu0 0.0
    %910 = vmatprep.mubr.f32.mxu0 0.0
    %911 = vmatmul.mubr.f32.gmra.mxu0 %v841
    %v912 = vpop.f32.mrf.mxu0
    %v913 = vadd.f32 0.0, %v912
    %v914 = vpop.f32.mrf.mxu0
    %915 = vmatprep.mubr.f32.mxu0 0.0
    %916 = vmatmul.mubr.f32.gmra.mxu0 %v844
    %v917 = vpop.f32.mrf.mxu0
    %v918 = vadd.f32 0.0, %v917
    %v919 = vpop.f32.mrf.mxu0
    %920 = vdwg.mxu0
    %921 = vrot.lane.b32.xlu0 %v599, 64
    %v922 = vpop.permute.xlu0 %921
    %923 = vrot.lane.b32.xlu0 %v604, 64
    %v924 = vpop.permute.xlu0 %923
    %v928 = vsel %vm308, %v831, 0
    %v931 = vsel %vm308, %v833, 0
    %933 = vmatprep.subr.mxu0 0.0
    %934 = vmatpush1.msra.mxu0 0.0
    %935 = vmatprep.subr.mxu0 0.0
    %936 = vmatpush1.msra.mxu0 0.0
    %937 = vmatprep.subr.mxu0 0.0
    %938 = vmatpush1.msra.mxu0 0.0
    %939 = vmatprep.subr.mxu0 0.0
    %940 = vmatpush1.msra.mxu0 0.0
    %941 = vmatprep.subr.mxu0 0.0
    %942 = vmatpush1.msra.mxu0 0.0
    %943 = vmatprep.subr.mxu0 0.0
    %944 = vmatpush1.msra.mxu0 0.0
    %945 = vmatprep.subr.mxu0 0.0
    %946 = vmatpush1.msra.mxu0 0.0
    %947 = vmatprep.subr.mxu0 0.0
    %948 = vmatpush1.msra.mxu0 0.0
    %949 = vmatprep.subr.mxu0 0.0
    %950 = vmatpush1.msra.mxu0 0.0
    %951 = vmatprep.subr.mxu0 0.0
    %952 = vmatpush1.msra.mxu0 0.0
    %953 = vmatprep.subr.mxu0 0.0
    %954 = vmatpush1.msra.mxu0 0.0
    %955 = vmatprep.subr.mxu0 0.0
    %956 = vmatpush1.msra.mxu0 0.0
    %957 = vmatprep.subr.mxu0 0.0
    %958 = vmatpush1.msra.mxu0 0.0
    %959 = vmatprep.subr.mxu0 0.0
    %960 = vmatpush1.msra.mxu0 0.0
    %961 = vmatprep.subr.mxu0 0.0
    %962 = vmatpush1.msra.mxu0 %v924
    %963 = vmatprep.subr.mxu0 0.0
    %964 = vmatpush1.msra.mxu0 %v922
    %965 = vmatprep.subr.mxu0 0.0
    %966 = vmatpush2.msra.mxu0 0.0
    %967 = vmatprep.subr.mxu0 0.0
    %968 = vmatpush2.msra.mxu0 0.0
    %969 = vmatprep.subr.mxu0 0.0
    %970 = vmatpush2.msra.mxu0 0.0
    %971 = vmatprep.subr.mxu0 0.0
    %972 = vmatpush2.msra.mxu0 0.0
    %973 = vmatprep.subr.mxu0 0.0
    %974 = vmatpush2.msra.mxu0 0.0
    %975 = vmatprep.subr.mxu0 0.0
    %976 = vmatpush2.msra.mxu0 0.0
    %977 = vmatprep.subr.mxu0 0.0
    %978 = vmatpush2.msra.mxu0 0.0
    %979 = vmatprep.subr.mxu0 0.0
    %980 = vmatpush2.msra.mxu0 0.0
    %981 = vmatprep.subr.mxu0 0.0
    %982 = vmatpush2.msra.mxu0 0.0
    %983 = vmatprep.subr.mxu0 0.0
    %984 = vmatpush2.msra.mxu0 0.0
    %985 = vmatprep.subr.mxu0 0.0
    %986 = vmatpush2.msra.mxu0 0.0
    %987 = vmatprep.subr.mxu0 0.0
    %988 = vmatpush2.msra.mxu0 0.0
    %989 = vmatprep.subr.mxu0 0.0
    %990 = vmatpush2.msra.mxu0 0.0
    %991 = vmatprep.subr.mxu0 0.0
    %992 = vmatpush2.msra.mxu0 0.0
    %993 = vmatprep.subr.mxu0 0.0
    %994 = vmatpush2.msra.mxu0 0.0
    %995 = vmatprep.subr.mxu0 0.0
    %996 = vmatpush2.msra.mxu0 0.0
    %997 = vmatprep.mubr.f32.mxu0 0.0
    %998 = vmatmul.mubr.f32.gmra.mxu0 %v928
    %v999 = vpop.f32.mrf.mxu0
    %v1000 = vadd.f32 0.0, %v999
    %v1001 = vpop.f32.mrf.mxu0
    %1002 = vmatprep.mubr.f32.mxu0 0.0
    %1003 = vmatmul.mubr.f32.gmra.mxu0 %v931
    %v1004 = vpop.f32.mrf.mxu0
    %v1005 = vadd.f32 0.0, %v1004
    %v1006 = vpop.f32.mrf.mxu0
    %1007 = vdwg.mxu0
    %1008 = vst.msk [vmem:[#allocation2] sm:$0xff] %vm613, %v913
    %1009 = vst.msk [vmem:[#allocation2 + $0x8] sm:$0xff] %vm613, %v918
    %1010 = vst.msk [vmem:[#allocation2 + $0x10] sm:$0xff] %vm613, %v1000
    %1011 = vst.msk [vmem:[#allocation2 + $0x18] sm:$0xff] %vm613, %v1005
    %1012 = vrot.lane.b32.xlu0 %v589, 120
    %v1013 = vpop.permute.xlu0 %1012
    %1014 = vrot.lane.b32.xlu0 %v594, 120
    %v1015 = vpop.permute.xlu0 %1014
    %1016 = vrot.lane.b32.xlu0 %v589, 88
    %v1017 = vpop.permute.xlu0 %1016
    %1018 = vrot.lane.b32.xlu0 %v594, 88
    %v1019 = vpop.permute.xlu0 %1018
    %v1020 = vsel %vm613, %v1013, 0
    %v1022 = vsel %vm613, %v1015, 0
    %v1024 = vsel %vm613, %v1017, 0
    %v1026 = vsel %vm613, %v1019, 0
    %1028 = vmatprep.subr.mxu0 0.0
    %1029 = vmatpush1.xpose.msra.mxu0 0.0
    %1030 = vmatprep.subr.mxu0 0.0
    %1031 = vmatpush1.xpose.msra.mxu0 0.0
    %1032 = vmatprep.subr.mxu0 0.0
    %1033 = vmatpush1.xpose.msra.mxu0 0.0
    %1034 = vmatprep.subr.mxu0 0.0
    %1035 = vmatpush1.xpose.msra.mxu0 0.0
    %1036 = vmatprep.subr.mxu0 0.0
    %1037 = vmatpush1.xpose.msra.mxu0 0.0
    %1038 = vmatprep.subr.mxu0 0.0
    %1039 = vmatpush1.xpose.msra.mxu0 0.0
    %1040 = vmatprep.subr.mxu0 0.0
    %1041 = vmatpush1.xpose.msra.mxu0 0.0
    %1042 = vmatprep.subr.mxu0 0.0
    %1043 = vmatpush1.xpose.msra.mxu0 0.0
    %1044 = vmatprep.subr.mxu0 0.0
    %1045 = vmatpush1.xpose.msra.mxu0 0.0
    %1046 = vmatprep.subr.mxu0 0.0
    %1047 = vmatpush1.xpose.msra.mxu0 0.0
    %1048 = vmatprep.subr.mxu0 0.0
    %1049 = vmatpush1.xpose.msra.mxu0 0.0
    %1050 = vmatprep.subr.mxu0 0.0
    %1051 = vmatpush1.xpose.msra.mxu0 0.0
    %1052 = vmatprep.subr.mxu0 0.0
    %1053 = vmatpush1.xpose.msra.mxu0 0.0
    %1054 = vmatprep.subr.mxu0 0.0
    %1055 = vmatpush1.xpose.msra.mxu0 0.0
    %1056 = vmatprep.subr.mxu0 0.0
    %1057 = vmatpush1.xpose.msra.mxu0 %v1026
    %1058 = vmatprep.subr.mxu0 0.0
    %1059 = vmatpush1.xpose.msra.mxu0 %v1024
    %1060 = vmatprep.subr.mxu0 0.0
    %1061 = vmatpush2.xpose.msra.mxu0 0.0
    %1062 = vmatprep.subr.mxu0 0.0
    %1063 = vmatpush2.xpose.msra.mxu0 0.0
    %1064 = vmatprep.subr.mxu0 0.0
    %1065 = vmatpush2.xpose.msra.mxu0 0.0
    %1066 = vmatprep.subr.mxu0 0.0
    %1067 = vmatpush2.xpose.msra.mxu0 0.0
    %1068 = vmatprep.subr.mxu0 0.0
    %1069 = vmatpush2.xpose.msra.mxu0 0.0
    %1070 = vmatprep.subr.mxu0 0.0
    %1071 = vmatpush2.xpose.msra.mxu0 0.0
    %1072 = vmatprep.subr.mxu0 0.0
    %1073 = vmatpush2.xpose.msra.mxu0 0.0
    %1074 = vmatprep.subr.mxu0 0.0
    %1075 = vmatpush2.xpose.msra.mxu0 0.0
    %1076 = vmatprep.subr.mxu0 0.0
    %1077 = vmatpush2.xpose.msra.mxu0 0.0
    %1078 = vmatprep.subr.mxu0 0.0
    %1079 = vmatpush2.xpose.msra.mxu0 0.0
    %1080 = vmatprep.subr.mxu0 0.0
    %1081 = vmatpush2.xpose.msra.mxu0 0.0
    %1082 = vmatprep.subr.mxu0 0.0
    %1083 = vmatpush2.xpose.msra.mxu0 0.0
    %1084 = vmatprep.subr.mxu0 0.0
    %1085 = vmatpush2.xpose.msra.mxu0 0.0
    %1086 = vmatprep.subr.mxu0 0.0
    %1087 = vmatpush2.xpose.msra.mxu0 0.0
    %1088 = vmatprep.subr.mxu0 0.0
    %1089 = vmatpush2.xpose.msra.mxu0 0.0
    %1090 = vmatprep.subr.mxu0 0.0
    %1091 = vmatpush2.xpose.msra.mxu0 0.0
    %1092 = vmatprep.mubr.f32.mxu0 0.0
    %1093 = vmatmul.mubr.f32.gmra.mxu0 %v1020
    %v1094 = vpop.f32.mrf.mxu0
    %v1095 = vadd.f32 0.0, %v1094
    %v1096 = vpop.f32.mrf.mxu0
    %1097 = vmatprep.mubr.f32.mxu0 0.0
    %1098 = vmatmul.mubr.f32.gmra.mxu0 %v1022
    %v1099 = vpop.f32.mrf.mxu0
    %v1100 = vadd.f32 0.0, %v1099
    %v1101 = vpop.f32.mrf.mxu0
    %1102 = vdwg.mxu0
    %1103 = vrot.lane.b32.xlu0 %v599, 120
    %v1104 = vpop.permute.xlu0 %1103
    %1105 = vrot.lane.b32.xlu0 %v604, 120
    %v1106 = vpop.permute.xlu0 %1105
    %1107 = vrot.lane.b32.xlu0 %v599, 88
    %v1108 = vpop.permute.xlu0 %1107
    %1109 = vrot.lane.b32.xlu0 %v604, 88
    %v1110 = vpop.permute.xlu0 %1109
    %v1111 = vsel %vm613, %v1104, 0
    %v1113 = vsel %vm613, %v1106, 0
    %v1115 = vsel %vm613, %v1108, 0
    %v1117 = vsel %vm613, %v1110, 0
    %1119 = vmatprep.subr.mxu0 0.0
    %1120 = vmatpush1.xpose.msra.mxu0 0.0
    %1121 = vmatprep.subr.mxu0 0.0
    %1122 = vmatpush1.xpose.msra.mxu0 0.0
    %1123 = vmatprep.subr.mxu0 0.0
    %1124 = vmatpush1.xpose.msra.mxu0 0.0
    %1125 = vmatprep.subr.mxu0 0.0
    %1126 = vmatpush1.xpose.msra.mxu0 0.0
    %1127 = vmatprep.subr.mxu0 0.0
    %1128 = vmatpush1.xpose.msra.mxu0 0.0
    %1129 = vmatprep.subr.mxu0 0.0
    %1130 = vmatpush1.xpose.msra.mxu0 0.0
    %1131 = vmatprep.subr.mxu0 0.0
    %1132 = vmatpush1.xpose.msra.mxu0 0.0
    %1133 = vmatprep.subr.mxu0 0.0
    %1134 = vmatpush1.xpose.msra.mxu0 0.0
    %1135 = vmatprep.subr.mxu0 0.0
    %1136 = vmatpush1.xpose.msra.mxu0 0.0
    %1137 = vmatprep.subr.mxu0 0.0
    %1138 = vmatpush1.xpose.msra.mxu0 0.0
    %1139 = vmatprep.subr.mxu0 0.0
    %1140 = vmatpush1.xpose.msra.mxu0 0.0
    %1141 = vmatprep.subr.mxu0 0.0
    %1142 = vmatpush1.xpose.msra.mxu0 0.0
    %1143 = vmatprep.subr.mxu0 0.0
    %1144 = vmatpush1.xpose.msra.mxu0 0.0
    %1145 = vmatprep.subr.mxu0 0.0
    %1146 = vmatpush1.xpose.msra.mxu0 0.0
    %1147 = vmatprep.subr.mxu0 0.0
    %1148 = vmatpush1.xpose.msra.mxu0 %v1117
    %1149 = vmatprep.subr.mxu0 0.0
    %1150 = vmatpush1.xpose.msra.mxu0 %v1115
    %1151 = vmatprep.subr.mxu0 0.0
    %1152 = vmatpush2.xpose.msra.mxu0 0.0
    %1153 = vmatprep.subr.mxu0 0.0
    %1154 = vmatpush2.xpose.msra.mxu0 0.0
    %1155 = vmatprep.subr.mxu0 0.0
    %1156 = vmatpush2.xpose.msra.mxu0 0.0
    %1157 = vmatprep.subr.mxu0 0.0
    %1158 = vmatpush2.xpose.msra.mxu0 0.0
    %1159 = vmatprep.subr.mxu0 0.0
    %1160 = vmatpush2.xpose.msra.mxu0 0.0
    %1161 = vmatprep.subr.mxu0 0.0
    %1162 = vmatpush2.xpose.msra.mxu0 0.0
    %1163 = vmatprep.subr.mxu0 0.0
    %1164 = vmatpush2.xpose.msra.mxu0 0.0
    %1165 = vmatprep.subr.mxu0 0.0
    %1166 = vmatpush2.xpose.msra.mxu0 0.0
    %1167 = vmatprep.subr.mxu0 0.0
    %1168 = vmatpush2.xpose.msra.mxu0 0.0
    %1169 = vmatprep.subr.mxu0 0.0
    %1170 = vmatpush2.xpose.msra.mxu0 0.0
    %1171 = vmatprep.subr.mxu0 0.0
    %1172 = vmatpush2.xpose.msra.mxu0 0.0
    %1173 = vmatprep.subr.mxu0 0.0
    %1174 = vmatpush2.xpose.msra.mxu0 0.0
    %1175 = vmatprep.subr.mxu0 0.0
    %1176 = vmatpush2.xpose.msra.mxu0 0.0
    %1177 = vmatprep.subr.mxu0 0.0
    %1178 = vmatpush2.xpose.msra.mxu0 0.0
    %1179 = vmatprep.subr.mxu0 0.0
    %1180 = vmatpush2.xpose.msra.mxu0 0.0
    %1181 = vmatprep.subr.mxu0 0.0
    %1182 = vmatpush2.xpose.msra.mxu0 0.0
    %1183 = vmatprep.mubr.f32.mxu0 0.0
    %1184 = vmatmul.mubr.f32.gmra.mxu0 %v1111
    %v1185 = vpop.f32.mrf.mxu0
    %v1186 = vadd.f32 0.0, %v1185
    %v1187 = vpop.f32.mrf.mxu0
    %1188 = vmatprep.mubr.f32.mxu0 0.0
    %1189 = vmatmul.mubr.f32.gmra.mxu0 %v1113
    %v1190 = vpop.f32.mrf.mxu0
    %v1191 = vadd.f32 0.0, %v1190
    %v1192 = vpop.f32.mrf.mxu0
    %1193 = vdwg.mxu0
    %v1194 = vmul.f32 %v1095, 0.35355338
    %v1195 = vmul.f32 %v1100, 0.35355338
    %v1196 = vmul.f32 %v1186, 0.35355338
    %v1197 = vmul.f32 %v1191, 0.35355338
    %v1198 = vsel %vm308, %v1194, -inf
    %1199 = vmax.xlane.f32.xlu0 %v1198
    %v1200 = vpop.xlane.xlu0 %1199
    %v1201 = vsel %vm308, %v1195, -inf
    %1202 = vmax.xlane.f32.xlu0 %v1201
    %v1203 = vpop.xlane.xlu0 %1202
    %v1204 = vsel %vm308, %v1196, -inf
    %1205 = vmax.xlane.f32.xlu0 %v1204
    %v1206 = vpop.xlane.xlu0 %1205
    %v1207 = vsel %vm308, %v1197, -inf
    %1208 = vmax.xlane.f32.xlu0 %v1207
    %v1209 = vpop.xlane.xlu0 %1208
    %v1210 = vsub.f32 %v1194, %v1200
    %v1211 = vsub.f32 %v1195, %v1203
    %v1212 = vsub.f32 %v1196, %v1206
    %v1213 = vsub.f32 %v1197, %v1209
    %v1214 = vmul.f32 %v1210, 1.442695
    %v1215 = vpow.pop %v1214
    %v1216 = vmul.f32 %v1211, 1.442695
    %v1217 = vpow.pop %v1216
    %v1218 = vmul.f32 %v1212, 1.442695
    %v1219 = vpow.pop %v1218
    %v1220 = vmul.f32 %v1213, 1.442695
    %v1221 = vpow.pop %v1220
    %v1222 = vsel %vm308, %v1215, 0.0
    %1223 = vadd.xlane.f32.xlu0 %v1222
    %v1224 = vpop.xlane.xlu0 %1223
    %v1225 = vsel %vm308, %v1217, 0.0
    %1226 = vadd.xlane.f32.xlu0 %v1225
    %v1227 = vpop.xlane.xlu0 %1226
    %v1228 = vsel %vm308, %v1219, 0.0
    %1229 = vadd.xlane.f32.xlu0 %v1228
    %v1230 = vpop.xlane.xlu0 %1229
    %v1231 = vsel %vm308, %v1221, 0.0
    %1232 = vadd.xlane.f32.xlu0 %v1231
    %v1233 = vpop.xlane.xlu0 %1232
    %v1234 = vrcp.pop %v1224
    %v1235 = vmul.f32 %v1215, %v1234
    %v1236 = vrcp.pop %v1227
    %v1237 = vmul.f32 %v1217, %v1236
    %v1238 = vrcp.pop %v1230
    %v1239 = vmul.f32 %v1219, %v1238
    %v1240 = vrcp.pop %v1233
    %v1241 = vmul.f32 %v1221, %v1240
    %1242 = vrot.lane.b32.xlu0 %v589, 56
    %v1243 = vpop.permute.xlu0 %1242
    %1244 = vrot.lane.b32.xlu0 %v594, 56
    %v1245 = vpop.permute.xlu0 %1244
    %v1249 = vsel %vm308, %v1235, 0
    %v1252 = vsel %vm308, %v1237, 0
    %1254 = vmatprep.subr.mxu0 0.0
    %1255 = vmatpush1.msra.mxu0 0.0
    %1256 = vmatprep.subr.mxu0 0.0
    %1257 = vmatpush1.msra.mxu0 0.0
    %1258 = vmatprep.subr.mxu0 0.0
    %1259 = vmatpush1.msra.mxu0 0.0
    %1260 = vmatprep.subr.mxu0 0.0
    %1261 = vmatpush1.msra.mxu0 0.0
    %1262 = vmatprep.subr.mxu0 0.0
    %1263 = vmatpush1.msra.mxu0 0.0
    %1264 = vmatprep.subr.mxu0 0.0
    %1265 = vmatpush1.msra.mxu0 0.0
    %1266 = vmatprep.subr.mxu0 0.0
    %1267 = vmatpush1.msra.mxu0 0.0
    %1268 = vmatprep.subr.mxu0 0.0
    %1269 = vmatpush1.msra.mxu0 0.0
    %1270 = vmatprep.subr.mxu0 0.0
    %1271 = vmatpush1.msra.mxu0 0.0
    %1272 = vmatprep.subr.mxu0 0.0
    %1273 = vmatpush1.msra.mxu0 0.0
    %1274 = vmatprep.subr.mxu0 0.0
    %1275 = vmatpush1.msra.mxu0 0.0
    %1276 = vmatprep.subr.mxu0 0.0
    %1277 = vmatpush1.msra.mxu0 0.0
    %1278 = vmatprep.subr.mxu0 0.0
    %1279 = vmatpush1.msra.mxu0 0.0
    %1280 = vmatprep.subr.mxu0 0.0
    %1281 = vmatpush1.msra.mxu0 0.0
    %1282 = vmatprep.subr.mxu0 0.0
    %1283 = vmatpush1.msra.mxu0 %v1245
    %1284 = vmatprep.subr.mxu0 0.0
    %1285 = vmatpush1.msra.mxu0 %v1243
    %1286 = vmatprep.subr.mxu0 0.0
    %1287 = vmatpush2.msra.mxu0 0.0
    %1288 = vmatprep.subr.mxu0 0.0
    %1289 = vmatpush2.msra.mxu0 0.0
    %1290 = vmatprep.subr.mxu0 0.0
    %1291 = vmatpush2.msra.mxu0 0.0
    %1292 = vmatprep.subr.mxu0 0.0
    %1293 = vmatpush2.msra.mxu0 0.0
    %1294 = vmatprep.subr.mxu0 0.0
    %1295 = vmatpush2.msra.mxu0 0.0
    %1296 = vmatprep.subr.mxu0 0.0
    %1297 = vmatpush2.msra.mxu0 0.0
    %1298 = vmatprep.subr.mxu0 0.0
    %1299 = vmatpush2.msra.mxu0 0.0
    %1300 = vmatprep.subr.mxu0 0.0
    %1301 = vmatpush2.msra.mxu0 0.0
    %1302 = vmatprep.subr.mxu0 0.0
    %1303 = vmatpush2.msra.mxu0 0.0
    %1304 = vmatprep.subr.mxu0 0.0
    %1305 = vmatpush2.msra.mxu0 0.0
    %1306 = vmatprep.subr.mxu0 0.0
    %1307 = vmatpush2.msra.mxu0 0.0
    %1308 = vmatprep.subr.mxu0 0.0
    %1309 = vmatpush2.msra.mxu0 0.0
    %1310 = vmatprep.subr.mxu0 0.0
    %1311 = vmatpush2.msra.mxu0 0.0
    %1312 = vmatprep.subr.mxu0 0.0
    %1313 = vmatpush2.msra.mxu0 0.0
    %1314 = vmatprep.subr.mxu0 0.0
    %1315 = vmatpush2.msra.mxu0 0.0
    %1316 = vmatprep.subr.mxu0 0.0
    %1317 = vmatpush2.msra.mxu0 0.0
    %1318 = vmatprep.mubr.f32.mxu0 0.0
    %1319 = vmatmul.mubr.f32.gmra.mxu0 %v1249
    %v1320 = vpop.f32.mrf.mxu0
    %v1321 = vadd.f32 0.0, %v1320
    %v1322 = vpop.f32.mrf.mxu0
    %1323 = vmatprep.mubr.f32.mxu0 0.0
    %1324 = vmatmul.mubr.f32.gmra.mxu0 %v1252
    %v1325 = vpop.f32.mrf.mxu0
    %v1326 = vadd.f32 0.0, %v1325
    %v1327 = vpop.f32.mrf.mxu0
    %1328 = vdwg.mxu0
    %1329 = vrot.lane.b32.xlu0 %v599, 56
    %v1330 = vpop.permute.xlu0 %1329
    %1331 = vrot.lane.b32.xlu0 %v604, 56
    %v1332 = vpop.permute.xlu0 %1331
    %v1336 = vsel %vm308, %v1239, 0
    %v1339 = vsel %vm308, %v1241, 0
    %1341 = vmatprep.subr.mxu0 0.0
    %1342 = vmatpush1.msra.mxu0 0.0
    %1343 = vmatprep.subr.mxu0 0.0
    %1344 = vmatpush1.msra.mxu0 0.0
    %1345 = vmatprep.subr.mxu0 0.0
    %1346 = vmatpush1.msra.mxu0 0.0
    %1347 = vmatprep.subr.mxu0 0.0
    %1348 = vmatpush1.msra.mxu0 0.0
    %1349 = vmatprep.subr.mxu0 0.0
    %1350 = vmatpush1.msra.mxu0 0.0
    %1351 = vmatprep.subr.mxu0 0.0
    %1352 = vmatpush1.msra.mxu0 0.0
    %1353 = vmatprep.subr.mxu0 0.0
    %1354 = vmatpush1.msra.mxu0 0.0
    %1355 = vmatprep.subr.mxu0 0.0
    %1356 = vmatpush1.msra.mxu0 0.0
    %1357 = vmatprep.subr.mxu0 0.0
    %1358 = vmatpush1.msra.mxu0 0.0
    %1359 = vmatprep.subr.mxu0 0.0
    %1360 = vmatpush1.msra.mxu0 0.0
    %1361 = vmatprep.subr.mxu0 0.0
    %1362 = vmatpush1.msra.mxu0 0.0
    %1363 = vmatprep.subr.mxu0 0.0
    %1364 = vmatpush1.msra.mxu0 0.0
    %1365 = vmatprep.subr.mxu0 0.0
    %1366 = vmatpush1.msra.mxu0 0.0
    %1367 = vmatprep.subr.mxu0 0.0
    %1368 = vmatpush1.msra.mxu0 0.0
    %1369 = vmatprep.subr.mxu0 0.0
    %1370 = vmatpush1.msra.mxu0 %v1332
    %1371 = vmatprep.subr.mxu0 0.0
    %1372 = vmatpush1.msra.mxu0 %v1330
    %1373 = vmatprep.subr.mxu0 0.0
    %1374 = vmatpush2.msra.mxu0 0.0
    %1375 = vmatprep.subr.mxu0 0.0
    %1376 = vmatpush2.msra.mxu0 0.0
    %1377 = vmatprep.subr.mxu0 0.0
    %1378 = vmatpush2.msra.mxu0 0.0
    %1379 = vmatprep.subr.mxu0 0.0
    %1380 = vmatpush2.msra.mxu0 0.0
    %1381 = vmatprep.subr.mxu0 0.0
    %1382 = vmatpush2.msra.mxu0 0.0
    %1383 = vmatprep.subr.mxu0 0.0
    %1384 = vmatpush2.msra.mxu0 0.0
    %1385 = vmatprep.subr.mxu0 0.0
    %1386 = vmatpush2.msra.mxu0 0.0
    %1387 = vmatprep.subr.mxu0 0.0
    %1388 = vmatpush2.msra.mxu0 0.0
    %1389 = vmatprep.subr.mxu0 0.0
    %1390 = vmatpush2.msra.mxu0 0.0
    %1391 = vmatprep.subr.mxu0 0.0
    %1392 = vmatpush2.msra.mxu0 0.0
    %1393 = vmatprep.subr.mxu0 0.0
    %1394 = vmatpush2.msra.mxu0 0.0
    %1395 = vmatprep.subr.mxu0 0.0
    %1396 = vmatpush2.msra.mxu0 0.0
    %1397 = vmatprep.subr.mxu0 0.0
    %1398 = vmatpush2.msra.mxu0 0.0
    %1399 = vmatprep.subr.mxu0 0.0
    %1400 = vmatpush2.msra.mxu0 0.0
    %1401 = vmatprep.subr.mxu0 0.0
    %1402 = vmatpush2.msra.mxu0 0.0
    %1403 = vmatprep.subr.mxu0 0.0
    %1404 = vmatpush2.msra.mxu0 0.0
    %1405 = vmatprep.mubr.f32.mxu0 0.0
    %1406 = vmatmul.mubr.f32.gmra.mxu0 %v1336
    %v1407 = vpop.f32.mrf.mxu0
    %v1408 = vadd.f32 0.0, %v1407
    %v1409 = vpop.f32.mrf.mxu0
    %1410 = vmatprep.mubr.f32.mxu0 0.0
    %1411 = vmatmul.mubr.f32.gmra.mxu0 %v1339
    %v1412 = vpop.f32.mrf.mxu0
    %v1413 = vadd.f32 0.0, %v1412
    %v1414 = vpop.f32.mrf.mxu0
    %1415 = vdwg.mxu0
    %1420 = vrot.lane.b32.xlu0 %v1321, 8
    %v1421 = vpop.permute.xlu0 %1420
    %1422 = vrot.lane.b32.xlu0 %v1326, 8
    %v1423 = vpop.permute.xlu0 %1422
    %1424 = vrot.lane.b32.xlu0 %v1408, 8
    %v1425 = vpop.permute.xlu0 %1424
    %1426 = vrot.lane.b32.xlu0 %v1413, 8
    %v1427 = vpop.permute.xlu0 %1426
    %vm1432 = vcmask 130112
    %1433 = vst.msk [vmem:[#allocation2] sm:$0xff] %vm1432, %v1421
    %1434 = vst.msk [vmem:[#allocation2 + $0x8] sm:$0xff] %vm1432, %v1423
    %1435 = vst.msk [vmem:[#allocation2 + $0x10] sm:$0xff] %vm1432, %v1425
    %1436 = vst.msk [vmem:[#allocation2 + $0x18] sm:$0xff] %vm1432, %v1427
    %1437 = vrot.lane.b32.xlu0 %v589, 112
    %v1438 = vpop.permute.xlu0 %1437
    %1439 = vrot.lane.b32.xlu0 %v594, 112
    %v1440 = vpop.permute.xlu0 %1439
    %1441 = vrot.lane.b32.xlu0 %v589, 80
    %v1442 = vpop.permute.xlu0 %1441
    %1443 = vrot.lane.b32.xlu0 %v594, 80
    %v1444 = vpop.permute.xlu0 %1443
    %v1445 = vsel %vm613, %v1438, 0
    %v1447 = vsel %vm613, %v1440, 0
    %v1449 = vsel %vm613, %v1442, 0
    %v1451 = vsel %vm613, %v1444, 0
    %1453 = vmatprep.subr.mxu0 0.0
    %1454 = vmatpush1.xpose.msra.mxu0 0.0
    %1455 = vmatprep.subr.mxu0 0.0
    %1456 = vmatpush1.xpose.msra.mxu0 0.0
    %1457 = vmatprep.subr.mxu0 0.0
    %1458 = vmatpush1.xpose.msra.mxu0 0.0
    %1459 = vmatprep.subr.mxu0 0.0
    %1460 = vmatpush1.xpose.msra.mxu0 0.0
    %1461 = vmatprep.subr.mxu0 0.0
    %1462 = vmatpush1.xpose.msra.mxu0 0.0
    %1463 = vmatprep.subr.mxu0 0.0
    %1464 = vmatpush1.xpose.msra.mxu0 0.0
    %1465 = vmatprep.subr.mxu0 0.0
    %1466 = vmatpush1.xpose.msra.mxu0 0.0
    %1467 = vmatprep.subr.mxu0 0.0
    %1468 = vmatpush1.xpose.msra.mxu0 0.0
    %1469 = vmatprep.subr.mxu0 0.0
    %1470 = vmatpush1.xpose.msra.mxu0 0.0
    %1471 = vmatprep.subr.mxu0 0.0
    %1472 = vmatpush1.xpose.msra.mxu0 0.0
    %1473 = vmatprep.subr.mxu0 0.0
    %1474 = vmatpush1.xpose.msra.mxu0 0.0
    %1475 = vmatprep.subr.mxu0 0.0
    %1476 = vmatpush1.xpose.msra.mxu0 0.0
    %1477 = vmatprep.subr.mxu0 0.0
    %1478 = vmatpush1.xpose.msra.mxu0 0.0
    %1479 = vmatprep.subr.mxu0 0.0
    %1480 = vmatpush1.xpose.msra.mxu0 0.0
    %1481 = vmatprep.subr.mxu0 0.0
    %1482 = vmatpush1.xpose.msra.mxu0 %v1451
    %1483 = vmatprep.subr.mxu0 0.0
    %1484 = vmatpush1.xpose.msra.mxu0 %v1449
    %1485 = vmatprep.subr.mxu0 0.0
    %1486 = vmatpush2.xpose.msra.mxu0 0.0
    %1487 = vmatprep.subr.mxu0 0.0
    %1488 = vmatpush2.xpose.msra.mxu0 0.0
    %1489 = vmatprep.subr.mxu0 0.0
    %1490 = vmatpush2.xpose.msra.mxu0 0.0
    %1491 = vmatprep.subr.mxu0 0.0
    %1492 = vmatpush2.xpose.msra.mxu0 0.0
    %1493 = vmatprep.subr.mxu0 0.0
    %1494 = vmatpush2.xpose.msra.mxu0 0.0
    %1495 = vmatprep.subr.mxu0 0.0
    %1496 = vmatpush2.xpose.msra.mxu0 0.0
    %1497 = vmatprep.subr.mxu0 0.0
    %1498 = vmatpush2.xpose.msra.mxu0 0.0
    %1499 = vmatprep.subr.mxu0 0.0
    %1500 = vmatpush2.xpose.msra.mxu0 0.0
    %1501 = vmatprep.subr.mxu0 0.0
    %1502 = vmatpush2.xpose.msra.mxu0 0.0
    %1503 = vmatprep.subr.mxu0 0.0
    %1504 = vmatpush2.xpose.msra.mxu0 0.0
    %1505 = vmatprep.subr.mxu0 0.0
    %1506 = vmatpush2.xpose.msra.mxu0 0.0
    %1507 = vmatprep.subr.mxu0 0.0
    %1508 = vmatpush2.xpose.msra.mxu0 0.0
    %1509 = vmatprep.subr.mxu0 0.0
    %1510 = vmatpush2.xpose.msra.mxu0 0.0
    %1511 = vmatprep.subr.mxu0 0.0
    %1512 = vmatpush2.xpose.msra.mxu0 0.0
    %1513 = vmatprep.subr.mxu0 0.0
    %1514 = vmatpush2.xpose.msra.mxu0 0.0
    %1515 = vmatprep.subr.mxu0 0.0
    %1516 = vmatpush2.xpose.msra.mxu0 0.0
    %1517 = vmatprep.mubr.f32.mxu0 0.0
    %1518 = vmatmul.mubr.f32.gmra.mxu0 %v1445
    %v1519 = vpop.f32.mrf.mxu0
    %v1520 = vadd.f32 0.0, %v1519
    %v1521 = vpop.f32.mrf.mxu0
    %1522 = vmatprep.mubr.f32.mxu0 0.0
    %1523 = vmatmul.mubr.f32.gmra.mxu0 %v1447
    %v1524 = vpop.f32.mrf.mxu0
    %v1525 = vadd.f32 0.0, %v1524
    %v1526 = vpop.f32.mrf.mxu0
    %1527 = vdwg.mxu0
    %1528 = vrot.lane.b32.xlu0 %v599, 112
    %v1529 = vpop.permute.xlu0 %1528
    %1530 = vrot.lane.b32.xlu0 %v604, 112
    %v1531 = vpop.permute.xlu0 %1530
    %1532 = vrot.lane.b32.xlu0 %v599, 80
    %v1533 = vpop.permute.xlu0 %1532
    %1534 = vrot.lane.b32.xlu0 %v604, 80
    %v1535 = vpop.permute.xlu0 %1534
    %v1536 = vsel %vm613, %v1529, 0
    %v1538 = vsel %vm613, %v1531, 0
    %v1540 = vsel %vm613, %v1533, 0
    %v1542 = vsel %vm613, %v1535, 0
    %1544 = vmatprep.subr.mxu0 0.0
    %1545 = vmatpush1.xpose.msra.mxu0 0.0
    %1546 = vmatprep.subr.mxu0 0.0
    %1547 = vmatpush1.xpose.msra.mxu0 0.0
    %1548 = vmatprep.subr.mxu0 0.0
    %1549 = vmatpush1.xpose.msra.mxu0 0.0
    %1550 = vmatprep.subr.mxu0 0.0
    %1551 = vmatpush1.xpose.msra.mxu0 0.0
    %1552 = vmatprep.subr.mxu0 0.0
    %1553 = vmatpush1.xpose.msra.mxu0 0.0
    %1554 = vmatprep.subr.mxu0 0.0
    %1555 = vmatpush1.xpose.msra.mxu0 0.0
    %1556 = vmatprep.subr.mxu0 0.0
    %1557 = vmatpush1.xpose.msra.mxu0 0.0
    %1558 = vmatprep.subr.mxu0 0.0
    %1559 = vmatpush1.xpose.msra.mxu0 0.0
    %1560 = vmatprep.subr.mxu0 0.0
    %1561 = vmatpush1.xpose.msra.mxu0 0.0
    %1562 = vmatprep.subr.mxu0 0.0
    %1563 = vmatpush1.xpose.msra.mxu0 0.0
    %1564 = vmatprep.subr.mxu0 0.0
    %1565 = vmatpush1.xpose.msra.mxu0 0.0
    %1566 = vmatprep.subr.mxu0 0.0
    %1567 = vmatpush1.xpose.msra.mxu0 0.0
    %1568 = vmatprep.subr.mxu0 0.0
    %1569 = vmatpush1.xpose.msra.mxu0 0.0
    %1570 = vmatprep.subr.mxu0 0.0
    %1571 = vmatpush1.xpose.msra.mxu0 0.0
    %1572 = vmatprep.subr.mxu0 0.0
    %1573 = vmatpush1.xpose.msra.mxu0 %v1542
    %1574 = vmatprep.subr.mxu0 0.0
    %1575 = vmatpush1.xpose.msra.mxu0 %v1540
    %1576 = vmatprep.subr.mxu0 0.0
    %1577 = vmatpush2.xpose.msra.mxu0 0.0
    %1578 = vmatprep.subr.mxu0 0.0
    %1579 = vmatpush2.xpose.msra.mxu0 0.0
    %1580 = vmatprep.subr.mxu0 0.0
    %1581 = vmatpush2.xpose.msra.mxu0 0.0
    %1582 = vmatprep.subr.mxu0 0.0
    %1583 = vmatpush2.xpose.msra.mxu0 0.0
    %1584 = vmatprep.subr.mxu0 0.0
    %1585 = vmatpush2.xpose.msra.mxu0 0.0
    %1586 = vmatprep.subr.mxu0 0.0
    %1587 = vmatpush2.xpose.msra.mxu0 0.0
    %1588 = vmatprep.subr.mxu0 0.0
    %1589 = vmatpush2.xpose.msra.mxu0 0.0
    %1590 = vmatprep.subr.mxu0 0.0
    %1591 = vmatpush2.xpose.msra.mxu0 0.0
    %1592 = vmatprep.subr.mxu0 0.0
    %1593 = vmatpush2.xpose.msra.mxu0 0.0
    %1594 = vmatprep.subr.mxu0 0.0
    %1595 = vmatpush2.xpose.msra.mxu0 0.0
    %1596 = vmatprep.subr.mxu0 0.0
    %1597 = vmatpush2.xpose.msra.mxu0 0.0
    %1598 = vmatprep.subr.mxu0 0.0
    %1599 = vmatpush2.xpose.msra.mxu0 0.0
    %1600 = vmatprep.subr.mxu0 0.0
    %1601 = vmatpush2.xpose.msra.mxu0 0.0
    %1602 = vmatprep.subr.mxu0 0.0
    %1603 = vmatpush2.xpose.msra.mxu0 0.0
    %1604 = vmatprep.subr.mxu0 0.0
    %1605 = vmatpush2.xpose.msra.mxu0 0.0
    %1606 = vmatprep.subr.mxu0 0.0
    %1607 = vmatpush2.xpose.msra.mxu0 0.0
    %1608 = vmatprep.mubr.f32.mxu0 0.0
    %1609 = vmatmul.mubr.f32.gmra.mxu0 %v1536
    %v1610 = vpop.f32.mrf.mxu0
    %v1611 = vadd.f32 0.0, %v1610
    %v1612 = vpop.f32.mrf.mxu0
    %1613 = vmatprep.mubr.f32.mxu0 0.0
    %1614 = vmatmul.mubr.f32.gmra.mxu0 %v1538
    %v1615 = vpop.f32.mrf.mxu0
    %v1616 = vadd.f32 0.0, %v1615
    %v1617 = vpop.f32.mrf.mxu0
    %1618 = vdwg.mxu0
    %v1619 = vmul.f32 %v1520, 0.35355338
    %v1620 = vmul.f32 %v1525, 0.35355338
    %v1621 = vmul.f32 %v1611, 0.35355338
    %v1622 = vmul.f32 %v1616, 0.35355338
    %v1623 = vsel %vm308, %v1619, -inf
    %1624 = vmax.xlane.f32.xlu0 %v1623
    %v1625 = vpop.xlane.xlu0 %1624
    %v1626 = vsel %vm308, %v1620, -inf
    %1627 = vmax.xlane.f32.xlu0 %v1626
    %v1628 = vpop.xlane.xlu0 %1627
    %v1629 = vsel %vm308, %v1621, -inf
    %1630 = vmax.xlane.f32.xlu0 %v1629
    %v1631 = vpop.xlane.xlu0 %1630
    %v1632 = vsel %vm308, %v1622, -inf
    %1633 = vmax.xlane.f32.xlu0 %v1632
    %v1634 = vpop.xlane.xlu0 %1633
    %v1635 = vsub.f32 %v1619, %v1625
    %v1636 = vsub.f32 %v1620, %v1628
    %v1637 = vsub.f32 %v1621, %v1631
    %v1638 = vsub.f32 %v1622, %v1634
    %v1639 = vmul.f32 %v1635, 1.442695
    %v1640 = vpow.pop %v1639
    %v1641 = vmul.f32 %v1636, 1.442695
    %v1642 = vpow.pop %v1641
    %v1643 = vmul.f32 %v1637, 1.442695
    %v1644 = vpow.pop %v1643
    %v1645 = vmul.f32 %v1638, 1.442695
    %v1646 = vpow.pop %v1645
    %v1647 = vsel %vm308, %v1640, 0.0
    %1648 = vadd.xlane.f32.xlu0 %v1647
    %v1649 = vpop.xlane.xlu0 %1648
    %v1650 = vsel %vm308, %v1642, 0.0
    %1651 = vadd.xlane.f32.xlu0 %v1650
    %v1652 = vpop.xlane.xlu0 %1651
    %v1653 = vsel %vm308, %v1644, 0.0
    %1654 = vadd.xlane.f32.xlu0 %v1653
    %v1655 = vpop.xlane.xlu0 %1654
    %v1656 = vsel %vm308, %v1646, 0.0
    %1657 = vadd.xlane.f32.xlu0 %v1656
    %v1658 = vpop.xlane.xlu0 %1657
    %v1659 = vrcp.pop %v1649
    %v1660 = vmul.f32 %v1640, %v1659
    %v1661 = vrcp.pop %v1652
    %v1662 = vmul.f32 %v1642, %v1661
    %v1663 = vrcp.pop %v1655
    %v1664 = vmul.f32 %v1644, %v1663
    %v1665 = vrcp.pop %v1658
    %v1666 = vmul.f32 %v1646, %v1665
    %1667 = vrot.lane.b32.xlu0 %v589, 48
    %v1668 = vpop.permute.xlu0 %1667
    %1669 = vrot.lane.b32.xlu0 %v594, 48
    %v1670 = vpop.permute.xlu0 %1669
    %v1674 = vsel %vm308, %v1660, 0
    %v1677 = vsel %vm308, %v1662, 0
    %1679 = vmatprep.subr.mxu0 0.0
    %1680 = vmatpush1.msra.mxu0 0.0
    %1681 = vmatprep.subr.mxu0 0.0
    %1682 = vmatpush1.msra.mxu0 0.0
    %1683 = vmatprep.subr.mxu0 0.0
    %1684 = vmatpush1.msra.mxu0 0.0
    %1685 = vmatprep.subr.mxu0 0.0
    %1686 = vmatpush1.msra.mxu0 0.0
    %1687 = vmatprep.subr.mxu0 0.0
    %1688 = vmatpush1.msra.mxu0 0.0
    %1689 = vmatprep.subr.mxu0 0.0
    %1690 = vmatpush1.msra.mxu0 0.0
    %1691 = vmatprep.subr.mxu0 0.0
    %1692 = vmatpush1.msra.mxu0 0.0
    %1693 = vmatprep.subr.mxu0 0.0
    %1694 = vmatpush1.msra.mxu0 0.0
    %1695 = vmatprep.subr.mxu0 0.0
    %1696 = vmatpush1.msra.mxu0 0.0
    %1697 = vmatprep.subr.mxu0 0.0
    %1698 = vmatpush1.msra.mxu0 0.0
    %1699 = vmatprep.subr.mxu0 0.0
    %1700 = vmatpush1.msra.mxu0 0.0
    %1701 = vmatprep.subr.mxu0 0.0
    %1702 = vmatpush1.msra.mxu0 0.0
    %1703 = vmatprep.subr.mxu0 0.0
    %1704 = vmatpush1.msra.mxu0 0.0
    %1705 = vmatprep.subr.mxu0 0.0
    %1706 = vmatpush1.msra.mxu0 0.0
    %1707 = vmatprep.subr.mxu0 0.0
    %1708 = vmatpush1.msra.mxu0 %v1670
    %1709 = vmatprep.subr.mxu0 0.0
    %1710 = vmatpush1.msra.mxu0 %v1668
    %1711 = vmatprep.subr.mxu0 0.0
    %1712 = vmatpush2.msra.mxu0 0.0
    %1713 = vmatprep.subr.mxu0 0.0
    %1714 = vmatpush2.msra.mxu0 0.0
    %1715 = vmatprep.subr.mxu0 0.0
    %1716 = vmatpush2.msra.mxu0 0.0
    %1717 = vmatprep.subr.mxu0 0.0
    %1718 = vmatpush2.msra.mxu0 0.0
    %1719 = vmatprep.subr.mxu0 0.0
    %1720 = vmatpush2.msra.mxu0 0.0
    %1721 = vmatprep.subr.mxu0 0.0
    %1722 = vmatpush2.msra.mxu0 0.0
    %1723 = vmatprep.subr.mxu0 0.0
    %1724 = vmatpush2.msra.mxu0 0.0
    %1725 = vmatprep.subr.mxu0 0.0
    %1726 = vmatpush2.msra.mxu0 0.0
    %1727 = vmatprep.subr.mxu0 0.0
    %1728 = vmatpush2.msra.mxu0 0.0
    %1729 = vmatprep.subr.mxu0 0.0
    %1730 = vmatpush2.msra.mxu0 0.0
    %1731 = vmatprep.subr.mxu0 0.0
    %1732 = vmatpush2.msra.mxu0 0.0
    %1733 = vmatprep.subr.mxu0 0.0
    %1734 = vmatpush2.msra.mxu0 0.0
    %1735 = vmatprep.subr.mxu0 0.0
    %1736 = vmatpush2.msra.mxu0 0.0
    %1737 = vmatprep.subr.mxu0 0.0
    %1738 = vmatpush2.msra.mxu0 0.0
    %1739 = vmatprep.subr.mxu0 0.0
    %1740 = vmatpush2.msra.mxu0 0.0
    %1741 = vmatprep.subr.mxu0 0.0
    %1742 = vmatpush2.msra.mxu0 0.0
    %1743 = vmatprep.mubr.f32.mxu0 0.0
    %1744 = vmatmul.mubr.f32.gmra.mxu0 %v1674
    %v1745 = vpop.f32.mrf.mxu0
    %v1746 = vadd.f32 0.0, %v1745
    %v1747 = vpop.f32.mrf.mxu0
    %1748 = vmatprep.mubr.f32.mxu0 0.0
    %1749 = vmatmul.mubr.f32.gmra.mxu0 %v1677
    %v1750 = vpop.f32.mrf.mxu0
    %v1751 = vadd.f32 0.0, %v1750
    %v1752 = vpop.f32.mrf.mxu0
    %1753 = vdwg.mxu0
    %1754 = vrot.lane.b32.xlu0 %v599, 48
    %v1755 = vpop.permute.xlu0 %1754
    %1756 = vrot.lane.b32.xlu0 %v604, 48
    %v1757 = vpop.permute.xlu0 %1756
    %v1761 = vsel %vm308, %v1664, 0
    %v1764 = vsel %vm308, %v1666, 0
    %1766 = vmatprep.subr.mxu0 0.0
    %1767 = vmatpush1.msra.mxu0 0.0
    %1768 = vmatprep.subr.mxu0 0.0
    %1769 = vmatpush1.msra.mxu0 0.0
    %1770 = vmatprep.subr.mxu0 0.0
    %1771 = vmatpush1.msra.mxu0 0.0
    %1772 = vmatprep.subr.mxu0 0.0
    %1773 = vmatpush1.msra.mxu0 0.0
    %1774 = vmatprep.subr.mxu0 0.0
    %1775 = vmatpush1.msra.mxu0 0.0
    %1776 = vmatprep.subr.mxu0 0.0
    %1777 = vmatpush1.msra.mxu0 0.0
    %1778 = vmatprep.subr.mxu0 0.0
    %1779 = vmatpush1.msra.mxu0 0.0
    %1780 = vmatprep.subr.mxu0 0.0
    %1781 = vmatpush1.msra.mxu0 0.0
    %1782 = vmatprep.subr.mxu0 0.0
    %1783 = vmatpush1.msra.mxu0 0.0
    %1784 = vmatprep.subr.mxu0 0.0
    %1785 = vmatpush1.msra.mxu0 0.0
    %1786 = vmatprep.subr.mxu0 0.0
    %1787 = vmatpush1.msra.mxu0 0.0
    %1788 = vmatprep.subr.mxu0 0.0
    %1789 = vmatpush1.msra.mxu0 0.0
    %1790 = vmatprep.subr.mxu0 0.0
    %1791 = vmatpush1.msra.mxu0 0.0
    %1792 = vmatprep.subr.mxu0 0.0
    %1793 = vmatpush1.msra.mxu0 0.0
    %1794 = vmatprep.subr.mxu0 0.0
    %1795 = vmatpush1.msra.mxu0 %v1757
    %1796 = vmatprep.subr.mxu0 0.0
    %1797 = vmatpush1.msra.mxu0 %v1755
    %1798 = vmatprep.subr.mxu0 0.0
    %1799 = vmatpush2.msra.mxu0 0.0
    %1800 = vmatprep.subr.mxu0 0.0
    %1801 = vmatpush2.msra.mxu0 0.0
    %1802 = vmatprep.subr.mxu0 0.0
    %1803 = vmatpush2.msra.mxu0 0.0
    %1804 = vmatprep.subr.mxu0 0.0
    %1805 = vmatpush2.msra.mxu0 0.0
    %1806 = vmatprep.subr.mxu0 0.0
    %1807 = vmatpush2.msra.mxu0 0.0
    %1808 = vmatprep.subr.mxu0 0.0
    %1809 = vmatpush2.msra.mxu0 0.0
    %1810 = vmatprep.subr.mxu0 0.0
    %1811 = vmatpush2.msra.mxu0 0.0
    %1812 = vmatprep.subr.mxu0 0.0
    %1813 = vmatpush2.msra.mxu0 0.0
    %1814 = vmatprep.subr.mxu0 0.0
    %1815 = vmatpush2.msra.mxu0 0.0
    %1816 = vmatprep.subr.mxu0 0.0
    %1817 = vmatpush2.msra.mxu0 0.0
    %1818 = vmatprep.subr.mxu0 0.0
    %1819 = vmatpush2.msra.mxu0 0.0
    %1820 = vmatprep.subr.mxu0 0.0
    %1821 = vmatpush2.msra.mxu0 0.0
    %1822 = vmatprep.subr.mxu0 0.0
    %1823 = vmatpush2.msra.mxu0 0.0
    %1824 = vmatprep.subr.mxu0 0.0
    %1825 = vmatpush2.msra.mxu0 0.0
    %1826 = vmatprep.subr.mxu0 0.0
    %1827 = vmatpush2.msra.mxu0 0.0
    %1828 = vmatprep.subr.mxu0 0.0
    %1829 = vmatpush2.msra.mxu0 0.0
    %1830 = vmatprep.mubr.f32.mxu0 0.0
    %1831 = vmatmul.mubr.f32.gmra.mxu0 %v1761
    %v1832 = vpop.f32.mrf.mxu0
    %v1833 = vadd.f32 0.0, %v1832
    %v1834 = vpop.f32.mrf.mxu0
    %1835 = vmatprep.mubr.f32.mxu0 0.0
    %1836 = vmatmul.mubr.f32.gmra.mxu0 %v1764
    %v1837 = vpop.f32.mrf.mxu0
    %v1838 = vadd.f32 0.0, %v1837
    %v1839 = vpop.f32.mrf.mxu0
    %1840 = vdwg.mxu0
    %1845 = vrot.lane.b32.xlu0 %v1746, 16
    %v1846 = vpop.permute.xlu0 %1845
    %1847 = vrot.lane.b32.xlu0 %v1751, 16
    %v1848 = vpop.permute.xlu0 %1847
    %1849 = vrot.lane.b32.xlu0 %v1833, 16
    %v1850 = vpop.permute.xlu0 %1849
    %1851 = vrot.lane.b32.xlu0 %v1838, 16
    %v1852 = vpop.permute.xlu0 %1851
    %vm1857 = vcmask 195712
    %1858 = vst.msk [vmem:[#allocation2] sm:$0xff] %vm1857, %v1846
    %1859 = vst.msk [vmem:[#allocation2 + $0x8] sm:$0xff] %vm1857, %v1848
    %1860 = vst.msk [vmem:[#allocation2 + $0x10] sm:$0xff] %vm1857, %v1850
    %1861 = vst.msk [vmem:[#allocation2 + $0x18] sm:$0xff] %vm1857, %v1852
    %1862 = vrot.lane.b32.xlu0 %v589, 104
    %v1863 = vpop.permute.xlu0 %1862
    %1864 = vrot.lane.b32.xlu0 %v594, 104
    %v1865 = vpop.permute.xlu0 %1864
    %1866 = vrot.lane.b32.xlu0 %v589, 72
    %v1867 = vpop.permute.xlu0 %1866
    %1868 = vrot.lane.b32.xlu0 %v594, 72
    %v1869 = vpop.permute.xlu0 %1868
    %v1870 = vsel %vm613, %v1863, 0
    %v1872 = vsel %vm613, %v1865, 0
    %v1874 = vsel %vm613, %v1867, 0
    %v1876 = vsel %vm613, %v1869, 0
    %1878 = vmatprep.subr.mxu0 0.0
    %1879 = vmatpush1.xpose.msra.mxu0 0.0
    %1880 = vmatprep.subr.mxu0 0.0
    %1881 = vmatpush1.xpose.msra.mxu0 0.0
    %1882 = vmatprep.subr.mxu0 0.0
    %1883 = vmatpush1.xpose.msra.mxu0 0.0
    %1884 = vmatprep.subr.mxu0 0.0
    %1885 = vmatpush1.xpose.msra.mxu0 0.0
    %1886 = vmatprep.subr.mxu0 0.0
    %1887 = vmatpush1.xpose.msra.mxu0 0.0
    %1888 = vmatprep.subr.mxu0 0.0
    %1889 = vmatpush1.xpose.msra.mxu0 0.0
    %1890 = vmatprep.subr.mxu0 0.0
    %1891 = vmatpush1.xpose.msra.mxu0 0.0
    %1892 = vmatprep.subr.mxu0 0.0
    %1893 = vmatpush1.xpose.msra.mxu0 0.0
    %1894 = vmatprep.subr.mxu0 0.0
    %1895 = vmatpush1.xpose.msra.mxu0 0.0
    %1896 = vmatprep.subr.mxu0 0.0
    %1897 = vmatpush1.xpose.msra.mxu0 0.0
    %1898 = vmatprep.subr.mxu0 0.0
    %1899 = vmatpush1.xpose.msra.mxu0 0.0
    %1900 = vmatprep.subr.mxu0 0.0
    %1901 = vmatpush1.xpose.msra.mxu0 0.0
    %1902 = vmatprep.subr.mxu0 0.0
    %1903 = vmatpush1.xpose.msra.mxu0 0.0
    %1904 = vmatprep.subr.mxu0 0.0
    %1905 = vmatpush1.xpose.msra.mxu0 0.0
    %1906 = vmatprep.subr.mxu0 0.0
    %1907 = vmatpush1.xpose.msra.mxu0 %v1876
    %1908 = vmatprep.subr.mxu0 0.0
    %1909 = vmatpush1.xpose.msra.mxu0 %v1874
    %1910 = vmatprep.subr.mxu0 0.0
    %1911 = vmatpush2.xpose.msra.mxu0 0.0
    %1912 = vmatprep.subr.mxu0 0.0
    %1913 = vmatpush2.xpose.msra.mxu0 0.0
    %1914 = vmatprep.subr.mxu0 0.0
    %1915 = vmatpush2.xpose.msra.mxu0 0.0
    %1916 = vmatprep.subr.mxu0 0.0
    %1917 = vmatpush2.xpose.msra.mxu0 0.0
    %1918 = vmatprep.subr.mxu0 0.0
    %1919 = vmatpush2.xpose.msra.mxu0 0.0
    %1920 = vmatprep.subr.mxu0 0.0
    %1921 = vmatpush2.xpose.msra.mxu0 0.0
    %1922 = vmatprep.subr.mxu0 0.0
    %1923 = vmatpush2.xpose.msra.mxu0 0.0
    %1924 = vmatprep.subr.mxu0 0.0
    %1925 = vmatpush2.xpose.msra.mxu0 0.0
    %1926 = vmatprep.subr.mxu0 0.0
    %1927 = vmatpush2.xpose.msra.mxu0 0.0
    %1928 = vmatprep.subr.mxu0 0.0
    %1929 = vmatpush2.xpose.msra.mxu0 0.0
    %1930 = vmatprep.subr.mxu0 0.0
    %1931 = vmatpush2.xpose.msra.mxu0 0.0
    %1932 = vmatprep.subr.mxu0 0.0
    %1933 = vmatpush2.xpose.msra.mxu0 0.0
    %1934 = vmatprep.subr.mxu0 0.0
    %1935 = vmatpush2.xpose.msra.mxu0 0.0
    %1936 = vmatprep.subr.mxu0 0.0
    %1937 = vmatpush2.xpose.msra.mxu0 0.0
    %1938 = vmatprep.subr.mxu0 0.0
    %1939 = vmatpush2.xpose.msra.mxu0 0.0
    %1940 = vmatprep.subr.mxu0 0.0
    %1941 = vmatpush2.xpose.msra.mxu0 0.0
    %1942 = vmatprep.mubr.f32.mxu0 0.0
    %1943 = vmatmul.mubr.f32.gmra.mxu0 %v1870
    %v1944 = vpop.f32.mrf.mxu0
    %v1945 = vadd.f32 0.0, %v1944
    %v1946 = vpop.f32.mrf.mxu0
    %1947 = vmatprep.mubr.f32.mxu0 0.0
    %1948 = vmatmul.mubr.f32.gmra.mxu0 %v1872
    %v1949 = vpop.f32.mrf.mxu0
    %v1950 = vadd.f32 0.0, %v1949
    %v1951 = vpop.f32.mrf.mxu0
    %1952 = vdwg.mxu0
    %1953 = vrot.lane.b32.xlu0 %v599, 104
    %v1954 = vpop.permute.xlu0 %1953
    %1955 = vrot.lane.b32.xlu0 %v604, 104
    %v1956 = vpop.permute.xlu0 %1955
    %1957 = vrot.lane.b32.xlu0 %v599, 72
    %v1958 = vpop.permute.xlu0 %1957
    %1959 = vrot.lane.b32.xlu0 %v604, 72
    %v1960 = vpop.permute.xlu0 %1959
    %v1961 = vsel %vm613, %v1954, 0
    %v1963 = vsel %vm613, %v1956, 0
    %v1965 = vsel %vm613, %v1958, 0
    %v1967 = vsel %vm613, %v1960, 0
    %1969 = vmatprep.subr.mxu0 0.0
    %1970 = vmatpush1.xpose.msra.mxu0 0.0
    %1971 = vmatprep.subr.mxu0 0.0
    %1972 = vmatpush1.xpose.msra.mxu0 0.0
    %1973 = vmatprep.subr.mxu0 0.0
    %1974 = vmatpush1.xpose.msra.mxu0 0.0
    %1975 = vmatprep.subr.mxu0 0.0
    %1976 = vmatpush1.xpose.msra.mxu0 0.0
    %1977 = vmatprep.subr.mxu0 0.0
    %1978 = vmatpush1.xpose.msra.mxu0 0.0
    %1979 = vmatprep.subr.mxu0 0.0
    %1980 = vmatpush1.xpose.msra.mxu0 0.0
    %1981 = vmatprep.subr.mxu0 0.0
    %1982 = vmatpush1.xpose.msra.mxu0 0.0
    %1983 = vmatprep.subr.mxu0 0.0
    %1984 = vmatpush1.xpose.msra.mxu0 0.0
    %1985 = vmatprep.subr.mxu0 0.0
    %1986 = vmatpush1.xpose.msra.mxu0 0.0
    %1987 = vmatprep.subr.mxu0 0.0
    %1988 = vmatpush1.xpose.msra.mxu0 0.0
    %1989 = vmatprep.subr.mxu0 0.0
    %1990 = vmatpush1.xpose.msra.mxu0 0.0
    %1991 = vmatprep.subr.mxu0 0.0
    %1992 = vmatpush1.xpose.msra.mxu0 0.0
    %1993 = vmatprep.subr.mxu0 0.0
    %1994 = vmatpush1.xpose.msra.mxu0 0.0
    %1995 = vmatprep.subr.mxu0 0.0
    %1996 = vmatpush1.xpose.msra.mxu0 0.0
    %1997 = vmatprep.subr.mxu0 0.0
    %1998 = vmatpush1.xpose.msra.mxu0 %v1967
    %1999 = vmatprep.subr.mxu0 0.0
    %2000 = vmatpush1.xpose.msra.mxu0 %v1965
    %2001 = vmatprep.subr.mxu0 0.0
    %2002 = vmatpush2.xpose.msra.mxu0 0.0
    %2003 = vmatprep.subr.mxu0 0.0
    %2004 = vmatpush2.xpose.msra.mxu0 0.0
    %2005 = vmatprep.subr.mxu0 0.0
    %2006 = vmatpush2.xpose.msra.mxu0 0.0
    %2007 = vmatprep.subr.mxu0 0.0
    %2008 = vmatpush2.xpose.msra.mxu0 0.0
    %2009 = vmatprep.subr.mxu0 0.0
    %2010 = vmatpush2.xpose.msra.mxu0 0.0
    %2011 = vmatprep.subr.mxu0 0.0
    %2012 = vmatpush2.xpose.msra.mxu0 0.0
    %2013 = vmatprep.subr.mxu0 0.0
    %2014 = vmatpush2.xpose.msra.mxu0 0.0
    %2015 = vmatprep.subr.mxu0 0.0
    %2016 = vmatpush2.xpose.msra.mxu0 0.0
    %2017 = vmatprep.subr.mxu0 0.0
    %2018 = vmatpush2.xpose.msra.mxu0 0.0
    %2019 = vmatprep.subr.mxu0 0.0
    %2020 = vmatpush2.xpose.msra.mxu0 0.0
    %2021 = vmatprep.subr.mxu0 0.0
    %2022 = vmatpush2.xpose.msra.mxu0 0.0
    %2023 = vmatprep.subr.mxu0 0.0
    %2024 = vmatpush2.xpose.msra.mxu0 0.0
    %2025 = vmatprep.subr.mxu0 0.0
    %2026 = vmatpush2.xpose.msra.mxu0 0.0
    %2027 = vmatprep.subr.mxu0 0.0
    %2028 = vmatpush2.xpose.msra.mxu0 0.0
    %2029 = vmatprep.subr.mxu0 0.0
    %2030 = vmatpush2.xpose.msra.mxu0 0.0
    %2031 = vmatprep.subr.mxu0 0.0
    %2032 = vmatpush2.xpose.msra.mxu0 0.0
    %2033 = vmatprep.mubr.f32.mxu0 0.0
    %2034 = vmatmul.mubr.f32.gmra.mxu0 %v1961
    %v2035 = vpop.f32.mrf.mxu0
    %v2036 = vadd.f32 0.0, %v2035
    %v2037 = vpop.f32.mrf.mxu0
    %2038 = vmatprep.mubr.f32.mxu0 0.0
    %2039 = vmatmul.mubr.f32.gmra.mxu0 %v1963
    %v2040 = vpop.f32.mrf.mxu0
    %v2041 = vadd.f32 0.0, %v2040
    %v2042 = vpop.f32.mrf.mxu0
    %2043 = vdwg.mxu0
    %v2044 = vmul.f32 %v1945, 0.35355338
    %v2045 = vmul.f32 %v1950, 0.35355338
    %v2046 = vmul.f32 %v2036, 0.35355338
    %v2047 = vmul.f32 %v2041, 0.35355338
    %v2048 = vsel %vm308, %v2044, -inf
    %2049 = vmax.xlane.f32.xlu0 %v2048
    %v2050 = vpop.xlane.xlu0 %2049
    %v2051 = vsel %vm308, %v2045, -inf
    %2052 = vmax.xlane.f32.xlu0 %v2051
    %v2053 = vpop.xlane.xlu0 %2052
    %v2054 = vsel %vm308, %v2046, -inf
    %2055 = vmax.xlane.f32.xlu0 %v2054
    %v2056 = vpop.xlane.xlu0 %2055
    %v2057 = vsel %vm308, %v2047, -inf
    %2058 = vmax.xlane.f32.xlu0 %v2057
    %v2059 = vpop.xlane.xlu0 %2058
    %v2060 = vsub.f32 %v2044, %v2050
    %v2061 = vsub.f32 %v2045, %v2053
    %v2062 = vsub.f32 %v2046, %v2056
    %v2063 = vsub.f32 %v2047, %v2059
    %v2064 = vmul.f32 %v2060, 1.442695
    %v2065 = vpow.pop %v2064
    %v2066 = vmul.f32 %v2061, 1.442695
    %v2067 = vpow.pop %v2066
    %v2068 = vmul.f32 %v2062, 1.442695
    %v2069 = vpow.pop %v2068
    %v2070 = vmul.f32 %v2063, 1.442695
    %v2071 = vpow.pop %v2070
    %v2072 = vsel %vm308, %v2065, 0.0
    %2073 = vadd.xlane.f32.xlu0 %v2072
    %v2074 = vpop.xlane.xlu0 %2073
    %v2075 = vsel %vm308, %v2067, 0.0
    %2076 = vadd.xlane.f32.xlu0 %v2075
    %v2077 = vpop.xlane.xlu0 %2076
    %v2078 = vsel %vm308, %v2069, 0.0
    %2079 = vadd.xlane.f32.xlu0 %v2078
    %v2080 = vpop.xlane.xlu0 %2079
    %v2081 = vsel %vm308, %v2071, 0.0
    %2082 = vadd.xlane.f32.xlu0 %v2081
    %v2083 = vpop.xlane.xlu0 %2082
    %v2084 = vrcp.pop %v2074
    %v2085 = vmul.f32 %v2065, %v2084
    %v2086 = vrcp.pop %v2077
    %v2087 = vmul.f32 %v2067, %v2086
    %v2088 = vrcp.pop %v2080
    %v2089 = vmul.f32 %v2069, %v2088
    %v2090 = vrcp.pop %v2083
    %v2091 = vmul.f32 %v2071, %v2090
    %2092 = vrot.lane.b32.xlu0 %v589, 40
    %v2093 = vpop.permute.xlu0 %2092
    %2094 = vrot.lane.b32.xlu0 %v594, 40
    %v2095 = vpop.permute.xlu0 %2094
    %v2099 = vsel %vm308, %v2085, 0
    %v2102 = vsel %vm308, %v2087, 0
    %2104 = vmatprep.subr.mxu0 0.0
    %2105 = vmatpush1.msra.mxu0 0.0
    %2106 = vmatprep.subr.mxu0 0.0
    %2107 = vmatpush1.msra.mxu0 0.0
    %2108 = vmatprep.subr.mxu0 0.0
    %2109 = vmatpush1.msra.mxu0 0.0
    %2110 = vmatprep.subr.mxu0 0.0
    %2111 = vmatpush1.msra.mxu0 0.0
    %2112 = vmatprep.subr.mxu0 0.0
    %2113 = vmatpush1.msra.mxu0 0.0
    %2114 = vmatprep.subr.mxu0 0.0
    %2115 = vmatpush1.msra.mxu0 0.0
    %2116 = vmatprep.subr.mxu0 0.0
    %2117 = vmatpush1.msra.mxu0 0.0
    %2118 = vmatprep.subr.mxu0 0.0
    %2119 = vmatpush1.msra.mxu0 0.0
    %2120 = vmatprep.subr.mxu0 0.0
    %2121 = vmatpush1.msra.mxu0 0.0
    %2122 = vmatprep.subr.mxu0 0.0
    %2123 = vmatpush1.msra.mxu0 0.0
    %2124 = vmatprep.subr.mxu0 0.0
    %2125 = vmatpush1.msra.mxu0 0.0
    %2126 = vmatprep.subr.mxu0 0.0
    %2127 = vmatpush1.msra.mxu0 0.0
    %2128 = vmatprep.subr.mxu0 0.0
    %2129 = vmatpush1.msra.mxu0 0.0
    %2130 = vmatprep.subr.mxu0 0.0
    %2131 = vmatpush1.msra.mxu0 0.0
    %2132 = vmatprep.subr.mxu0 0.0
    %2133 = vmatpush1.msra.mxu0 %v2095
    %2134 = vmatprep.subr.mxu0 0.0
    %2135 = vmatpush1.msra.mxu0 %v2093
    %2136 = vmatprep.subr.mxu0 0.0
    %2137 = vmatpush2.msra.mxu0 0.0
    %2138 = vmatprep.subr.mxu0 0.0
    %2139 = vmatpush2.msra.mxu0 0.0
    %2140 = vmatprep.subr.mxu0 0.0
    %2141 = vmatpush2.msra.mxu0 0.0
    %2142 = vmatprep.subr.mxu0 0.0
    %2143 = vmatpush2.msra.mxu0 0.0
    %2144 = vmatprep.subr.mxu0 0.0
    %2145 = vmatpush2.msra.mxu0 0.0
    %2146 = vmatprep.subr.mxu0 0.0
    %2147 = vmatpush2.msra.mxu0 0.0
    %2148 = vmatprep.subr.mxu0 0.0
    %2149 = vmatpush2.msra.mxu0 0.0
    %2150 = vmatprep.subr.mxu0 0.0
    %2151 = vmatpush2.msra.mxu0 0.0
    %2152 = vmatprep.subr.mxu0 0.0
    %2153 = vmatpush2.msra.mxu0 0.0
    %2154 = vmatprep.subr.mxu0 0.0
    %2155 = vmatpush2.msra.mxu0 0.0
    %2156 = vmatprep.subr.mxu0 0.0
    %2157 = vmatpush2.msra.mxu0 0.0
    %2158 = vmatprep.subr.mxu0 0.0
    %2159 = vmatpush2.msra.mxu0 0.0
    %2160 = vmatprep.subr.mxu0 0.0
    %2161 = vmatpush2.msra.mxu0 0.0
    %2162 = vmatprep.subr.mxu0 0.0
    %2163 = vmatpush2.msra.mxu0 0.0
    %2164 = vmatprep.subr.mxu0 0.0
    %2165 = vmatpush2.msra.mxu0 0.0
    %2166 = vmatprep.subr.mxu0 0.0
    %2167 = vmatpush2.msra.mxu0 0.0
    %2168 = vmatprep.mubr.f32.mxu0 0.0
    %2169 = vmatmul.mubr.f32.gmra.mxu0 %v2099
    %v2170 = vpop.f32.mrf.mxu0
    %v2171 = vadd.f32 0.0, %v2170
    %v2172 = vpop.f32.mrf.mxu0
    %2173 = vmatprep.mubr.f32.mxu0 0.0
    %2174 = vmatmul.mubr.f32.gmra.mxu0 %v2102
    %v2175 = vpop.f32.mrf.mxu0
    %v2176 = vadd.f32 0.0, %v2175
    %v2177 = vpop.f32.mrf.mxu0
    %2178 = vdwg.mxu0
    %2179 = vrot.lane.b32.xlu0 %v599, 40
    %v2180 = vpop.permute.xlu0 %2179
    %2181 = vrot.lane.b32.xlu0 %v604, 40
    %v2182 = vpop.permute.xlu0 %2181
    %v2186 = vsel %vm308, %v2089, 0
    %v2189 = vsel %vm308, %v2091, 0
    %2191 = vmatprep.subr.mxu0 0.0
    %2192 = vmatpush1.msra.mxu0 0.0
    %2193 = vmatprep.subr.mxu0 0.0
    %2194 = vmatpush1.msra.mxu0 0.0
    %2195 = vmatprep.subr.mxu0 0.0
    %2196 = vmatpush1.msra.mxu0 0.0
    %2197 = vmatprep.subr.mxu0 0.0
    %2198 = vmatpush1.msra.mxu0 0.0
    %2199 = vmatprep.subr.mxu0 0.0
    %2200 = vmatpush1.msra.mxu0 0.0
    %2201 = vmatprep.subr.mxu0 0.0
    %2202 = vmatpush1.msra.mxu0 0.0
    %2203 = vmatprep.subr.mxu0 0.0
    %2204 = vmatpush1.msra.mxu0 0.0
    %2205 = vmatprep.subr.mxu0 0.0
    %2206 = vmatpush1.msra.mxu0 0.0
    %2207 = vmatprep.subr.mxu0 0.0
    %2208 = vmatpush1.msra.mxu0 0.0
    %2209 = vmatprep.subr.mxu0 0.0
    %2210 = vmatpush1.msra.mxu0 0.0
    %2211 = vmatprep.subr.mxu0 0.0
    %2212 = vmatpush1.msra.mxu0 0.0
    %2213 = vmatprep.subr.mxu0 0.0
    %2214 = vmatpush1.msra.mxu0 0.0
    %2215 = vmatprep.subr.mxu0 0.0
    %2216 = vmatpush1.msra.mxu0 0.0
    %2217 = vmatprep.subr.mxu0 0.0
    %2218 = vmatpush1.msra.mxu0 0.0
    %2219 = vmatprep.subr.mxu0 0.0
    %2220 = vmatpush1.msra.mxu0 %v2182
    %2221 = vmatprep.subr.mxu0 0.0
    %2222 = vmatpush1.msra.mxu0 %v2180
    %2223 = vmatprep.subr.mxu0 0.0
    %2224 = vmatpush2.msra.mxu0 0.0
    %2225 = vmatprep.subr.mxu0 0.0
    %2226 = vmatpush2.msra.mxu0 0.0
    %2227 = vmatprep.subr.mxu0 0.0
    %2228 = vmatpush2.msra.mxu0 0.0
    %2229 = vmatprep.subr.mxu0 0.0
    %2230 = vmatpush2.msra.mxu0 0.0
    %2231 = vmatprep.subr.mxu0 0.0
    %2232 = vmatpush2.msra.mxu0 0.0
    %2233 = vmatprep.subr.mxu0 0.0
    %2234 = vmatpush2.msra.mxu0 0.0
    %2235 = vmatprep.subr.mxu0 0.0
    %2236 = vmatpush2.msra.mxu0 0.0
    %2237 = vmatprep.subr.mxu0 0.0
    %2238 = vmatpush2.msra.mxu0 0.0
    %2239 = vmatprep.subr.mxu0 0.0
    %2240 = vmatpush2.msra.mxu0 0.0
    %2241 = vmatprep.subr.mxu0 0.0
    %2242 = vmatpush2.msra.mxu0 0.0
    %2243 = vmatprep.subr.mxu0 0.0
    %2244 = vmatpush2.msra.mxu0 0.0
    %2245 = vmatprep.subr.mxu0 0.0
    %2246 = vmatpush2.msra.mxu0 0.0
    %2247 = vmatprep.subr.mxu0 0.0
    %2248 = vmatpush2.msra.mxu0 0.0
    %2249 = vmatprep.subr.mxu0 0.0
    %2250 = vmatpush2.msra.mxu0 0.0
    %2251 = vmatprep.subr.mxu0 0.0
    %2252 = vmatpush2.msra.mxu0 0.0
    %2253 = vmatprep.subr.mxu0 0.0
    %2254 = vmatpush2.msra.mxu0 0.0
    %2255 = vmatprep.mubr.f32.mxu0 0.0
    %2256 = vmatmul.mubr.f32.gmra.mxu0 %v2186
    %v2257 = vpop.f32.mrf.mxu0
    %v2258 = vadd.f32 0.0, %v2257
    %v2259 = vpop.f32.mrf.mxu0
    %2260 = vmatprep.mubr.f32.mxu0 0.0
    %2261 = vmatmul.mubr.f32.gmra.mxu0 %v2189
    %v2262 = vpop.f32.mrf.mxu0
    %v2263 = vadd.f32 0.0, %v2262
    %v2264 = vpop.f32.mrf.mxu0
    %2265 = vdwg.mxu0
    %2270 = vrot.lane.b32.xlu0 %v2171, 24
    %v2271 = vpop.permute.xlu0 %2270
    %2272 = vrot.lane.b32.xlu0 %v2176, 24
    %v2273 = vpop.permute.xlu0 %2272
    %2274 = vrot.lane.b32.xlu0 %v2258, 24
    %v2275 = vpop.permute.xlu0 %2274
    %2276 = vrot.lane.b32.xlu0 %v2263, 24
    %v2277 = vpop.permute.xlu0 %2276
    %vm2282 = vcmask 261312
    %2283 = vst.msk [vmem:[#allocation2] sm:$0xff] %vm2282, %v2271
    %2284 = vst.msk [vmem:[#allocation2 + $0x8] sm:$0xff] %vm2282, %v2273
    %2285 = vst.msk [vmem:[#allocation2 + $0x10] sm:$0xff] %vm2282, %v2275
    %2286 = vst.msk [vmem:[#allocation2 + $0x18] sm:$0xff] %vm2282, %v2277
    %v2287 = vld [vmem:[#allocation2] sm:$0xff]
    %v2288 = vld [vmem:[#allocation2 + $0x8] sm:$0xff]
    %v2289 = vld [vmem:[#allocation2 + $0x10] sm:$0xff]
    %v2290 = vld [vmem:[#allocation2 + $0x18] sm:$0xff]
    %v2291 = vld [vmem:[%s8] sm:$0xff]
    %v2292 = vld [vmem:[%s8 + $0x8] sm:$0xff]
    %v2293 = vld [vmem:[%s8 + $0x10] sm:$0xff]
    %v2294 = vld [vmem:[%s8 + $0x18] sm:$0xff]
    %v2295 = vld [vmem:[#allocation15] sm:$0x1]
    %v2297 = vlaneseq
    %v2298 = vshrl.u32 %v2297, 7
    %v2299 = vsub.s32 0, %v2298
    %v2300 = vrot.slane %v2295, %v2299
    %v2303 = vsel %vm425, %v2287, 0
    %v2306 = vsel %vm425, %v2288, 0
    %v2309 = vsel %vm425, %v2289, 0
    %v2312 = vsel %vm425, %v2290, 0
    %2314 = vmatprep.subr.mxu0 0.0
    %2315 = vmatpush1.msra.mxu0 0.0
    %2316 = vmatprep.subr.mxu0 0.0
    %2317 = vmatpush1.msra.mxu0 0.0
    %2318 = vmatprep.subr.mxu0 0.0
    %2319 = vmatpush1.msra.mxu0 0.0
    %2320 = vmatprep.subr.mxu0 0.0
    %2321 = vmatpush1.msra.mxu0 0.0
    %2322 = vmatprep.subr.mxu0 0.0
    %2323 = vmatpush1.msra.mxu0 0.0
    %2324 = vmatprep.subr.mxu0 0.0
    %2325 = vmatpush1.msra.mxu0 0.0
    %2326 = vmatprep.subr.mxu0 0.0
    %2327 = vmatpush1.msra.mxu0 0.0
    %2328 = vmatprep.subr.mxu0 0.0
    %2329 = vmatpush1.msra.mxu0 0.0
    %2330 = vmatprep.subr.mxu0 0.0
    %2331 = vmatpush1.msra.mxu0 0.0
    %2332 = vmatprep.subr.mxu0 0.0
    %2333 = vmatpush1.msra.mxu0 0.0
    %2334 = vmatprep.subr.mxu0 0.0
    %2335 = vmatpush1.msra.mxu0 0.0
    %2336 = vmatprep.subr.mxu0 0.0
    %2337 = vmatpush1.msra.mxu0 0.0
    %2338 = vmatprep.subr.mxu0 0.0
    %2339 = vmatpush1.msra.mxu0 %v2294
    %2340 = vmatprep.subr.mxu0 0.0
    %2341 = vmatpush1.msra.mxu0 %v2293
    %2342 = vmatprep.subr.mxu0 0.0
    %2343 = vmatpush1.msra.mxu0 %v2292
    %2344 = vmatprep.subr.mxu0 0.0
    %2345 = vmatpush1.msra.mxu0 %v2291
    %2346 = vmatprep.subr.mxu0 0.0
    %2347 = vmatpush2.msra.mxu0 0.0
    %2348 = vmatprep.subr.mxu0 0.0
    %2349 = vmatpush2.msra.mxu0 0.0
    %2350 = vmatprep.subr.mxu0 0.0
    %2351 = vmatpush2.msra.mxu0 0.0
    %2352 = vmatprep.subr.mxu0 0.0
    %2353 = vmatpush2.msra.mxu0 0.0
    %2354 = vmatprep.subr.mxu0 0.0
    %2355 = vmatpush2.msra.mxu0 0.0
    %2356 = vmatprep.subr.mxu0 0.0
    %2357 = vmatpush2.msra.mxu0 0.0
    %2358 = vmatprep.subr.mxu0 0.0
    %2359 = vmatpush2.msra.mxu0 0.0
    %2360 = vmatprep.subr.mxu0 0.0
    %2361 = vmatpush2.msra.mxu0 0.0
    %2362 = vmatprep.subr.mxu0 0.0
    %2363 = vmatpush2.msra.mxu0 0.0
    %2364 = vmatprep.subr.mxu0 0.0
    %2365 = vmatpush2.msra.mxu0 0.0
    %2366 = vmatprep.subr.mxu0 0.0
    %2367 = vmatpush2.msra.mxu0 0.0
    %2368 = vmatprep.subr.mxu0 0.0
    %2369 = vmatpush2.msra.mxu0 0.0
    %2370 = vmatprep.subr.mxu0 0.0
    %2371 = vmatpush2.msra.mxu0 0.0
    %2372 = vmatprep.subr.mxu0 0.0
    %2373 = vmatpush2.msra.mxu0 0.0
    %2374 = vmatprep.subr.mxu0 0.0
    %2375 = vmatpush2.msra.mxu0 0.0
    %2376 = vmatprep.subr.mxu0 0.0
    %2377 = vmatpush2.msra.mxu0 0.0
    %2378 = vmatprep.mubr.f32.mxu0 0.0
    %2379 = vmatmul.mubr.f32.gmra.mxu0 %v2303
    %v2380 = vpop.f32.mrf.mxu0
    %v2381 = vadd.f32 %v2300, %v2380
    %v2382 = vpop.f32.mrf.mxu0
    %2383 = vmatprep.mubr.f32.mxu0 0.0
    %2384 = vmatmul.mubr.f32.gmra.mxu0 %v2306
    %v2385 = vpop.f32.mrf.mxu0
    %v2386 = vadd.f32 %v2300, %v2385
    %v2387 = vpop.f32.mrf.mxu0
    %2388 = vmatprep.mubr.f32.mxu0 0.0
    %2389 = vmatmul.mubr.f32.gmra.mxu0 %v2309
    %v2390 = vpop.f32.mrf.mxu0
    %v2391 = vadd.f32 %v2300, %v2390
    %v2392 = vpop.f32.mrf.mxu0
    %2393 = vmatprep.mubr.f32.mxu0 0.0
    %2394 = vmatmul.mubr.f32.gmra.mxu0 %v2312
    %v2395 = vpop.f32.mrf.mxu0
    %v2396 = vadd.f32 %v2300, %v2395
    %v2397 = vpop.f32.mrf.mxu0
    %2398 = vdwg.mxu0
    %v2399 = vadd.f32 %v419, %v2381
    %v2400 = vadd.f32 %v420, %v2386
    %v2401 = vadd.f32 %v421, %v2391
    %v2402 = vadd.f32 %v422, %v2396
    %v2403 = vld [vmem:[#allocation17] sm:$0x1]
    %v2404 = vld [vmem:[#allocation18] sm:$0x1]
    %v2405 = vsel %vm425, %v2399, 0.0
    %2406 = vadd.xlane.f32.xlu0 %v2405
    %v2407 = vpop.xlane.xlu0 %2406
    %v2408 = vsel %vm425, %v2400, 0.0
    %2409 = vadd.xlane.f32.xlu0 %v2408
    %v2410 = vpop.xlane.xlu0 %2409
    %v2411 = vsel %vm425, %v2401, 0.0
    %2412 = vadd.xlane.f32.xlu0 %v2411
    %v2413 = vpop.xlane.xlu0 %2412
    %v2414 = vsel %vm425, %v2402, 0.0
    %2415 = vadd.xlane.f32.xlu0 %v2414
    %v2416 = vpop.xlane.xlu0 %2415
    %v2417 = vmul.f32 %v2407, %v438
    %v2418 = vmul.f32 %v2410, %v438
    %v2419 = vmul.f32 %v2413, %v438
    %v2420 = vmul.f32 %v2416, %v438
    %v2421 = vsub.f32 %v2399, %v2417
    %v2422 = vsub.f32 %v2400, %v2418
    %v2423 = vsub.f32 %v2401, %v2419
    %v2424 = vsub.f32 %v2402, %v2420
    %v2425 = vmul.f32 %v2421, %v2421
    %v2426 = vmul.f32 %v2422, %v2422
    %v2427 = vmul.f32 %v2423, %v2423
    %v2428 = vmul.f32 %v2424, %v2424
    %v2429 = vsel %vm425, %v2425, 0.0
    %2430 = vadd.xlane.f32.xlu0 %v2429
    %v2431 = vpop.xlane.xlu0 %2430
    %v2432 = vsel %vm425, %v2426, 0.0
    %2433 = vadd.xlane.f32.xlu0 %v2432
    %v2434 = vpop.xlane.xlu0 %2433
    %v2435 = vsel %vm425, %v2427, 0.0
    %2436 = vadd.xlane.f32.xlu0 %v2435
    %v2437 = vpop.xlane.xlu0 %2436
    %v2438 = vsel %vm425, %v2428, 0.0
    %2439 = vadd.xlane.f32.xlu0 %v2438
    %v2440 = vpop.xlane.xlu0 %2439
    %v2441 = vmul.f32 %v2431, %v438
    %v2442 = vmul.f32 %v2434, %v438
    %v2443 = vmul.f32 %v2437, %v438
    %v2444 = vmul.f32 %v2440, %v438
    %v2445 = vadd.f32 %v2441, 1e-05
    %v2446 = vadd.f32 %v2442, 1e-05
    %v2447 = vadd.f32 %v2443, 1e-05
    %v2448 = vadd.f32 %v2444, 1e-05
    %v2449 = vrsqrt.pop %v2445
    %v2450 = vrsqrt.pop %v2446
    %v2451 = vrsqrt.pop %v2447
    %v2452 = vrsqrt.pop %v2448
    %v2453 = vmul.f32 %v2421, %v2449
    %v2454 = vmul.f32 %v2422, %v2450
    %v2455 = vmul.f32 %v2423, %v2451
    %v2456 = vmul.f32 %v2424, %v2452
    %v2458 = vlaneseq
    %v2459 = vshrl.u32 %v2458, 7
    %v2460 = vsub.s32 0, %v2459
    %v2461 = vrot.slane %v2403, %v2460
    %v2463 = vmul.f32 %v2453, %v2461
    %v2464 = vmul.f32 %v2454, %v2461
    %v2465 = vmul.f32 %v2455, %v2461
    %v2466 = vmul.f32 %v2456, %v2461
    %v2468 = vlaneseq
    %v2469 = vshrl.u32 %v2468, 7
    %v2470 = vsub.s32 0, %v2469
    %v2471 = vrot.slane %v2404, %v2470
    %v2473 = vadd.f32 %v2463, %v2471
    %v2474 = vadd.f32 %v2464, %v2471
    %v2475 = vadd.f32 %v2465, %v2471
    %v2476 = vadd.f32 %v2466, %v2471
    %v2477 = vld [vmem:[%s12] sm:$0xff]
    %v2478 = vld [vmem:[%s12 + $0x8] sm:$0xff]
    %v2479 = vld [vmem:[%s12 + $0x10] sm:$0xff]
    %v2480 = vld [vmem:[%s12 + $0x18] sm:$0xff]
    %v2481 = vld [vmem:[#allocation20] sm:$0x1]
    %v2483 = vlaneseq
    %v2484 = vshrl.u32 %v2483, 7
    %v2485 = vsub.s32 0, %v2484
    %v2486 = vrot.slane %v2481, %v2485
    %v2489 = vsel %vm425, %v2473, 0
    %v2492 = vsel %vm425, %v2474, 0
    %v2495 = vsel %vm425, %v2475, 0
    %v2498 = vsel %vm425, %v2476, 0
    %2500 = vmatprep.subr.mxu0 0.0
    %2501 = vmatpush1.msra.mxu0 0.0
    %2502 = vmatprep.subr.mxu0 0.0
    %2503 = vmatpush1.msra.mxu0 0.0
    %2504 = vmatprep.subr.mxu0 0.0
    %2505 = vmatpush1.msra.mxu0 0.0
    %2506 = vmatprep.subr.mxu0 0.0
    %2507 = vmatpush1.msra.mxu0 0.0
    %2508 = vmatprep.subr.mxu0 0.0
    %2509 = vmatpush1.msra.mxu0 0.0
    %2510 = vmatprep.subr.mxu0 0.0
    %2511 = vmatpush1.msra.mxu0 0.0
    %2512 = vmatprep.subr.mxu0 0.0
    %2513 = vmatpush1.msra.mxu0 0.0
    %2514 = vmatprep.subr.mxu0 0.0
    %2515 = vmatpush1.msra.mxu0 0.0
    %2516 = vmatprep.subr.mxu0 0.0
    %2517 = vmatpush1.msra.mxu0 0.0
    %2518 = vmatprep.subr.mxu0 0.0
    %2519 = vmatpush1.msra.mxu0 0.0
    %2520 = vmatprep.subr.mxu0 0.0
    %2521 = vmatpush1.msra.mxu0 0.0
    %2522 = vmatprep.subr.mxu0 0.0
    %2523 = vmatpush1.msra.mxu0 0.0
    %2524 = vmatprep.subr.mxu0 0.0
    %2525 = vmatpush1.msra.mxu0 %v2480
    %2526 = vmatprep.subr.mxu0 0.0
    %2527 = vmatpush1.msra.mxu0 %v2479
    %2528 = vmatprep.subr.mxu0 0.0
    %2529 = vmatpush1.msra.mxu0 %v2478
    %2530 = vmatprep.subr.mxu0 0.0
    %2531 = vmatpush1.msra.mxu0 %v2477
    %2532 = vmatprep.subr.mxu0 0.0
    %2533 = vmatpush2.msra.mxu0 0.0
    %2534 = vmatprep.subr.mxu0 0.0
    %2535 = vmatpush2.msra.mxu0 0.0
    %2536 = vmatprep.subr.mxu0 0.0
    %2537 = vmatpush2.msra.mxu0 0.0
    %2538 = vmatprep.subr.mxu0 0.0
    %2539 = vmatpush2.msra.mxu0 0.0
    %2540 = vmatprep.subr.mxu0 0.0
    %2541 = vmatpush2.msra.mxu0 0.0
    %2542 = vmatprep.subr.mxu0 0.0
    %2543 = vmatpush2.msra.mxu0 0.0
    %2544 = vmatprep.subr.mxu0 0.0
    %2545 = vmatpush2.msra.mxu0 0.0
    %2546 = vmatprep.subr.mxu0 0.0
    %2547 = vmatpush2.msra.mxu0 0.0
    %2548 = vmatprep.subr.mxu0 0.0
    %2549 = vmatpush2.msra.mxu0 0.0
    %2550 = vmatprep.subr.mxu0 0.0
    %2551 = vmatpush2.msra.mxu0 0.0
    %2552 = vmatprep.subr.mxu0 0.0
    %2553 = vmatpush2.msra.mxu0 0.0
    %2554 = vmatprep.subr.mxu0 0.0
    %2555 = vmatpush2.msra.mxu0 0.0
    %2556 = vmatprep.subr.mxu0 0.0
    %2557 = vmatpush2.msra.mxu0 0.0
    %2558 = vmatprep.subr.mxu0 0.0
    %2559 = vmatpush2.msra.mxu0 0.0
    %2560 = vmatprep.subr.mxu0 0.0
    %2561 = vmatpush2.msra.mxu0 0.0
    %2562 = vmatprep.subr.mxu0 0.0
    %2563 = vmatpush2.msra.mxu0 0.0
    %2564 = vmatprep.mubr.f32.mxu0 0.0
    %2565 = vmatmul.mubr.f32.gmra.mxu0 %v2489
    %v2566 = vpop.f32.mrf.mxu0
    %v2567 = vadd.f32 %v2486, %v2566
    %v2568 = vpop.f32.mrf.mxu0
    %2569 = vmatprep.mubr.f32.mxu0 0.0
    %2570 = vmatmul.mubr.f32.gmra.mxu0 %v2492
    %v2571 = vpop.f32.mrf.mxu0
    %v2572 = vadd.f32 %v2486, %v2571
    %v2573 = vpop.f32.mrf.mxu0
    %2574 = vmatprep.mubr.f32.mxu0 0.0
    %2575 = vmatmul.mubr.f32.gmra.mxu0 %v2495
    %v2576 = vpop.f32.mrf.mxu0
    %v2577 = vadd.f32 %v2486, %v2576
    %v2578 = vpop.f32.mrf.mxu0
    %2579 = vmatprep.mubr.f32.mxu0 0.0
    %2580 = vmatmul.mubr.f32.gmra.mxu0 %v2498
    %v2581 = vpop.f32.mrf.mxu0
    %v2582 = vadd.f32 %v2486, %v2581
    %v2583 = vpop.f32.mrf.mxu0
    %2584 = vdwg.mxu0
    %v2585 = vmul.f32 %v2567, 0.5
    %v2586 = vmul.f32 %v2572, 0.5
    %v2587 = vmul.f32 %v2577, 0.5
    %v2588 = vmul.f32 %v2582, 0.5
    %v2589 = vmul.f32 %v2567, 0.70710677
    %v2590 = vmul.f32 %v2572, 0.70710677
    %v2591 = vmul.f32 %v2577, 0.70710677
    %v2592 = vmul.f32 %v2582, 0.70710677
    %v2593 = verf.f32.pop %v2589
    %v2594 = verf.f32.pop %v2590
    %v2595 = verf.f32.pop %v2591
    %v2596 = verf.f32.pop %v2592
    %v2597 = vadd.f32 %v2593, 1.0
    %v2598 = vadd.f32 %v2594, 1.0
    %v2599 = vadd.f32 %v2595, 1.0
    %v2600 = vadd.f32 %v2596, 1.0
    %v2601 = vmul.f32 %v2585, %v2597
    %v2602 = vmul.f32 %v2586, %v2598
    %v2603 = vmul.f32 %v2587, %v2599
    %v2604 = vmul.f32 %v2588, %v2600
    %v2605 = vld [vmem:[%s14] sm:$0xff]
    %v2606 = vld [vmem:[%s14 + $0x8] sm:$0xff]
    %v2607 = vld [vmem:[%s14 + $0x10] sm:$0xff]
    %v2608 = vld [vmem:[%s14 + $0x18] sm:$0xff]
    %v2609 = vld [vmem:[%s14 + $0x20] sm:$0xff]
    %v2610 = vld [vmem:[%s14 + $0x28] sm:$0xff]
    %v2611 = vld [vmem:[%s14 + $0x30] sm:$0xff]
    %v2612 = vld [vmem:[%s14 + $0x38] sm:$0xff]
    %v2613 = vld [vmem:[#allocation21] sm:$0x1]
    %v2615 = vlaneseq
    %v2616 = vshrl.u32 %v2615, 7
    %v2617 = vsub.s32 0, %v2616
    %v2618 = vrot.slane %v2613, %v2617
    %vm2620 = vcmask 523264
    %v2622 = vsel %vm2620, %v2601, 0
    %v2625 = vsel %vm2620, %v2602, 0
    %v2628 = vsel %vm2620, %v2603, 0
    %v2631 = vsel %vm2620, %v2604, 0
    %2633 = vmatprep.subr.mxu0 0.0
    %2634 = vmatpush1.msra.mxu0 0.0
    %2635 = vmatprep.subr.mxu0 0.0
    %2636 = vmatpush1.msra.mxu0 0.0
    %2637 = vmatprep.subr.mxu0 0.0
    %2638 = vmatpush1.msra.mxu0 0.0
    %2639 = vmatprep.subr.mxu0 0.0
    %2640 = vmatpush1.msra.mxu0 0.0
    %2641 = vmatprep.subr.mxu0 0.0
    %2642 = vmatpush1.msra.mxu0 0.0
    %2643 = vmatprep.subr.mxu0 0.0
    %2644 = vmatpush1.msra.mxu0 0.0
    %2645 = vmatprep.subr.mxu0 0.0
    %2646 = vmatpush1.msra.mxu0 0.0
    %2647 = vmatprep.subr.mxu0 0.0
    %2648 = vmatpush1.msra.mxu0 0.0
    %2649 = vmatprep.subr.mxu0 0.0
    %2650 = vmatpush1.msra.mxu0 %v2612
    %2651 = vmatprep.subr.mxu0 0.0
    %2652 = vmatpush1.msra.mxu0 %v2611
    %2653 = vmatprep.subr.mxu0 0.0
    %2654 = vmatpush1.msra.mxu0 %v2610
    %2655 = vmatprep.subr.mxu0 0.0
    %2656 = vmatpush1.msra.mxu0 %v2609
    %2657 = vmatprep.subr.mxu0 0.0
    %2658 = vmatpush1.msra.mxu0 %v2608
    %2659 = vmatprep.subr.mxu0 0.0
    %2660 = vmatpush1.msra.mxu0 %v2607
    %2661 = vmatprep.subr.mxu0 0.0
    %2662 = vmatpush1.msra.mxu0 %v2606
    %2663 = vmatprep.subr.mxu0 0.0
    %2664 = vmatpush1.msra.mxu0 %v2605
    %2665 = vmatprep.subr.mxu0 0.0
    %2666 = vmatpush2.msra.mxu0 0.0
    %2667 = vmatprep.subr.mxu0 0.0
    %2668 = vmatpush2.msra.mxu0 0.0
    %2669 = vmatprep.subr.mxu0 0.0
    %2670 = vmatpush2.msra.mxu0 0.0
    %2671 = vmatprep.subr.mxu0 0.0
    %2672 = vmatpush2.msra.mxu0 0.0
    %2673 = vmatprep.subr.mxu0 0.0
    %2674 = vmatpush2.msra.mxu0 0.0
    %2675 = vmatprep.subr.mxu0 0.0
    %2676 = vmatpush2.msra.mxu0 0.0
    %2677 = vmatprep.subr.mxu0 0.0
    %2678 = vmatpush2.msra.mxu0 0.0
    %2679 = vmatprep.subr.mxu0 0.0
    %2680 = vmatpush2.msra.mxu0 0.0
    %2681 = vmatprep.subr.mxu0 0.0
    %2682 = vmatpush2.msra.mxu0 0.0
    %2683 = vmatprep.subr.mxu0 0.0
    %2684 = vmatpush2.msra.mxu0 0.0
    %2685 = vmatprep.subr.mxu0 0.0
    %2686 = vmatpush2.msra.mxu0 0.0
    %2687 = vmatprep.subr.mxu0 0.0
    %2688 = vmatpush2.msra.mxu0 0.0
    %2689 = vmatprep.subr.mxu0 0.0
    %2690 = vmatpush2.msra.mxu0 0.0
    %2691 = vmatprep.subr.mxu0 0.0
    %2692 = vmatpush2.msra.mxu0 0.0
    %2693 = vmatprep.subr.mxu0 0.0
    %2694 = vmatpush2.msra.mxu0 0.0
    %2695 = vmatprep.subr.mxu0 0.0
    %2696 = vmatpush2.msra.mxu0 0.0
    %2697 = vmatprep.mubr.f32.mxu0 0.0
    %2698 = vmatmul.mubr.f32.gmra.mxu0 %v2622
    %v2699 = vpop.f32.mrf.mxu0
    %v2700 = vadd.f32 %v2618, %v2699
    %v2701 = vpop.f32.mrf.mxu0
    %2702 = vmatprep.mubr.f32.mxu0 0.0
    %2703 = vmatmul.mubr.f32.gmra.mxu0 %v2625
    %v2704 = vpop.f32.mrf.mxu0
    %v2705 = vadd.f32 %v2618, %v2704
    %v2706 = vpop.f32.mrf.mxu0
    %2707 = vmatprep.mubr.f32.mxu0 0.0
    %2708 = vmatmul.mubr.f32.gmra.mxu0 %v2628
    %v2709 = vpop.f32.mrf.mxu0
    %v2710 = vadd.f32 %v2618, %v2709
    %v2711 = vpop.f32.mrf.mxu0
    %2712 = vmatprep.mubr.f32.mxu0 0.0
    %2713 = vmatmul.mubr.f32.gmra.mxu0 %v2631
    %v2714 = vpop.f32.mrf.mxu0
    %v2715 = vadd.f32 %v2618, %v2714
    %v2716 = vpop.f32.mrf.mxu0
    %2717 = vdwg.mxu0
    %v2718 = vadd.f32 %v2399, %v2700
    %v2719 = vadd.f32 %v2400, %v2705
    %v2720 = vadd.f32 %v2401, %v2710
    %v2721 = vadd.f32 %v2402, %v2715
    %s2722 = scalar_lea.vmem [#allocation11], 1
    %v2723 = vld [vmem:[%s2722] sm:$0x1]
    %s2724 = scalar_lea.vmem [#allocation12], 1
    %v2725 = vld [vmem:[%s2724] sm:$0x1]
    %v2726 = vsel %vm425, %v2718, 0.0
    %2727 = vadd.xlane.f32.xlu0 %v2726
    %v2728 = vpop.xlane.xlu0 %2727
    %v2729 = vsel %vm425, %v2719, 0.0
    %2730 = vadd.xlane.f32.xlu0 %v2729
    %v2731 = vpop.xlane.xlu0 %2730
    %v2732 = vsel %vm425, %v2720, 0.0
    %2733 = vadd.xlane.f32.xlu0 %v2732
    %v2734 = vpop.xlane.xlu0 %2733
    %v2735 = vsel %vm425, %v2721, 0.0
    %2736 = vadd.xlane.f32.xlu0 %v2735
    %v2737 = vpop.xlane.xlu0 %2736
    %v2738 = vmul.f32 %v2728, %v438
    %v2739 = vmul.f32 %v2731, %v438
    %v2740 = vmul.f32 %v2734, %v438
    %v2741 = vmul.f32 %v2737, %v438
    %v2742 = vsub.f32 %v2718, %v2738
    %v2743 = vsub.f32 %v2719, %v2739
    %v2744 = vsub.f32 %v2720, %v2740
    %v2745 = vsub.f32 %v2721, %v2741
    %v2746 = vmul.f32 %v2742, %v2742
    %v2747 = vmul.f32 %v2743, %v2743
    %v2748 = vmul.f32 %v2744, %v2744
    %v2749 = vmul.f32 %v2745, %v2745
    %v2750 = vsel %vm425, %v2746, 0.0
    %2751 = vadd.xlane.f32.xlu0 %v2750
    %v2752 = vpop.xlane.xlu0 %2751
    %v2753 = vsel %vm425, %v2747, 0.0
    %2754 = vadd.xlane.f32.xlu0 %v2753
    %v2755 = vpop.xlane.xlu0 %2754
    %v2756 = vsel %vm425, %v2748, 0.0
    %2757 = vadd.xlane.f32.xlu0 %v2756
    %v2758 = vpop.xlane.xlu0 %2757
    %v2759 = vsel %vm425, %v2749, 0.0
    %2760 = vadd.xlane.f32.xlu0 %v2759
    %v2761 = vpop.xlane.xlu0 %2760
    %v2762 = vmul.f32 %v2752, %v438
    %v2763 = vmul.f32 %v2755, %v438
    %v2764 = vmul.f32 %v2758, %v438
    %v2765 = vmul.f32 %v2761, %v438
    %v2766 = vadd.f32 %v2762, 1e-05
    %v2767 = vadd.f32 %v2763, 1e-05
    %v2768 = vadd.f32 %v2764, 1e-05
    %v2769 = vadd.f32 %v2765, 1e-05
    %v2770 = vrsqrt.pop %v2766
    %v2771 = vrsqrt.pop %v2767
    %v2772 = vrsqrt.pop %v2768
    %v2773 = vrsqrt.pop %v2769
    %v2774 = vmul.f32 %v2742, %v2770
    %v2775 = vmul.f32 %v2743, %v2771
    %v2776 = vmul.f32 %v2744, %v2772
    %v2777 = vmul.f32 %v2745, %v2773
    %v2779 = vlaneseq
    %v2780 = vshrl.u32 %v2779, 7
    %v2781 = vsub.s32 0, %v2780
    %v2782 = vrot.slane %v2723, %v2781
    %v2784 = vmul.f32 %v2774, %v2782
    %v2785 = vmul.f32 %v2775, %v2782
    %v2786 = vmul.f32 %v2776, %v2782
    %v2787 = vmul.f32 %v2777, %v2782
    %v2789 = vlaneseq
    %v2790 = vshrl.u32 %v2789, 7
    %v2791 = vsub.s32 0, %v2790
    %v2792 = vrot.slane %v2725, %v2791
    %v2794 = vadd.f32 %v2784, %v2792
    %v2795 = vadd.f32 %v2785, %v2792
    %v2796 = vadd.f32 %v2786, %v2792
    %v2797 = vadd.f32 %v2787, %v2792
    %s2798 = scalar_lea.vmem %s6, 32
    %v2799 = vld [vmem:[%s2798] sm:$0xff]
    %v2800 = vld [vmem:[%s2798 + $0x8] sm:$0xff]
    %v2801 = vld [vmem:[%s2798 + $0x10] sm:$0xff]
    %v2802 = vld [vmem:[%s2798 + $0x18] sm:$0xff]
    %s2803 = scalar_lea.vmem [#allocation14], 1
    %v2804 = vld [vmem:[%s2803] sm:$0x1]
    %v2806 = vlaneseq
    %v2807 = vshrl.u32 %v2806, 7
    %v2808 = vsub.s32 0, %v2807
    %v2809 = vrot.slane %v2804, %v2808
    %v2812 = vsel %vm425, %v2794, 0
    %v2815 = vsel %vm425, %v2795, 0
    %v2818 = vsel %vm425, %v2796, 0
    %v2821 = vsel %vm425, %v2797, 0
    %2823 = vmatprep.subr.mxu0 0.0
    %2824 = vmatpush1.msra.mxu0 0.0
    %2825 = vmatprep.subr.mxu0 0.0
    %2826 = vmatpush1.msra.mxu0 0.0
    %2827 = vmatprep.subr.mxu0 0.0
    %2828 = vmatpush1.msra.mxu0 0.0
    %2829 = vmatprep.subr.mxu0 0.0
    %2830 = vmatpush1.msra.mxu0 0.0
    %2831 = vmatprep.subr.mxu0 0.0
    %2832 = vmatpush1.msra.mxu0 0.0
    %2833 = vmatprep.subr.mxu0 0.0
    %2834 = vmatpush1.msra.mxu0 0.0
    %2835 = vmatprep.subr.mxu0 0.0
    %2836 = vmatpush1.msra.mxu0 0.0
    %2837 = vmatprep.subr.mxu0 0.0
    %2838 = vmatpush1.msra.mxu0 0.0
    %2839 = vmatprep.subr.mxu0 0.0
    %2840 = vmatpush1.msra.mxu0 0.0
    %2841 = vmatprep.subr.mxu0 0.0
    %2842 = vmatpush1.msra.mxu0 0.0
    %2843 = vmatprep.subr.mxu0 0.0
    %2844 = vmatpush1.msra.mxu0 0.0
    %2845 = vmatprep.subr.mxu0 0.0
    %2846 = vmatpush1.msra.mxu0 0.0
    %2847 = vmatprep.subr.mxu0 0.0
    %2848 = vmatpush1.msra.mxu0 %v2802
    %2849 = vmatprep.subr.mxu0 0.0
    %2850 = vmatpush1.msra.mxu0 %v2801
    %2851 = vmatprep.subr.mxu0 0.0
    %2852 = vmatpush1.msra.mxu0 %v2800
    %2853 = vmatprep.subr.mxu0 0.0
    %2854 = vmatpush1.msra.mxu0 %v2799
    %2855 = vmatprep.subr.mxu0 0.0
    %2856 = vmatpush2.msra.mxu0 0.0
    %2857 = vmatprep.subr.mxu0 0.0
    %2858 = vmatpush2.msra.mxu0 0.0
    %2859 = vmatprep.subr.mxu0 0.0
    %2860 = vmatpush2.msra.mxu0 0.0
    %2861 = vmatprep.subr.mxu0 0.0
    %2862 = vmatpush2.msra.mxu0 0.0
    %2863 = vmatprep.subr.mxu0 0.0
    %2864 = vmatpush2.msra.mxu0 0.0
    %2865 = vmatprep.subr.mxu0 0.0
    %2866 = vmatpush2.msra.mxu0 0.0
    %2867 = vmatprep.subr.mxu0 0.0
    %2868 = vmatpush2.msra.mxu0 0.0
    %2869 = vmatprep.subr.mxu0 0.0
    %2870 = vmatpush2.msra.mxu0 0.0
    %2871 = vmatprep.subr.mxu0 0.0
    %2872 = vmatpush2.msra.mxu0 0.0
    %2873 = vmatprep.subr.mxu0 0.0
    %2874 = vmatpush2.msra.mxu0 0.0
    %2875 = vmatprep.subr.mxu0 0.0
    %2876 = vmatpush2.msra.mxu0 0.0
    %2877 = vmatprep.subr.mxu0 0.0
    %2878 = vmatpush2.msra.mxu0 0.0
    %2879 = vmatprep.subr.mxu0 0.0
    %2880 = vmatpush2.msra.mxu0 0.0
    %2881 = vmatprep.subr.mxu0 0.0
    %2882 = vmatpush2.msra.mxu0 0.0
    %2883 = vmatprep.subr.mxu0 0.0
    %2884 = vmatpush2.msra.mxu0 0.0
    %2885 = vmatprep.subr.mxu0 0.0
    %2886 = vmatpush2.msra.mxu0 0.0
    %2887 = vmatprep.mubr.f32.mxu0 0.0
    %2888 = vmatmul.mubr.f32.gmra.mxu0 %v2812
    %v2889 = vpop.f32.mrf.mxu0
    %v2890 = vadd.f32 %v2809, %v2889
    %v2891 = vpop.f32.mrf.mxu0
    %2892 = vmatprep.mubr.f32.mxu0 0.0
    %2893 = vmatmul.mubr.f32.gmra.mxu0 %v2815
    %v2894 = vpop.f32.mrf.mxu0
    %v2895 = vadd.f32 %v2809, %v2894
    %v2896 = vpop.f32.mrf.mxu0
    %2897 = vmatprep.mubr.f32.mxu0 0.0
    %2898 = vmatmul.mubr.f32.gmra.mxu0 %v2818
    %v2899 = vpop.f32.mrf.mxu0
    %v2900 = vadd.f32 %v2809, %v2899
    %v2901 = vpop.f32.mrf.mxu0
    %2902 = vmatprep.mubr.f32.mxu0 0.0
    %2903 = vmatmul.mubr.f32.gmra.mxu0 %v2821
    %v2904 = vpop.f32.mrf.mxu0
    %v2905 = vadd.f32 %v2809, %v2904
    %v2906 = vpop.f32.mrf.mxu0
    %2907 = vdwg.mxu0
    %2910 = vrot.lane.b32.xlu0 %v2890, 96
    %v2911 = vpop.permute.xlu0 %2910
    %2912 = vrot.lane.b32.xlu0 %v2895, 96
    %v2913 = vpop.permute.xlu0 %2912
    %v2914 = vsel %vm613, %v2890, 0
    %v2916 = vsel %vm613, %v2895, 0
    %v2918 = vsel %vm613, %v2911, 0
    %v2920 = vsel %vm613, %v2913, 0
    %2922 = vmatprep.subr.mxu0 0.0
    %2923 = vmatpush1.xpose.msra.mxu0 0.0
    %2924 = vmatprep.subr.mxu0 0.0
    %2925 = vmatpush1.xpose.msra.mxu0 0.0
    %2926 = vmatprep.subr.mxu0 0.0
    %2927 = vmatpush1.xpose.msra.mxu0 0.0
    %2928 = vmatprep.subr.mxu0 0.0
    %2929 = vmatpush1.xpose.msra.mxu0 0.0
    %2930 = vmatprep.subr.mxu0 0.0
    %2931 = vmatpush1.xpose.msra.mxu0 0.0
    %2932 = vmatprep.subr.mxu0 0.0
    %2933 = vmatpush1.xpose.msra.mxu0 0.0
    %2934 = vmatprep.subr.mxu0 0.0
    %2935 = vmatpush1.xpose.msra.mxu0 0.0
    %2936 = vmatprep.subr.mxu0 0.0
    %2937 = vmatpush1.xpose.msra.mxu0 0.0
    %2938 = vmatprep.subr.mxu0 0.0
    %2939 = vmatpush1.xpose.msra.mxu0 0.0
    %2940 = vmatprep.subr.mxu0 0.0
    %2941 = vmatpush1.xpose.msra.mxu0 0.0
    %2942 = vmatprep.subr.mxu0 0.0
    %2943 = vmatpush1.xpose.msra.mxu0 0.0
    %2944 = vmatprep.subr.mxu0 0.0
    %2945 = vmatpush1.xpose.msra.mxu0 0.0
    %2946 = vmatprep.subr.mxu0 0.0
    %2947 = vmatpush1.xpose.msra.mxu0 0.0
    %2948 = vmatprep.subr.mxu0 0.0
    %2949 = vmatpush1.xpose.msra.mxu0 0.0
    %2950 = vmatprep.subr.mxu0 0.0
    %2951 = vmatpush1.xpose.msra.mxu0 %v2920
    %2952 = vmatprep.subr.mxu0 0.0
    %2953 = vmatpush1.xpose.msra.mxu0 %v2918
    %2954 = vmatprep.subr.mxu0 0.0
    %2955 = vmatpush2.xpose.msra.mxu0 0.0
    %2956 = vmatprep.subr.mxu0 0.0
    %2957 = vmatpush2.xpose.msra.mxu0 0.0
    %2958 = vmatprep.subr.mxu0 0.0
    %2959 = vmatpush2.xpose.msra.mxu0 0.0
    %2960 = vmatprep.subr.mxu0 0.0
    %2961 = vmatpush2.xpose.msra.mxu0 0.0
    %2962 = vmatprep.subr.mxu0 0.0
    %2963 = vmatpush2.xpose.msra.mxu0 0.0
    %2964 = vmatprep.subr.mxu0 0.0
    %2965 = vmatpush2.xpose.msra.mxu0 0.0
    %2966 = vmatprep.subr.mxu0 0.0
    %2967 = vmatpush2.xpose.msra.mxu0 0.0
    %2968 = vmatprep.subr.mxu0 0.0
    %2969 = vmatpush2.xpose.msra.mxu0 0.0
    %2970 = vmatprep.subr.mxu0 0.0
    %2971 = vmatpush2.xpose.msra.mxu0 0.0
    %2972 = vmatprep.subr.mxu0 0.0
    %2973 = vmatpush2.xpose.msra.mxu0 0.0
    %2974 = vmatprep.subr.mxu0 0.0
    %2975 = vmatpush2.xpose.msra.mxu0 0.0
    %2976 = vmatprep.subr.mxu0 0.0
    %2977 = vmatpush2.xpose.msra.mxu0 0.0
    %2978 = vmatprep.subr.mxu0 0.0
    %2979 = vmatpush2.xpose.msra.mxu0 0.0
    %2980 = vmatprep.subr.mxu0 0.0
    %2981 = vmatpush2.xpose.msra.mxu0 0.0
    %2982 = vmatprep.subr.mxu0 0.0
    %2983 = vmatpush2.xpose.msra.mxu0 0.0
    %2984 = vmatprep.subr.mxu0 0.0
    %2985 = vmatpush2.xpose.msra.mxu0 0.0
    %2986 = vmatprep.mubr.f32.mxu0 0.0
    %2987 = vmatmul.mubr.f32.gmra.mxu0 %v2914
    %v2988 = vpop.f32.mrf.mxu0
    %v2989 = vadd.f32 0.0, %v2988
    %v2990 = vpop.f32.mrf.mxu0
    %2991 = vmatprep.mubr.f32.mxu0 0.0
    %2992 = vmatmul.mubr.f32.gmra.mxu0 %v2916
    %v2993 = vpop.f32.mrf.mxu0
    %v2994 = vadd.f32 0.0, %v2993
    %v2995 = vpop.f32.mrf.mxu0
    %2996 = vdwg.mxu0
    %2999 = vrot.lane.b32.xlu0 %v2900, 96
    %v3000 = vpop.permute.xlu0 %2999
    %3001 = vrot.lane.b32.xlu0 %v2905, 96
    %v3002 = vpop.permute.xlu0 %3001
    %v3003 = vsel %vm613, %v2900, 0
    %v3005 = vsel %vm613, %v2905, 0
    %v3007 = vsel %vm613, %v3000, 0
    %v3009 = vsel %vm613, %v3002, 0
    %3011 = vmatprep.subr.mxu0 0.0
    %3012 = vmatpush1.xpose.msra.mxu0 0.0
    %3013 = vmatprep.subr.mxu0 0.0
    %3014 = vmatpush1.xpose.msra.mxu0 0.0
    %3015 = vmatprep.subr.mxu0 0.0
    %3016 = vmatpush1.xpose.msra.mxu0 0.0
    %3017 = vmatprep.subr.mxu0 0.0
    %3018 = vmatpush1.xpose.msra.mxu0 0.0
    %3019 = vmatprep.subr.mxu0 0.0
    %3020 = vmatpush1.xpose.msra.mxu0 0.0
    %3021 = vmatprep.subr.mxu0 0.0
    %3022 = vmatpush1.xpose.msra.mxu0 0.0
    %3023 = vmatprep.subr.mxu0 0.0
    %3024 = vmatpush1.xpose.msra.mxu0 0.0
    %3025 = vmatprep.subr.mxu0 0.0
    %3026 = vmatpush1.xpose.msra.mxu0 0.0
    %3027 = vmatprep.subr.mxu0 0.0
    %3028 = vmatpush1.xpose.msra.mxu0 0.0
    %3029 = vmatprep.subr.mxu0 0.0
    %3030 = vmatpush1.xpose.msra.mxu0 0.0
    %3031 = vmatprep.subr.mxu0 0.0
    %3032 = vmatpush1.xpose.msra.mxu0 0.0
    %3033 = vmatprep.subr.mxu0 0.0
    %3034 = vmatpush1.xpose.msra.mxu0 0.0
    %3035 = vmatprep.subr.mxu0 0.0
    %3036 = vmatpush1.xpose.msra.mxu0 0.0
    %3037 = vmatprep.subr.mxu0 0.0
    %3038 = vmatpush1.xpose.msra.mxu0 0.0
    %3039 = vmatprep.subr.mxu0 0.0
    %3040 = vmatpush1.xpose.msra.mxu0 %v3009
    %3041 = vmatprep.subr.mxu0 0.0
    %3042 = vmatpush1.xpose.msra.mxu0 %v3007
    %3043 = vmatprep.subr.mxu0 0.0
    %3044 = vmatpush2.xpose.msra.mxu0 0.0
    %3045 = vmatprep.subr.mxu0 0.0
    %3046 = vmatpush2.xpose.msra.mxu0 0.0
    %3047 = vmatprep.subr.mxu0 0.0
    %3048 = vmatpush2.xpose.msra.mxu0 0.0
    %3049 = vmatprep.subr.mxu0 0.0
    %3050 = vmatpush2.xpose.msra.mxu0 0.0
    %3051 = vmatprep.subr.mxu0 0.0
    %3052 = vmatpush2.xpose.msra.mxu0 0.0
    %3053 = vmatprep.subr.mxu0 0.0
    %3054 = vmatpush2.xpose.msra.mxu0 0.0
    %3055 = vmatprep.subr.mxu0 0.0
    %3056 = vmatpush2.xpose.msra.mxu0 0.0
    %3057 = vmatprep.subr.mxu0 0.0
    %3058 = vmatpush2.xpose.msra.mxu0 0.0
    %3059 = vmatprep.subr.mxu0 0.0
    %3060 = vmatpush2.xpose.msra.mxu0 0.0
    %3061 = vmatprep.subr.mxu0 0.0
    %3062 = vmatpush2.xpose.msra.mxu0 0.0
    %3063 = vmatprep.subr.mxu0 0.0
    %3064 = vmatpush2.xpose.msra.mxu0 0.0
    %3065 = vmatprep.subr.mxu0 0.0
    %3066 = vmatpush2.xpose.msra.mxu0 0.0
    %3067 = vmatprep.subr.mxu0 0.0
    %3068 = vmatpush2.xpose.msra.mxu0 0.0
    %3069 = vmatprep.subr.mxu0 0.0
    %3070 = vmatpush2.xpose.msra.mxu0 0.0
    %3071 = vmatprep.subr.mxu0 0.0
    %3072 = vmatpush2.xpose.msra.mxu0 0.0
    %3073 = vmatprep.subr.mxu0 0.0
    %3074 = vmatpush2.xpose.msra.mxu0 0.0
    %3075 = vmatprep.mubr.f32.mxu0 0.0
    %3076 = vmatmul.mubr.f32.gmra.mxu0 %v3003
    %v3077 = vpop.f32.mrf.mxu0
    %v3078 = vadd.f32 0.0, %v3077
    %v3079 = vpop.f32.mrf.mxu0
    %3080 = vmatprep.mubr.f32.mxu0 0.0
    %3081 = vmatmul.mubr.f32.gmra.mxu0 %v3005
    %v3082 = vpop.f32.mrf.mxu0
    %v3083 = vadd.f32 0.0, %v3082
    %v3084 = vpop.f32.mrf.mxu0
    %3085 = vdwg.mxu0
    %v3086 = vmul.f32 %v2989, 0.35355338
    %v3087 = vmul.f32 %v2994, 0.35355338
    %v3088 = vmul.f32 %v3078, 0.35355338
    %v3089 = vmul.f32 %v3083, 0.35355338
    %v3090 = vsel %vm308, %v3086, -inf
    %3091 = vmax.xlane.f32.xlu0 %v3090
    %v3092 = vpop.xlane.xlu0 %3091
    %v3093 = vsel %vm308, %v3087, -inf
    %3094 = vmax.xlane.f32.xlu0 %v3093
    %v3095 = vpop.xlane.xlu0 %3094
    %v3096 = vsel %vm308, %v3088, -inf
    %3097 = vmax.xlane.f32.xlu0 %v3096
    %v3098 = vpop.xlane.xlu0 %3097
    %v3099 = vsel %vm308, %v3089, -inf
    %3100 = vmax.xlane.f32.xlu0 %v3099
    %v3101 = vpop.xlane.xlu0 %3100
    %v3102 = vsub.f32 %v3086, %v3092
    %v3103 = vsub.f32 %v3087, %v3095
    %v3104 = vsub.f32 %v3088, %v3098
    %v3105 = vsub.f32 %v3089, %v3101
    %v3106 = vmul.f32 %v3102, 1.442695
    %v3107 = vpow.pop %v3106
    %v3108 = vmul.f32 %v3103, 1.442695
    %v3109 = vpow.pop %v3108
    %v3110 = vmul.f32 %v3104, 1.442695
    %v3111 = vpow.pop %v3110
    %v3112 = vmul.f32 %v3105, 1.442695
    %v3113 = vpow.pop %v3112
    %v3114 = vsel %vm308, %v3107, 0.0
    %3115 = vadd.xlane.f32.xlu0 %v3114
    %v3116 = vpop.xlane.xlu0 %3115
    %v3117 = vsel %vm308, %v3109, 0.0
    %3118 = vadd.xlane.f32.xlu0 %v3117
    %v3119 = vpop.xlane.xlu0 %3118
    %v3120 = vsel %vm308, %v3111, 0.0
    %3121 = vadd.xlane.f32.xlu0 %v3120
    %v3122 = vpop.xlane.xlu0 %3121
    %v3123 = vsel %vm308, %v3113, 0.0
    %3124 = vadd.xlane.f32.xlu0 %v3123
    %v3125 = vpop.xlane.xlu0 %3124
    %v3126 = vrcp.pop %v3116
    %v3127 = vmul.f32 %v3107, %v3126
    %v3128 = vrcp.pop %v3119
    %v3129 = vmul.f32 %v3109, %v3128
    %v3130 = vrcp.pop %v3122
    %v3131 = vmul.f32 %v3111, %v3130
    %v3132 = vrcp.pop %v3125
    %v3133 = vmul.f32 %v3113, %v3132
    %3134 = vrot.lane.b32.xlu0 %v2890, 64
    %v3135 = vpop.permute.xlu0 %3134
    %3136 = vrot.lane.b32.xlu0 %v2895, 64
    %v3137 = vpop.permute.xlu0 %3136
    %v3141 = vsel %vm308, %v3127, 0
    %v3144 = vsel %vm308, %v3129, 0
    %3146 = vmatprep.subr.mxu0 0.0
    %3147 = vmatpush1.msra.mxu0 0.0
    %3148 = vmatprep.subr.mxu0 0.0
    %3149 = vmatpush1.msra.mxu0 0.0
    %3150 = vmatprep.subr.mxu0 0.0
    %3151 = vmatpush1.msra.mxu0 0.0
    %3152 = vmatprep.subr.mxu0 0.0
    %3153 = vmatpush1.msra.mxu0 0.0
    %3154 = vmatprep.subr.mxu0 0.0
    %3155 = vmatpush1.msra.mxu0 0.0
    %3156 = vmatprep.subr.mxu0 0.0
    %3157 = vmatpush1.msra.mxu0 0.0
    %3158 = vmatprep.subr.mxu0 0.0
    %3159 = vmatpush1.msra.mxu0 0.0
    %3160 = vmatprep.subr.mxu0 0.0
    %3161 = vmatpush1.msra.mxu0 0.0
    %3162 = vmatprep.subr.mxu0 0.0
    %3163 = vmatpush1.msra.mxu0 0.0
    %3164 = vmatprep.subr.mxu0 0.0
    %3165 = vmatpush1.msra.mxu0 0.0
    %3166 = vmatprep.subr.mxu0 0.0
    %3167 = vmatpush1.msra.mxu0 0.0
    %3168 = vmatprep.subr.mxu0 0.0
    %3169 = vmatpush1.msra.mxu0 0.0
    %3170 = vmatprep.subr.mxu0 0.0
    %3171 = vmatpush1.msra.mxu0 0.0
    %3172 = vmatprep.subr.mxu0 0.0
    %3173 = vmatpush1.msra.mxu0 0.0
    %3174 = vmatprep.subr.mxu0 0.0
    %3175 = vmatpush1.msra.mxu0 %v3137
    %3176 = vmatprep.subr.mxu0 0.0
    %3177 = vmatpush1.msra.mxu0 %v3135
    %3178 = vmatprep.subr.mxu0 0.0
    %3179 = vmatpush2.msra.mxu0 0.0
    %3180 = vmatprep.subr.mxu0 0.0
    %3181 = vmatpush2.msra.mxu0 0.0
    %3182 = vmatprep.subr.mxu0 0.0
    %3183 = vmatpush2.msra.mxu0 0.0
    %3184 = vmatprep.subr.mxu0 0.0
    %3185 = vmatpush2.msra.mxu0 0.0
    %3186 = vmatprep.subr.mxu0 0.0
    %3187 = vmatpush2.msra.mxu0 0.0
    %3188 = vmatprep.subr.mxu0 0.0
    %3189 = vmatpush2.msra.mxu0 0.0
    %3190 = vmatprep.subr.mxu0 0.0
    %3191 = vmatpush2.msra.mxu0 0.0
    %3192 = vmatprep.subr.mxu0 0.0
    %3193 = vmatpush2.msra.mxu0 0.0
    %3194 = vmatprep.subr.mxu0 0.0
    %3195 = vmatpush2.msra.mxu0 0.0
    %3196 = vmatprep.subr.mxu0 0.0
    %3197 = vmatpush2.msra.mxu0 0.0
    %3198 = vmatprep.subr.mxu0 0.0
    %3199 = vmatpush2.msra.mxu0 0.0
    %3200 = vmatprep.subr.mxu0 0.0
    %3201 = vmatpush2.msra.mxu0 0.0
    %3202 = vmatprep.subr.mxu0 0.0
    %3203 = vmatpush2.msra.mxu0 0.0
    %3204 = vmatprep.subr.mxu0 0.0
    %3205 = vmatpush2.msra.mxu0 0.0
    %3206 = vmatprep.subr.mxu0 0.0
    %3207 = vmatpush2.msra.mxu0 0.0
    %3208 = vmatprep.subr.mxu0 0.0
    %3209 = vmatpush2.msra.mxu0 0.0
    %3210 = vmatprep.mubr.f32.mxu0 0.0
    %3211 = vmatmul.mubr.f32.gmra.mxu0 %v3141
    %v3212 = vpop.f32.mrf.mxu0
    %v3213 = vadd.f32 0.0, %v3212
    %v3214 = vpop.f32.mrf.mxu0
    %3215 = vmatprep.mubr.f32.mxu0 0.0
    %3216 = vmatmul.mubr.f32.gmra.mxu0 %v3144
    %v3217 = vpop.f32.mrf.mxu0
    %v3218 = vadd.f32 0.0, %v3217
    %v3219 = vpop.f32.mrf.mxu0
    %3220 = vdwg.mxu0
    %3221 = vrot.lane.b32.xlu0 %v2900, 64
    %v3222 = vpop.permute.xlu0 %3221
    %3223 = vrot.lane.b32.xlu0 %v2905, 64
    %v3224 = vpop.permute.xlu0 %3223
    %v3228 = vsel %vm308, %v3131, 0
    %v3231 = vsel %vm308, %v3133, 0
    %3233 = vmatprep.subr.mxu0 0.0
    %3234 = vmatpush1.msra.mxu0 0.0
    %3235 = vmatprep.subr.mxu0 0.0
    %3236 = vmatpush1.msra.mxu0 0.0
    %3237 = vmatprep.subr.mxu0 0.0
    %3238 = vmatpush1.msra.mxu0 0.0
    %3239 = vmatprep.subr.mxu0 0.0
    %3240 = vmatpush1.msra.mxu0 0.0
    %3241 = vmatprep.subr.mxu0 0.0
    %3242 = vmatpush1.msra.mxu0 0.0
    %3243 = vmatprep.subr.mxu0 0.0
    %3244 = vmatpush1.msra.mxu0 0.0
    %3245 = vmatprep.subr.mxu0 0.0
    %3246 = vmatpush1.msra.mxu0 0.0
    %3247 = vmatprep.subr.mxu0 0.0
    %3248 = vmatpush1.msra.mxu0 0.0
    %3249 = vmatprep.subr.mxu0 0.0
    %3250 = vmatpush1.msra.mxu0 0.0
    %3251 = vmatprep.subr.mxu0 0.0
    %3252 = vmatpush1.msra.mxu0 0.0
    %3253 = vmatprep.subr.mxu0 0.0
    %3254 = vmatpush1.msra.mxu0 0.0
    %3255 = vmatprep.subr.mxu0 0.0
    %3256 = vmatpush1.msra.mxu0 0.0
    %3257 = vmatprep.subr.mxu0 0.0
    %3258 = vmatpush1.msra.mxu0 0.0
    %3259 = vmatprep.subr.mxu0 0.0
    %3260 = vmatpush1.msra.mxu0 0.0
    %3261 = vmatprep.subr.mxu0 0.0
    %3262 = vmatpush1.msra.mxu0 %v3224
    %3263 = vmatprep.subr.mxu0 0.0
    %3264 = vmatpush1.msra.mxu0 %v3222
    %3265 = vmatprep.subr.mxu0 0.0
    %3266 = vmatpush2.msra.mxu0 0.0
    %3267 = vmatprep.subr.mxu0 0.0
    %3268 = vmatpush2.msra.mxu0 0.0
    %3269 = vmatprep.subr.mxu0 0.0
    %3270 = vmatpush2.msra.mxu0 0.0
    %3271 = vmatprep.subr.mxu0 0.0
    %3272 = vmatpush2.msra.mxu0 0.0
    %3273 = vmatprep.subr.mxu0 0.0
    %3274 = vmatpush2.msra.mxu0 0.0
    %3275 = vmatprep.subr.mxu0 0.0
    %3276 = vmatpush2.msra.mxu0 0.0
    %3277 = vmatprep.subr.mxu0 0.0
    %3278 = vmatpush2.msra.mxu0 0.0
    %3279 = vmatprep.subr.mxu0 0.0
    %3280 = vmatpush2.msra.mxu0 0.0
    %3281 = vmatprep.subr.mxu0 0.0
    %3282 = vmatpush2.msra.mxu0 0.0
    %3283 = vmatprep.subr.mxu0 0.0
    %3284 = vmatpush2.msra.mxu0 0.0
    %3285 = vmatprep.subr.mxu0 0.0
    %3286 = vmatpush2.msra.mxu0 0.0
    %3287 = vmatprep.subr.mxu0 0.0
    %3288 = vmatpush2.msra.mxu0 0.0
    %3289 = vmatprep.subr.mxu0 0.0
    %3290 = vmatpush2.msra.mxu0 0.0
    %3291 = vmatprep.subr.mxu0 0.0
    %3292 = vmatpush2.msra.mxu0 0.0
    %3293 = vmatprep.subr.mxu0 0.0
    %3294 = vmatpush2.msra.mxu0 0.0
    %3295 = vmatprep.subr.mxu0 0.0
    %3296 = vmatpush2.msra.mxu0 0.0
    %3297 = vmatprep.mubr.f32.mxu0 0.0
    %3298 = vmatmul.mubr.f32.gmra.mxu0 %v3228
    %v3299 = vpop.f32.mrf.mxu0
    %v3300 = vadd.f32 0.0, %v3299
    %v3301 = vpop.f32.mrf.mxu0
    %3302 = vmatprep.mubr.f32.mxu0 0.0
    %3303 = vmatmul.mubr.f32.gmra.mxu0 %v3231
    %v3304 = vpop.f32.mrf.mxu0
    %v3305 = vadd.f32 0.0, %v3304
    %v3306 = vpop.f32.mrf.mxu0
    %3307 = vdwg.mxu0
    %3308 = vst.msk [vmem:[#allocation2] sm:$0xff] %vm613, %v3213
    %3309 = vst.msk [vmem:[#allocation2 + $0x8] sm:$0xff] %vm613, %v3218
    %3310 = vst.msk [vmem:[#allocation2 + $0x10] sm:$0xff] %vm613, %v3300
    %3311 = vst.msk [vmem:[#allocation2 + $0x18] sm:$0xff] %vm613, %v3305
    %3312 = vrot.lane.b32.xlu0 %v2890, 120
    %v3313 = vpop.permute.xlu0 %3312
    %3314 = vrot.lane.b32.xlu0 %v2895, 120
    %v3315 = vpop.permute.xlu0 %3314
    %3316 = vrot.lane.b32.xlu0 %v2890, 88
    %v3317 = vpop.permute.xlu0 %3316
    %3318 = vrot.lane.b32.xlu0 %v2895, 88
    %v3319 = vpop.permute.xlu0 %3318
    %v3320 = vsel %vm613, %v3313, 0
    %v3322 = vsel %vm613, %v3315, 0
    %v3324 = vsel %vm613, %v3317, 0
    %v3326 = vsel %vm613, %v3319, 0
    %3328 = vmatprep.subr.mxu0 0.0
    %3329 = vmatpush1.xpose.msra.mxu0 0.0
    %3330 = vmatprep.subr.mxu0 0.0
    %3331 = vmatpush1.xpose.msra.mxu0 0.0
    %3332 = vmatprep.subr.mxu0 0.0
    %3333 = vmatpush1.xpose.msra.mxu0 0.0
    %3334 = vmatprep.subr.mxu0 0.0
    %3335 = vmatpush1.xpose.msra.mxu0 0.0
    %3336 = vmatprep.subr.mxu0 0.0
    %3337 = vmatpush1.xpose.msra.mxu0 0.0
    %3338 = vmatprep.subr.mxu0 0.0
    %3339 = vmatpush1.xpose.msra.mxu0 0.0
    %3340 = vmatprep.subr.mxu0 0.0
    %3341 = vmatpush1.xpose.msra.mxu0 0.0
    %3342 = vmatprep.subr.mxu0 0.0
    %3343 = vmatpush1.xpose.msra.mxu0 0.0
    %3344 = vmatprep.subr.mxu0 0.0
    %3345 = vmatpush1.xpose.msra.mxu0 0.0
    %3346 = vmatprep.subr.mxu0 0.0
    %3347 = vmatpush1.xpose.msra.mxu0 0.0
    %3348 = vmatprep.subr.mxu0 0.0
    %3349 = vmatpush1.xpose.msra.mxu0 0.0
    %3350 = vmatprep.subr.mxu0 0.0
    %3351 = vmatpush1.xpose.msra.mxu0 0.0
    %3352 = vmatprep.subr.mxu0 0.0
    %3353 = vmatpush1.xpose.msra.mxu0 0.0
    %3354 = vmatprep.subr.mxu0 0.0
    %3355 = vmatpush1.xpose.msra.mxu0 0.0
    %3356 = vmatprep.subr.mxu0 0.0
    %3357 = vmatpush1.xpose.msra.mxu0 %v3326
    %3358 = vmatprep.subr.mxu0 0.0
    %3359 = vmatpush1.xpose.msra.mxu0 %v3324
    %3360 = vmatprep.subr.mxu0 0.0
    %3361 = vmatpush2.xpose.msra.mxu0 0.0
    %3362 = vmatprep.subr.mxu0 0.0
    %3363 = vmatpush2.xpose.msra.mxu0 0.0
    %3364 = vmatprep.subr.mxu0 0.0
    %3365 = vmatpush2.xpose.msra.mxu0 0.0
    %3366 = vmatprep.subr.mxu0 0.0
    %3367 = vmatpush2.xpose.msra.mxu0 0.0
    %3368 = vmatprep.subr.mxu0 0.0
    %3369 = vmatpush2.xpose.msra.mxu0 0.0
    %3370 = vmatprep.subr.mxu0 0.0
    %3371 = vmatpush2.xpose.msra.mxu0 0.0
    %3372 = vmatprep.subr.mxu0 0.0
    %3373 = vmatpush2.xpose.msra.mxu0 0.0
    %3374 = vmatprep.subr.mxu0 0.0
    %3375 = vmatpush2.xpose.msra.mxu0 0.0
    %3376 = vmatprep.subr.mxu0 0.0
    %3377 = vmatpush2.xpose.msra.mxu0 0.0
    %3378 = vmatprep.subr.mxu0 0.0
    %3379 = vmatpush2.xpose.msra.mxu0 0.0
    %3380 = vmatprep.subr.mxu0 0.0
    %3381 = vmatpush2.xpose.msra.mxu0 0.0
    %3382 = vmatprep.subr.mxu0 0.0
    %3383 = vmatpush2.xpose.msra.mxu0 0.0
    %3384 = vmatprep.subr.mxu0 0.0
    %3385 = vmatpush2.xpose.msra.mxu0 0.0
    %3386 = vmatprep.subr.mxu0 0.0
    %3387 = vmatpush2.xpose.msra.mxu0 0.0
    %3388 = vmatprep.subr.mxu0 0.0
    %3389 = vmatpush2.xpose.msra.mxu0 0.0
    %3390 = vmatprep.subr.mxu0 0.0
    %3391 = vmatpush2.xpose.msra.mxu0 0.0
    %3392 = vmatprep.mubr.f32.mxu0 0.0
    %3393 = vmatmul.mubr.f32.gmra.mxu0 %v3320
    %v3394 = vpop.f32.mrf.mxu0
    %v3395 = vadd.f32 0.0, %v3394
    %v3396 = vpop.f32.mrf.mxu0
    %3397 = vmatprep.mubr.f32.mxu0 0.0
    %3398 = vmatmul.mubr.f32.gmra.mxu0 %v3322
    %v3399 = vpop.f32.mrf.mxu0
    %v3400 = vadd.f32 0.0, %v3399
    %v3401 = vpop.f32.mrf.mxu0
    %3402 = vdwg.mxu0
    %3403 = vrot.lane.b32.xlu0 %v2900, 120
    %v3404 = vpop.permute.xlu0 %3403
    %3405 = vrot.lane.b32.xlu0 %v2905, 120
    %v3406 = vpop.permute.xlu0 %3405
    %3407 = vrot.lane.b32.xlu0 %v2900, 88
    %v3408 = vpop.permute.xlu0 %3407
    %3409 = vrot.lane.b32.xlu0 %v2905, 88
    %v3410 = vpop.permute.xlu0 %3409
    %v3411 = vsel %vm613, %v3404, 0
    %v3413 = vsel %vm613, %v3406, 0
    %v3415 = vsel %vm613, %v3408, 0
    %v3417 = vsel %vm613, %v3410, 0
    %3419 = vmatprep.subr.mxu0 0.0
    %3420 = vmatpush1.xpose.msra.mxu0 0.0
    %3421 = vmatprep.subr.mxu0 0.0
    %3422 = vmatpush1.xpose.msra.mxu0 0.0
    %3423 = vmatprep.subr.mxu0 0.0
    %3424 = vmatpush1.xpose.msra.mxu0 0.0
    %3425 = vmatprep.subr.mxu0 0.0
    %3426 = vmatpush1.xpose.msra.mxu0 0.0
    %3427 = vmatprep.subr.mxu0 0.0
    %3428 = vmatpush1.xpose.msra.mxu0 0.0
    %3429 = vmatprep.subr.mxu0 0.0
    %3430 = vmatpush1.xpose.msra.mxu0 0.0
    %3431 = vmatprep.subr.mxu0 0.0
    %3432 = vmatpush1.xpose.msra.mxu0 0.0
    %3433 = vmatprep.subr.mxu0 0.0
    %3434 = vmatpush1.xpose.msra.mxu0 0.0
    %3435 = vmatprep.subr.mxu0 0.0
    %3436 = vmatpush1.xpose.msra.mxu0 0.0
    %3437 = vmatprep.subr.mxu0 0.0
    %3438 = vmatpush1.xpose.msra.mxu0 0.0
    %3439 = vmatprep.subr.mxu0 0.0
    %3440 = vmatpush1.xpose.msra.mxu0 0.0
    %3441 = vmatprep.subr.mxu0 0.0
    %3442 = vmatpush1.xpose.msra.mxu0 0.0
    %3443 = vmatprep.subr.mxu0 0.0
    %3444 = vmatpush1.xpose.msra.mxu0 0.0
    %3445 = vmatprep.subr.mxu0 0.0
    %3446 = vmatpush1.xpose.msra.mxu0 0.0
    %3447 = vmatprep.subr.mxu0 0.0
    %3448 = vmatpush1.xpose.msra.mxu0 %v3417
    %3449 = vmatprep.subr.mxu0 0.0
    %3450 = vmatpush1.xpose.msra.mxu0 %v3415
    %3451 = vmatprep.subr.mxu0 0.0
    %3452 = vmatpush2.xpose.msra.mxu0 0.0
    %3453 = vmatprep.subr.mxu0 0.0
    %3454 = vmatpush2.xpose.msra.mxu0 0.0
    %3455 = vmatprep.subr.mxu0 0.0
    %3456 = vmatpush2.xpose.msra.mxu0 0.0
    %3457 = vmatprep.subr.mxu0 0.0
    %3458 = vmatpush2.xpose.msra.mxu0 0.0
    %3459 = vmatprep.subr.mxu0 0.0
    %3460 = vmatpush2.xpose.msra.mxu0 0.0
    %3461 = vmatprep.subr.mxu0 0.0
    %3462 = vmatpush2.xpose.msra.mxu0 0.0
    %3463 = vmatprep.subr.mxu0 0.0
    %3464 = vmatpush2.xpose.msra.mxu0 0.0
    %3465 = vmatprep.subr.mxu0 0.0
    %3466 = vmatpush2.xpose.msra.mxu0 0.0
    %3467 = vmatprep.subr.mxu0 0.0
    %3468 = vmatpush2.xpose.msra.mxu0 0.0
    %3469 = vmatprep.subr.mxu0 0.0
    %3470 = vmatpush2.xpose.msra.mxu0 0.0
    %3471 = vmatprep.subr.mxu0 0.0
    %3472 = vmatpush2.xpose.msra.mxu0 0.0
    %3473 = vmatprep.subr.mxu0 0.0
    %3474 = vmatpush2.xpose.msra.mxu0 0.0
    %3475 = vmatprep.subr.mxu0 0.0
    %3476 = vmatpush2.xpose.msra.mxu0 0.0
    %3477 = vmatprep.subr.mxu0 0.0
    %3478 = vmatpush2.xpose.msra.mxu0 0.0
    %3479 = vmatprep.subr.mxu0 0.0
    %3480 = vmatpush2.xpose.msra.mxu0 0.0
    %3481 = vmatprep.subr.mxu0 0.0
    %3482 = vmatpush2.xpose.msra.mxu0 0.0
    %3483 = vmatprep.mubr.f32.mxu0 0.0
    %3484 = vmatmul.mubr.f32.gmra.mxu0 %v3411
    %v3485 = vpop.f32.mrf.mxu0
    %v3486 = vadd.f32 0.0, %v3485
    %v3487 = vpop.f32.mrf.mxu0
    %3488 = vmatprep.mubr.f32.mxu0 0.0
    %3489 = vmatmul.mubr.f32.gmra.mxu0 %v3413
    %v3490 = vpop.f32.mrf.mxu0
    %v3491 = vadd.f32 0.0, %v3490
    %v3492 = vpop.f32.mrf.mxu0
    %3493 = vdwg.mxu0
    %v3494 = vmul.f32 %v3395, 0.35355338
    %v3495 = vmul.f32 %v3400, 0.35355338
    %v3496 = vmul.f32 %v3486, 0.35355338
    %v3497 = vmul.f32 %v3491, 0.35355338
    %v3498 = vsel %vm308, %v3494, -inf
    %3499 = vmax.xlane.f32.xlu0 %v3498
    %v3500 = vpop.xlane.xlu0 %3499
    %v3501 = vsel %vm308, %v3495, -inf
    %3502 = vmax.xlane.f32.xlu0 %v3501
    %v3503 = vpop.xlane.xlu0 %3502
    %v3504 = vsel %vm308, %v3496, -inf
    %3505 = vmax.xlane.f32.xlu0 %v3504
    %v3506 = vpop.xlane.xlu0 %3505
    %v3507 = vsel %vm308, %v3497, -inf
    %3508 = vmax.xlane.f32.xlu0 %v3507
    %v3509 = vpop.xlane.xlu0 %3508
    %v3510 = vsub.f32 %v3494, %v3500
    %v3511 = vsub.f32 %v3495, %v3503
    %v3512 = vsub.f32 %v3496, %v3506
    %v3513 = vsub.f32 %v3497, %v3509
    %v3514 = vmul.f32 %v3510, 1.442695
    %v3515 = vpow.pop %v3514
    %v3516 = vmul.f32 %v3511, 1.442695
    %v3517 = vpow.pop %v3516
    %v3518 = vmul.f32 %v3512, 1.442695
    %v3519 = vpow.pop %v3518
    %v3520 = vmul.f32 %v3513, 1.442695
    %v3521 = vpow.pop %v3520
    %v3522 = vsel %vm308, %v3515, 0.0
    %3523 = vadd.xlane.f32.xlu0 %v3522
    %v3524 = vpop.xlane.xlu0 %3523
    %v3525 = vsel %vm308, %v3517, 0.0
    %3526 = vadd.xlane.f32.xlu0 %v3525
    %v3527 = vpop.xlane.xlu0 %3526
    %v3528 = vsel %vm308, %v3519, 0.0
    %3529 = vadd.xlane.f32.xlu0 %v3528
    %v3530 = vpop.xlane.xlu0 %3529
    %v3531 = vsel %vm308, %v3521, 0.0
    %3532 = vadd.xlane.f32.xlu0 %v3531
    %v3533 = vpop.xlane.xlu0 %3532
    %v3534 = vrcp.pop %v3524
    %v3535 = vmul.f32 %v3515, %v3534
    %v3536 = vrcp.pop %v3527
    %v3537 = vmul.f32 %v3517, %v3536
    %v3538 = vrcp.pop %v3530
    %v3539 = vmul.f32 %v3519, %v3538
    %v3540 = vrcp.pop %v3533
    %v3541 = vmul.f32 %v3521, %v3540
    %3542 = vrot.lane.b32.xlu0 %v2890, 56
    %v3543 = vpop.permute.xlu0 %3542
    %3544 = vrot.lane.b32.xlu0 %v2895, 56
    %v3545 = vpop.permute.xlu0 %3544
    %v3549 = vsel %vm308, %v3535, 0
    %v3552 = vsel %vm308, %v3537, 0
    %3554 = vmatprep.subr.mxu0 0.0
    %3555 = vmatpush1.msra.mxu0 0.0
    %3556 = vmatprep.subr.mxu0 0.0
    %3557 = vmatpush1.msra.mxu0 0.0
    %3558 = vmatprep.subr.mxu0 0.0
    %3559 = vmatpush1.msra.mxu0 0.0
    %3560 = vmatprep.subr.mxu0 0.0
    %3561 = vmatpush1.msra.mxu0 0.0
    %3562 = vmatprep.subr.mxu0 0.0
    %3563 = vmatpush1.msra.mxu0 0.0
    %3564 = vmatprep.subr.mxu0 0.0
    %3565 = vmatpush1.msra.mxu0 0.0
    %3566 = vmatprep.subr.mxu0 0.0
    %3567 = vmatpush1.msra.mxu0 0.0
    %3568 = vmatprep.subr.mxu0 0.0
    %3569 = vmatpush1.msra.mxu0 0.0
    %3570 = vmatprep.subr.mxu0 0.0
    %3571 = vmatpush1.msra.mxu0 0.0
    %3572 = vmatprep.subr.mxu0 0.0
    %3573 = vmatpush1.msra.mxu0 0.0
    %3574 = vmatprep.subr.mxu0 0.0
    %3575 = vmatpush1.msra.mxu0 0.0
    %3576 = vmatprep.subr.mxu0 0.0
    %3577 = vmatpush1.msra.mxu0 0.0
    %3578 = vmatprep.subr.mxu0 0.0
    %3579 = vmatpush1.msra.mxu0 0.0
    %3580 = vmatprep.subr.mxu0 0.0
    %3581 = vmatpush1.msra.mxu0 0.0
    %3582 = vmatprep.subr.mxu0 0.0
    %3583 = vmatpush1.msra.mxu0 %v3545
    %3584 = vmatprep.subr.mxu0 0.0
    %3585 = vmatpush1.msra.mxu0 %v3543
    %3586 = vmatprep.subr.mxu0 0.0
    %3587 = vmatpush2.msra.mxu0 0.0
    %3588 = vmatprep.subr.mxu0 0.0
    %3589 = vmatpush2.msra.mxu0 0.0
    %3590 = vmatprep.subr.mxu0 0.0
    %3591 = vmatpush2.msra.mxu0 0.0
    %3592 = vmatprep.subr.mxu0 0.0
    %3593 = vmatpush2.msra.mxu0 0.0
    %3594 = vmatprep.subr.mxu0 0.0
    %3595 = vmatpush2.msra.mxu0 0.0
    %3596 = vmatprep.subr.mxu0 0.0
    %3597 = vmatpush2.msra.mxu0 0.0
    %3598 = vmatprep.subr.mxu0 0.0
    %3599 = vmatpush2.msra.mxu0 0.0
    %3600 = vmatprep.subr.mxu0 0.0
    %3601 = vmatpush2.msra.mxu0 0.0
    %3602 = vmatprep.subr.mxu0 0.0
    %3603 = vmatpush2.msra.mxu0 0.0
    %3604 = vmatprep.subr.mxu0 0.0
    %3605 = vmatpush2.msra.mxu0 0.0
    %3606 = vmatprep.subr.mxu0 0.0
    %3607 = vmatpush2.msra.mxu0 0.0
    %3608 = vmatprep.subr.mxu0 0.0
    %3609 = vmatpush2.msra.mxu0 0.0
    %3610 = vmatprep.subr.mxu0 0.0
    %3611 = vmatpush2.msra.mxu0 0.0
    %3612 = vmatprep.subr.mxu0 0.0
    %3613 = vmatpush2.msra.mxu0 0.0
    %3614 = vmatprep.subr.mxu0 0.0
    %3615 = vmatpush2.msra.mxu0 0.0
    %3616 = vmatprep.subr.mxu0 0.0
    %3617 = vmatpush2.msra.mxu0 0.0
    %3618 = vmatprep.mubr.f32.mxu0 0.0
    %3619 = vmatmul.mubr.f32.gmra.mxu0 %v3549
    %v3620 = vpop.f32.mrf.mxu0
    %v3621 = vadd.f32 0.0, %v3620
    %v3622 = vpop.f32.mrf.mxu0
    %3623 = vmatprep.mubr.f32.mxu0 0.0
    %3624 = vmatmul.mubr.f32.gmra.mxu0 %v3552
    %v3625 = vpop.f32.mrf.mxu0
    %v3626 = vadd.f32 0.0, %v3625
    %v3627 = vpop.f32.mrf.mxu0
    %3628 = vdwg.mxu0
    %3629 = vrot.lane.b32.xlu0 %v2900, 56
    %v3630 = vpop.permute.xlu0 %3629
    %3631 = vrot.lane.b32.xlu0 %v2905, 56
    %v3632 = vpop.permute.xlu0 %3631
    %v3636 = vsel %vm308, %v3539, 0
    %v3639 = vsel %vm308, %v3541, 0
    %3641 = vmatprep.subr.mxu0 0.0
    %3642 = vmatpush1.msra.mxu0 0.0
    %3643 = vmatprep.subr.mxu0 0.0
    %3644 = vmatpush1.msra.mxu0 0.0
    %3645 = vmatprep.subr.mxu0 0.0
    %3646 = vmatpush1.msra.mxu0 0.0
    %3647 = vmatprep.subr.mxu0 0.0
    %3648 = vmatpush1.msra.mxu0 0.0
    %3649 = vmatprep.subr.mxu0 0.0
    %3650 = vmatpush1.msra.mxu0 0.0
    %3651 = vmatprep.subr.mxu0 0.0
    %3652 = vmatpush1.msra.mxu0 0.0
    %3653 = vmatprep.subr.mxu0 0.0
    %3654 = vmatpush1.msra.mxu0 0.0
    %3655 = vmatprep.subr.mxu0 0.0
    %3656 = vmatpush1.msra.mxu0 0.0
    %3657 = vmatprep.subr.mxu0 0.0
    %3658 = vmatpush1.msra.mxu0 0.0
    %3659 = vmatprep.subr.mxu0 0.0
    %3660 = vmatpush1.msra.mxu0 0.0
    %3661 = vmatprep.subr.mxu0 0.0
    %3662 = vmatpush1.msra.mxu0 0.0
    %3663 = vmatprep.subr.mxu0 0.0
    %3664 = vmatpush1.msra.mxu0 0.0
    %3665 = vmatprep.subr.mxu0 0.0
    %3666 = vmatpush1.msra.mxu0 0.0
    %3667 = vmatprep.subr.mxu0 0.0
    %3668 = vmatpush1.msra.mxu0 0.0
    %3669 = vmatprep.subr.mxu0 0.0
    %3670 = vmatpush1.msra.mxu0 %v3632
    %3671 = vmatprep.subr.mxu0 0.0
    %3672 = vmatpush1.msra.mxu0 %v3630
    %3673 = vmatprep.subr.mxu0 0.0
    %3674 = vmatpush2.msra.mxu0 0.0
    %3675 = vmatprep.subr.mxu0 0.0
    %3676 = vmatpush2.msra.mxu0 0.0
    %3677 = vmatprep.subr.mxu0 0.0
    %3678 = vmatpush2.msra.mxu0 0.0
    %3679 = vmatprep.subr.mxu0 0.0
    %3680 = vmatpush2.msra.mxu0 0.0
    %3681 = vmatprep.subr.mxu0 0.0
    %3682 = vmatpush2.msra.mxu0 0.0
    %3683 = vmatprep.subr.mxu0 0.0
    %3684 = vmatpush2.msra.mxu0 0.0
    %3685 = vmatprep.subr.mxu0 0.0
    %3686 = vmatpush2.msra.mxu0 0.0
    %3687 = vmatprep.subr.mxu0 0.0
    %3688 = vmatpush2.msra.mxu0 0.0
    %3689 = vmatprep.subr.mxu0 0.0
    %3690 = vmatpush2.msra.mxu0 0.0
    %3691 = vmatprep.subr.mxu0 0.0
    %3692 = vmatpush2.msra.mxu0 0.0
    %3693 = vmatprep.subr.mxu0 0.0
    %3694 = vmatpush2.msra.mxu0 0.0
    %3695 = vmatprep.subr.mxu0 0.0
    %3696 = vmatpush2.msra.mxu0 0.0
    %3697 = vmatprep.subr.mxu0 0.0
    %3698 = vmatpush2.msra.mxu0 0.0
    %3699 = vmatprep.subr.mxu0 0.0
    %3700 = vmatpush2.msra.mxu0 0.0
    %3701 = vmatprep.subr.mxu0 0.0
    %3702 = vmatpush2.msra.mxu0 0.0
    %3703 = vmatprep.subr.mxu0 0.0
    %3704 = vmatpush2.msra.mxu0 0.0
    %3705 = vmatprep.mubr.f32.mxu0 0.0
    %3706 = vmatmul.mubr.f32.gmra.mxu0 %v3636
    %v3707 = vpop.f32.mrf.mxu0
    %v3708 = vadd.f32 0.0, %v3707
    %v3709 = vpop.f32.mrf.mxu0
    %3710 = vmatprep.mubr.f32.mxu0 0.0
    %3711 = vmatmul.mubr.f32.gmra.mxu0 %v3639
    %v3712 = vpop.f32.mrf.mxu0
    %v3713 = vadd.f32 0.0, %v3712
    %v3714 = vpop.f32.mrf.mxu0
    %3715 = vdwg.mxu0
    %3720 = vrot.lane.b32.xlu0 %v3621, 8
    %v3721 = vpop.permute.xlu0 %3720
    %3722 = vrot.lane.b32.xlu0 %v3626, 8
    %v3723 = vpop.permute.xlu0 %3722
    %3724 = vrot.lane.b32.xlu0 %v3708, 8
    %v3725 = vpop.permute.xlu0 %3724
    %3726 = vrot.lane.b32.xlu0 %v3713, 8
    %v3727 = vpop.permute.xlu0 %3726
    %3732 = vst.msk [vmem:[#allocation2] sm:$0xff] %vm1432, %v3721
    %3733 = vst.msk [vmem:[#allocation2 + $0x8] sm:$0xff] %vm1432, %v3723
    %3734 = vst.msk [vmem:[#allocation2 + $0x10] sm:$0xff] %vm1432, %v3725
    %3735 = vst.msk [vmem:[#allocation2 + $0x18] sm:$0xff] %vm1432, %v3727
    %3736 = vrot.lane.b32.xlu0 %v2890, 112
    %v3737 = vpop.permute.xlu0 %3736
    %3738 = vrot.lane.b32.xlu0 %v2895, 112
    %v3739 = vpop.permute.xlu0 %3738
    %3740 = vrot.lane.b32.xlu0 %v2890, 80
    %v3741 = vpop.permute.xlu0 %3740
    %3742 = vrot.lane.b32.xlu0 %v2895, 80
    %v3743 = vpop.permute.xlu0 %3742
    %v3744 = vsel %vm613, %v3737, 0
    %v3746 = vsel %vm613, %v3739, 0
    %v3748 = vsel %vm613, %v3741, 0
    %v3750 = vsel %vm613, %v3743, 0
    %3752 = vmatprep.subr.mxu0 0.0
    %3753 = vmatpush1.xpose.msra.mxu0 0.0
    %3754 = vmatprep.subr.mxu0 0.0
    %3755 = vmatpush1.xpose.msra.mxu0 0.0
    %3756 = vmatprep.subr.mxu0 0.0
    %3757 = vmatpush1.xpose.msra.mxu0 0.0
    %3758 = vmatprep.subr.mxu0 0.0
    %3759 = vmatpush1.xpose.msra.mxu0 0.0
    %3760 = vmatprep.subr.mxu0 0.0
    %3761 = vmatpush1.xpose.msra.mxu0 0.0
    %3762 = vmatprep.subr.mxu0 0.0
    %3763 = vmatpush1.xpose.msra.mxu0 0.0
    %3764 = vmatprep.subr.mxu0 0.0
    %3765 = vmatpush1.xpose.msra.mxu0 0.0
    %3766 = vmatprep.subr.mxu0 0.0
    %3767 = vmatpush1.xpose.msra.mxu0 0.0
    %3768 = vmatprep.subr.mxu0 0.0
    %3769 = vmatpush1.xpose.msra.mxu0 0.0
    %3770 = vmatprep.subr.mxu0 0.0
    %3771 = vmatpush1.xpose.msra.mxu0 0.0
    %3772 = vmatprep.subr.mxu0 0.0
    %3773 = vmatpush1.xpose.msra.mxu0 0.0
    %3774 = vmatprep.subr.mxu0 0.0
    %3775 = vmatpush1.xpose.msra.mxu0 0.0
    %3776 = vmatprep.subr.mxu0 0.0
    %3777 = vmatpush1.xpose.msra.mxu0 0.0
    %3778 = vmatprep.subr.mxu0 0.0
    %3779 = vmatpush1.xpose.msra.mxu0 0.0
    %3780 = vmatprep.subr.mxu0 0.0
    %3781 = vmatpush1.xpose.msra.mxu0 %v3750
    %3782 = vmatprep.subr.mxu0 0.0
    %3783 = vmatpush1.xpose.msra.mxu0 %v3748
    %3784 = vmatprep.subr.mxu0 0.0
    %3785 = vmatpush2.xpose.msra.mxu0 0.0
    %3786 = vmatprep.subr.mxu0 0.0
    %3787 = vmatpush2.xpose.msra.mxu0 0.0
    %3788 = vmatprep.subr.mxu0 0.0
    %3789 = vmatpush2.xpose.msra.mxu0 0.0
    %3790 = vmatprep.subr.mxu0 0.0
    %3791 = vmatpush2.xpose.msra.mxu0 0.0
    %3792 = vmatprep.subr.mxu0 0.0
    %3793 = vmatpush2.xpose.msra.mxu0 0.0
    %3794 = vmatprep.subr.mxu0 0.0
    %3795 = vmatpush2.xpose.msra.mxu0 0.0
    %3796 = vmatprep.subr.mxu0 0.0
    %3797 = vmatpush2.xpose.msra.mxu0 0.0
    %3798 = vmatprep.subr.mxu0 0.0
    %3799 = vmatpush2.xpose.msra.mxu0 0.0
    %3800 = vmatprep.subr.mxu0 0.0
    %3801 = vmatpush2.xpose.msra.mxu0 0.0
    %3802 = vmatprep.subr.mxu0 0.0
    %3803 = vmatpush2.xpose.msra.mxu0 0.0
    %3804 = vmatprep.subr.mxu0 0.0
    %3805 = vmatpush2.xpose.msra.mxu0 0.0
    %3806 = vmatprep.subr.mxu0 0.0
    %3807 = vmatpush2.xpose.msra.mxu0 0.0
    %3808 = vmatprep.subr.mxu0 0.0
    %3809 = vmatpush2.xpose.msra.mxu0 0.0
    %3810 = vmatprep.subr.mxu0 0.0
    %3811 = vmatpush2.xpose.msra.mxu0 0.0
    %3812 = vmatprep.subr.mxu0 0.0
    %3813 = vmatpush2.xpose.msra.mxu0 0.0
    %3814 = vmatprep.subr.mxu0 0.0
    %3815 = vmatpush2.xpose.msra.mxu0 0.0
    %3816 = vmatprep.mubr.f32.mxu0 0.0
    %3817 = vmatmul.mubr.f32.gmra.mxu0 %v3744
    %v3818 = vpop.f32.mrf.mxu0
    %v3819 = vadd.f32 0.0, %v3818
    %v3820 = vpop.f32.mrf.mxu0
    %3821 = vmatprep.mubr.f32.mxu0 0.0
    %3822 = vmatmul.mubr.f32.gmra.mxu0 %v3746
    %v3823 = vpop.f32.mrf.mxu0
    %v3824 = vadd.f32 0.0, %v3823
    %v3825 = vpop.f32.mrf.mxu0
    %3826 = vdwg.mxu0
    %3827 = vrot.lane.b32.xlu0 %v2900, 112
    %v3828 = vpop.permute.xlu0 %3827
    %3829 = vrot.lane.b32.xlu0 %v2905, 112
    %v3830 = vpop.permute.xlu0 %3829
    %3831 = vrot.lane.b32.xlu0 %v2900, 80
    %v3832 = vpop.permute.xlu0 %3831
    %3833 = vrot.lane.b32.xlu0 %v2905, 80
    %v3834 = vpop.permute.xlu0 %3833
    %v3835 = vsel %vm613, %v3828, 0
    %v3837 = vsel %vm613, %v3830, 0
    %v3839 = vsel %vm613, %v3832, 0
    %v3841 = vsel %vm613, %v3834, 0
    %3843 = vmatprep.subr.mxu0 0.0
    %3844 = vmatpush1.xpose.msra.mxu0 0.0
    %3845 = vmatprep.subr.mxu0 0.0
    %3846 = vmatpush1.xpose.msra.mxu0 0.0
    %3847 = vmatprep.subr.mxu0 0.0
    %3848 = vmatpush1.xpose.msra.mxu0 0.0
    %3849 = vmatprep.subr.mxu0 0.0
    %3850 = vmatpush1.xpose.msra.mxu0 0.0
    %3851 = vmatprep.subr.mxu0 0.0
    %3852 = vmatpush1.xpose.msra.mxu0 0.0
    %3853 = vmatprep.subr.mxu0 0.0
    %3854 = vmatpush1.xpose.msra.mxu0 0.0
    %3855 = vmatprep.subr.mxu0 0.0
    %3856 = vmatpush1.xpose.msra.mxu0 0.0
    %3857 = vmatprep.subr.mxu0 0.0
    %3858 = vmatpush1.xpose.msra.mxu0 0.0
    %3859 = vmatprep.subr.mxu0 0.0
    %3860 = vmatpush1.xpose.msra.mxu0 0.0
    %3861 = vmatprep.subr.mxu0 0.0
    %3862 = vmatpush1.xpose.msra.mxu0 0.0
    %3863 = vmatprep.subr.mxu0 0.0
    %3864 = vmatpush1.xpose.msra.mxu0 0.0
    %3865 = vmatprep.subr.mxu0 0.0
    %3866 = vmatpush1.xpose.msra.mxu0 0.0
    %3867 = vmatprep.subr.mxu0 0.0
    %3868 = vmatpush1.xpose.msra.mxu0 0.0
    %3869 = vmatprep.subr.mxu0 0.0
    %3870 = vmatpush1.xpose.msra.mxu0 0.0
    %3871 = vmatprep.subr.mxu0 0.0
    %3872 = vmatpush1.xpose.msra.mxu0 %v3841
    %3873 = vmatprep.subr.mxu0 0.0
    %3874 = vmatpush1.xpose.msra.mxu0 %v3839
    %3875 = vmatprep.subr.mxu0 0.0
    %3876 = vmatpush2.xpose.msra.mxu0 0.0
    %3877 = vmatprep.subr.mxu0 0.0
    %3878 = vmatpush2.xpose.msra.mxu0 0.0
    %3879 = vmatprep.subr.mxu0 0.0
    %3880 = vmatpush2.xpose.msra.mxu0 0.0
    %3881 = vmatprep.subr.mxu0 0.0
    %3882 = vmatpush2.xpose.msra.mxu0 0.0
    %3883 = vmatprep.subr.mxu0 0.0
    %3884 = vmatpush2.xpose.msra.mxu0 0.0
    %3885 = vmatprep.subr.mxu0 0.0
    %3886 = vmatpush2.xpose.msra.mxu0 0.0
    %3887 = vmatprep.subr.mxu0 0.0
    %3888 = vmatpush2.xpose.msra.mxu0 0.0
    %3889 = vmatprep.subr.mxu0 0.0
    %3890 = vmatpush2.xpose.msra.mxu0 0.0
    %3891 = vmatprep.subr.mxu0 0.0
    %3892 = vmatpush2.xpose.msra.mxu0 0.0
    %3893 = vmatprep.subr.mxu0 0.0
    %3894 = vmatpush2.xpose.msra.mxu0 0.0
    %3895 = vmatprep.subr.mxu0 0.0
    %3896 = vmatpush2.xpose.msra.mxu0 0.0
    %3897 = vmatprep.subr.mxu0 0.0
    %3898 = vmatpush2.xpose.msra.mxu0 0.0
    %3899 = vmatprep.subr.mxu0 0.0
    %3900 = vmatpush2.xpose.msra.mxu0 0.0
    %3901 = vmatprep.subr.mxu0 0.0
    %3902 = vmatpush2.xpose.msra.mxu0 0.0
    %3903 = vmatprep.subr.mxu0 0.0
    %3904 = vmatpush2.xpose.msra.mxu0 0.0
    %3905 = vmatprep.subr.mxu0 0.0
    %3906 = vmatpush2.xpose.msra.mxu0 0.0
    %3907 = vmatprep.mubr.f32.mxu0 0.0
    %3908 = vmatmul.mubr.f32.gmra.mxu0 %v3835
    %v3909 = vpop.f32.mrf.mxu0
    %v3910 = vadd.f32 0.0, %v3909
    %v3911 = vpop.f32.mrf.mxu0
    %3912 = vmatprep.mubr.f32.mxu0 0.0
    %3913 = vmatmul.mubr.f32.gmra.mxu0 %v3837
    %v3914 = vpop.f32.mrf.mxu0
    %v3915 = vadd.f32 0.0, %v3914
    %v3916 = vpop.f32.mrf.mxu0
    %3917 = vdwg.mxu0
    %v3918 = vmul.f32 %v3819, 0.35355338
    %v3919 = vmul.f32 %v3824, 0.35355338
    %v3920 = vmul.f32 %v3910, 0.35355338
    %v3921 = vmul.f32 %v3915, 0.35355338
    %v3922 = vsel %vm308, %v3918, -inf
    %3923 = vmax.xlane.f32.xlu0 %v3922
    %v3924 = vpop.xlane.xlu0 %3923
    %v3925 = vsel %vm308, %v3919, -inf
    %3926 = vmax.xlane.f32.xlu0 %v3925
    %v3927 = vpop.xlane.xlu0 %3926
    %v3928 = vsel %vm308, %v3920, -inf
    %3929 = vmax.xlane.f32.xlu0 %v3928
    %v3930 = vpop.xlane.xlu0 %3929
    %v3931 = vsel %vm308, %v3921, -inf
    %3932 = vmax.xlane.f32.xlu0 %v3931
    %v3933 = vpop.xlane.xlu0 %3932
    %v3934 = vsub.f32 %v3918, %v3924
    %v3935 = vsub.f32 %v3919, %v3927
    %v3936 = vsub.f32 %v3920, %v3930
    %v3937 = vsub.f32 %v3921, %v3933
    %v3938 = vmul.f32 %v3934, 1.442695
    %v3939 = vpow.pop %v3938
    %v3940 = vmul.f32 %v3935, 1.442695
    %v3941 = vpow.pop %v3940
    %v3942 = vmul.f32 %v3936, 1.442695
    %v3943 = vpow.pop %v3942
    %v3944 = vmul.f32 %v3937, 1.442695
    %v3945 = vpow.pop %v3944
    %v3946 = vsel %vm308, %v3939, 0.0
    %3947 = vadd.xlane.f32.xlu0 %v3946
    %v3948 = vpop.xlane.xlu0 %3947
    %v3949 = vsel %vm308, %v3941, 0.0
    %3950 = vadd.xlane.f32.xlu0 %v3949
    %v3951 = vpop.xlane.xlu0 %3950
    %v3952 = vsel %vm308, %v3943, 0.0
    %3953 = vadd.xlane.f32.xlu0 %v3952
    %v3954 = vpop.xlane.xlu0 %3953
    %v3955 = vsel %vm308, %v3945, 0.0
    %3956 = vadd.xlane.f32.xlu0 %v3955
    %v3957 = vpop.xlane.xlu0 %3956
    %v3958 = vrcp.pop %v3948
    %v3959 = vmul.f32 %v3939, %v3958
    %v3960 = vrcp.pop %v3951
    %v3961 = vmul.f32 %v3941, %v3960
    %v3962 = vrcp.pop %v3954
    %v3963 = vmul.f32 %v3943, %v3962
    %v3964 = vrcp.pop %v3957
    %v3965 = vmul.f32 %v3945, %v3964
    %3966 = vrot.lane.b32.xlu0 %v2890, 48
    %v3967 = vpop.permute.xlu0 %3966
    %3968 = vrot.lane.b32.xlu0 %v2895, 48
    %v3969 = vpop.permute.xlu0 %3968
    %v3973 = vsel %vm308, %v3959, 0
    %v3976 = vsel %vm308, %v3961, 0
    %3978 = vmatprep.subr.mxu0 0.0
    %3979 = vmatpush1.msra.mxu0 0.0
    %3980 = vmatprep.subr.mxu0 0.0
    %3981 = vmatpush1.msra.mxu0 0.0
    %3982 = vmatprep.subr.mxu0 0.0
    %3983 = vmatpush1.msra.mxu0 0.0
    %3984 = vmatprep.subr.mxu0 0.0
    %3985 = vmatpush1.msra.mxu0 0.0
    %3986 = vmatprep.subr.mxu0 0.0
    %3987 = vmatpush1.msra.mxu0 0.0
    %3988 = vmatprep.subr.mxu0 0.0
    %3989 = vmatpush1.msra.mxu0 0.0
    %3990 = vmatprep.subr.mxu0 0.0
    %3991 = vmatpush1.msra.mxu0 0.0
    %3992 = vmatprep.subr.mxu0 0.0
    %3993 = vmatpush1.msra.mxu0 0.0
    %3994 = vmatprep.subr.mxu0 0.0
    %3995 = vmatpush1.msra.mxu0 0.0
    %3996 = vmatprep.subr.mxu0 0.0
    %3997 = vmatpush1.msra.mxu0 0.0
    %3998 = vmatprep.subr.mxu0 0.0
    %3999 = vmatpush1.msra.mxu0 0.0
    %4000 = vmatprep.subr.mxu0 0.0
    %4001 = vmatpush1.msra.mxu0 0.0
    %4002 = vmatprep.subr.mxu0 0.0
    %4003 = vmatpush1.msra.mxu0 0.0
    %4004 = vmatprep.subr.mxu0 0.0
    %4005 = vmatpush1.msra.mxu0 0.0
    %4006 = vmatprep.subr.mxu0 0.0
    %4007 = vmatpush1.msra.mxu0 %v3969
    %4008 = vmatprep.subr.mxu0 0.0
    %4009 = vmatpush1.msra.mxu0 %v3967
    %4010 = vmatprep.subr.mxu0 0.0
    %4011 = vmatpush2.msra.mxu0 0.0
    %4012 = vmatprep.subr.mxu0 0.0
    %4013 = vmatpush2.msra.mxu0 0.0
    %4014 = vmatprep.subr.mxu0 0.0
    %4015 = vmatpush2.msra.mxu0 0.0
    %4016 = vmatprep.subr.mxu0 0.0
    %4017 = vmatpush2.msra.mxu0 0.0
    %4018 = vmatprep.subr.mxu0 0.0
    %4019 = vmatpush2.msra.mxu0 0.0
    %4020 = vmatprep.subr.mxu0 0.0
    %4021 = vmatpush2.msra.mxu0 0.0
    %4022 = vmatprep.subr.mxu0 0.0
    %4023 = vmatpush2.msra.mxu0 0.0
    %4024 = vmatprep.subr.mxu0 0.0
    %4025 = vmatpush2.msra.mxu0 0.0
    %4026 = vmatprep.subr.mxu0 0.0
    %4027 = vmatpush2.msra.mxu0 0.0
    %4028 = vmatprep.subr.mxu0 0.0
    %4029 = vmatpush2.msra.mxu0 0.0
    %4030 = vmatprep.subr.mxu0 0.0
    %4031 = vmatpush2.msra.mxu0 0.0
    %4032 = vmatprep.subr.mxu0 0.0
    %4033 = vmatpush2.msra.mxu0 0.0
    %4034 = vmatprep.subr.mxu0 0.0
    %4035 = vmatpush2.msra.mxu0 0.0
    %4036 = vmatprep.subr.mxu0 0.0
    %4037 = vmatpush2.msra.mxu0 0.0
    %4038 = vmatprep.subr.mxu0 0.0
    %4039 = vmatpush2.msra.mxu0 0.0
    %4040 = vmatprep.subr.mxu0 0.0
    %4041 = vmatpush2.msra.mxu0 0.0
    %4042 = vmatprep.mubr.f32.mxu0 0.0
    %4043 = vmatmul.mubr.f32.gmra.mxu0 %v3973
    %v4044 = vpop.f32.mrf.mxu0
    %v4045 = vadd.f32 0.0, %v4044
    %v4046 = vpop.f32.mrf.mxu0
    %4047 = vmatprep.mubr.f32.mxu0 0.0
    %4048 = vmatmul.mubr.f32.gmra.mxu0 %v3976
    %v4049 = vpop.f32.mrf.mxu0
    %v4050 = vadd.f32 0.0, %v4049
    %v4051 = vpop.f32.mrf.mxu0
    %4052 = vdwg.mxu0
    %4053 = vrot.lane.b32.xlu0 %v2900, 48
    %v4054 = vpop.permute.xlu0 %4053
    %4055 = vrot.lane.b32.xlu0 %v2905, 48
    %v4056 = vpop.permute.xlu0 %4055
    %v4060 = vsel %vm308, %v3963, 0
    %v4063 = vsel %vm308, %v3965, 0
    %4065 = vmatprep.subr.mxu0 0.0
    %4066 = vmatpush1.msra.mxu0 0.0
    %4067 = vmatprep.subr.mxu0 0.0
    %4068 = vmatpush1.msra.mxu0 0.0
    %4069 = vmatprep.subr.mxu0 0.0
    %4070 = vmatpush1.msra.mxu0 0.0
    %4071 = vmatprep.subr.mxu0 0.0
    %4072 = vmatpush1.msra.mxu0 0.0
    %4073 = vmatprep.subr.mxu0 0.0
    %4074 = vmatpush1.msra.mxu0 0.0
    %4075 = vmatprep.subr.mxu0 0.0
    %4076 = vmatpush1.msra.mxu0 0.0
    %4077 = vmatprep.subr.mxu0 0.0
    %4078 = vmatpush1.msra.mxu0 0.0
    %4079 = vmatprep.subr.mxu0 0.0
    %4080 = vmatpush1.msra.mxu0 0.0
    %4081 = vmatprep.subr.mxu0 0.0
    %4082 = vmatpush1.msra.mxu0 0.0
    %4083 = vmatprep.subr.mxu0 0.0
    %4084 = vmatpush1.msra.mxu0 0.0
    %4085 = vmatprep.subr.mxu0 0.0
    %4086 = vmatpush1.msra.mxu0 0.0
    %4087 = vmatprep.subr.mxu0 0.0
    %4088 = vmatpush1.msra.mxu0 0.0
    %4089 = vmatprep.subr.mxu0 0.0
    %4090 = vmatpush1.msra.mxu0 0.0
    %4091 = vmatprep.subr.mxu0 0.0
    %4092 = vmatpush1.msra.mxu0 0.0
    %4093 = vmatprep.subr.mxu0 0.0
    %4094 = vmatpush1.msra.mxu0 %v4056
    %4095 = vmatprep.subr.mxu0 0.0
    %4096 = vmatpush1.msra.mxu0 %v4054
    %4097 = vmatprep.subr.mxu0 0.0
    %4098 = vmatpush2.msra.mxu0 0.0
    %4099 = vmatprep.subr.mxu0 0.0
    %4100 = vmatpush2.msra.mxu0 0.0
    %4101 = vmatprep.subr.mxu0 0.0
    %4102 = vmatpush2.msra.mxu0 0.0
    %4103 = vmatprep.subr.mxu0 0.0
    %4104 = vmatpush2.msra.mxu0 0.0
    %4105 = vmatprep.subr.mxu0 0.0
    %4106 = vmatpush2.msra.mxu0 0.0
    %4107 = vmatprep.subr.mxu0 0.0
    %4108 = vmatpush2.msra.mxu0 0.0
    %4109 = vmatprep.subr.mxu0 0.0
    %4110 = vmatpush2.msra.mxu0 0.0
    %4111 = vmatprep.subr.mxu0 0.0
    %4112 = vmatpush2.msra.mxu0 0.0
    %4113 = vmatprep.subr.mxu0 0.0
    %4114 = vmatpush2.msra.mxu0 0.0
    %4115 = vmatprep.subr.mxu0 0.0
    %4116 = vmatpush2.msra.mxu0 0.0
    %4117 = vmatprep.subr.mxu0 0.0
    %4118 = vmatpush2.msra.mxu0 0.0
    %4119 = vmatprep.subr.mxu0 0.0
    %4120 = vmatpush2.msra.mxu0 0.0
    %4121 = vmatprep.subr.mxu0 0.0
    %4122 = vmatpush2.msra.mxu0 0.0
    %4123 = vmatprep.subr.mxu0 0.0
    %4124 = vmatpush2.msra.mxu0 0.0
    %4125 = vmatprep.subr.mxu0 0.0
    %4126 = vmatpush2.msra.mxu0 0.0
    %4127 = vmatprep.subr.mxu0 0.0
    %4128 = vmatpush2.msra.mxu0 0.0
    %4129 = vmatprep.mubr.f32.mxu0 0.0
    %4130 = vmatmul.mubr.f32.gmra.mxu0 %v4060
    %v4131 = vpop.f32.mrf.mxu0
    %v4132 = vadd.f32 0.0, %v4131
    %v4133 = vpop.f32.mrf.mxu0
    %4134 = vmatprep.mubr.f32.mxu0 0.0
    %4135 = vmatmul.mubr.f32.gmra.mxu0 %v4063
    %v4136 = vpop.f32.mrf.mxu0
    %v4137 = vadd.f32 0.0, %v4136
    %v4138 = vpop.f32.mrf.mxu0
    %4139 = vdwg.mxu0
    %4144 = vrot.lane.b32.xlu0 %v4045, 16
    %v4145 = vpop.permute.xlu0 %4144
    %4146 = vrot.lane.b32.xlu0 %v4050, 16
    %v4147 = vpop.permute.xlu0 %4146
    %4148 = vrot.lane.b32.xlu0 %v4132, 16
    %v4149 = vpop.permute.xlu0 %4148
    %4150 = vrot.lane.b32.xlu0 %v4137, 16
    %v4151 = vpop.permute.xlu0 %4150
    %4156 = vst.msk [vmem:[#allocation2] sm:$0xff] %vm1857, %v4145
    %4157 = vst.msk [vmem:[#allocation2 + $0x8] sm:$0xff] %vm1857, %v4147
    %4158 = vst.msk [vmem:[#allocation2 + $0x10] sm:$0xff] %vm1857, %v4149
    %4159 = vst.msk [vmem:[#allocation2 + $0x18] sm:$0xff] %vm1857, %v4151
    %4160 = vrot.lane.b32.xlu0 %v2890, 104
    %v4161 = vpop.permute.xlu0 %4160
    %4162 = vrot.lane.b32.xlu0 %v2895, 104
    %v4163 = vpop.permute.xlu0 %4162
    %4164 = vrot.lane.b32.xlu0 %v2890, 72
    %v4165 = vpop.permute.xlu0 %4164
    %4166 = vrot.lane.b32.xlu0 %v2895, 72
    %v4167 = vpop.permute.xlu0 %4166
    %v4168 = vsel %vm613, %v4161, 0
    %v4170 = vsel %vm613, %v4163, 0
    %v4172 = vsel %vm613, %v4165, 0
    %v4174 = vsel %vm613, %v4167, 0
    %4176 = vmatprep.subr.mxu0 0.0
    %4177 = vmatpush1.xpose.msra.mxu0 0.0
    %4178 = vmatprep.subr.mxu0 0.0
    %4179 = vmatpush1.xpose.msra.mxu0 0.0
    %4180 = vmatprep.subr.mxu0 0.0
    %4181 = vmatpush1.xpose.msra.mxu0 0.0
    %4182 = vmatprep.subr.mxu0 0.0
    %4183 = vmatpush1.xpose.msra.mxu0 0.0
    %4184 = vmatprep.subr.mxu0 0.0
    %4185 = vmatpush1.xpose.msra.mxu0 0.0
    %4186 = vmatprep.subr.mxu0 0.0
    %4187 = vmatpush1.xpose.msra.mxu0 0.0
    %4188 = vmatprep.subr.mxu0 0.0
    %4189 = vmatpush1.xpose.msra.mxu0 0.0
    %4190 = vmatprep.subr.mxu0 0.0
    %4191 = vmatpush1.xpose.msra.mxu0 0.0
    %4192 = vmatprep.subr.mxu0 0.0
    %4193 = vmatpush1.xpose.msra.mxu0 0.0
    %4194 = vmatprep.subr.mxu0 0.0
    %4195 = vmatpush1.xpose.msra.mxu0 0.0
    %4196 = vmatprep.subr.mxu0 0.0
    %4197 = vmatpush1.xpose.msra.mxu0 0.0
    %4198 = vmatprep.subr.mxu0 0.0
    %4199 = vmatpush1.xpose.msra.mxu0 0.0
    %4200 = vmatprep.subr.mxu0 0.0
    %4201 = vmatpush1.xpose.msra.mxu0 0.0
    %4202 = vmatprep.subr.mxu0 0.0
    %4203 = vmatpush1.xpose.msra.mxu0 0.0
    %4204 = vmatprep.subr.mxu0 0.0
    %4205 = vmatpush1.xpose.msra.mxu0 %v4174
    %4206 = vmatprep.subr.mxu0 0.0
    %4207 = vmatpush1.xpose.msra.mxu0 %v4172
    %4208 = vmatprep.subr.mxu0 0.0
    %4209 = vmatpush2.xpose.msra.mxu0 0.0
    %4210 = vmatprep.subr.mxu0 0.0
    %4211 = vmatpush2.xpose.msra.mxu0 0.0
    %4212 = vmatprep.subr.mxu0 0.0
    %4213 = vmatpush2.xpose.msra.mxu0 0.0
    %4214 = vmatprep.subr.mxu0 0.0
    %4215 = vmatpush2.xpose.msra.mxu0 0.0
    %4216 = vmatprep.subr.mxu0 0.0
    %4217 = vmatpush2.xpose.msra.mxu0 0.0
    %4218 = vmatprep.subr.mxu0 0.0
    %4219 = vmatpush2.xpose.msra.mxu0 0.0
    %4220 = vmatprep.subr.mxu0 0.0
    %4221 = vmatpush2.xpose.msra.mxu0 0.0
    %4222 = vmatprep.subr.mxu0 0.0
    %4223 = vmatpush2.xpose.msra.mxu0 0.0
    %4224 = vmatprep.subr.mxu0 0.0
    %4225 = vmatpush2.xpose.msra.mxu0 0.0
    %4226 = vmatprep.subr.mxu0 0.0
    %4227 = vmatpush2.xpose.msra.mxu0 0.0
    %4228 = vmatprep.subr.mxu0 0.0
    %4229 = vmatpush2.xpose.msra.mxu0 0.0
    %4230 = vmatprep.subr.mxu0 0.0
    %4231 = vmatpush2.xpose.msra.mxu0 0.0
    %4232 = vmatprep.subr.mxu0 0.0
    %4233 = vmatpush2.xpose.msra.mxu0 0.0
    %4234 = vmatprep.subr.mxu0 0.0
    %4235 = vmatpush2.xpose.msra.mxu0 0.0
    %4236 = vmatprep.subr.mxu0 0.0
    %4237 = vmatpush2.xpose.msra.mxu0 0.0
    %4238 = vmatprep.subr.mxu0 0.0
    %4239 = vmatpush2.xpose.msra.mxu0 0.0
    %4240 = vmatprep.mubr.f32.mxu0 0.0
    %4241 = vmatmul.mubr.f32.gmra.mxu0 %v4168
    %v4242 = vpop.f32.mrf.mxu0
    %v4243 = vadd.f32 0.0, %v4242
    %v4244 = vpop.f32.mrf.mxu0
    %4245 = vmatprep.mubr.f32.mxu0 0.0
    %4246 = vmatmul.mubr.f32.gmra.mxu0 %v4170
    %v4247 = vpop.f32.mrf.mxu0
    %v4248 = vadd.f32 0.0, %v4247
    %v4249 = vpop.f32.mrf.mxu0
    %4250 = vdwg.mxu0
    %4251 = vrot.lane.b32.xlu0 %v2900, 104
    %v4252 = vpop.permute.xlu0 %4251
    %4253 = vrot.lane.b32.xlu0 %v2905, 104
    %v4254 = vpop.permute.xlu0 %4253
    %4255 = vrot.lane.b32.xlu0 %v2900, 72
    %v4256 = vpop.permute.xlu0 %4255
    %4257 = vrot.lane.b32.xlu0 %v2905, 72
    %v4258 = vpop.permute.xlu0 %4257
    %v4259 = vsel %vm613, %v4252, 0
    %v4261 = vsel %vm613, %v4254, 0
    %v4263 = vsel %vm613, %v4256, 0
    %v4265 = vsel %vm613, %v4258, 0
    %4267 = vmatprep.subr.mxu0 0.0
    %4268 = vmatpush1.xpose.msra.mxu0 0.0
    %4269 = vmatprep.subr.mxu0 0.0
    %4270 = vmatpush1.xpose.msra.mxu0 0.0
    %4271 = vmatprep.subr.mxu0 0.0
    %4272 = vmatpush1.xpose.msra.mxu0 0.0
    %4273 = vmatprep.subr.mxu0 0.0
    %4274 = vmatpush1.xpose.msra.mxu0 0.0
    %4275 = vmatprep.subr.mxu0 0.0
    %4276 = vmatpush1.xpose.msra.mxu0 0.0
    %4277 = vmatprep.subr.mxu0 0.0
    %4278 = vmatpush1.xpose.msra.mxu0 0.0
    %4279 = vmatprep.subr.mxu0 0.0
    %4280 = vmatpush1.xpose.msra.mxu0 0.0
    %4281 = vmatprep.subr.mxu0 0.0
    %4282 = vmatpush1.xpose.msra.mxu0 0.0
    %4283 = vmatprep.subr.mxu0 0.0
    %4284 = vmatpush1.xpose.msra.mxu0 0.0
    %4285 = vmatprep.subr.mxu0 0.0
    %4286 = vmatpush1.xpose.msra.mxu0 0.0
    %4287 = vmatprep.subr.mxu0 0.0
    %4288 = vmatpush1.xpose.msra.mxu0 0.0
    %4289 = vmatprep.subr.mxu0 0.0
    %4290 = vmatpush1.xpose.msra.mxu0 0.0
    %4291 = vmatprep.subr.mxu0 0.0
    %4292 = vmatpush1.xpose.msra.mxu0 0.0
    %4293 = vmatprep.subr.mxu0 0.0
    %4294 = vmatpush1.xpose.msra.mxu0 0.0
    %4295 = vmatprep.subr.mxu0 0.0
    %4296 = vmatpush1.xpose.msra.mxu0 %v4265
    %4297 = vmatprep.subr.mxu0 0.0
    %4298 = vmatpush1.xpose.msra.mxu0 %v4263
    %4299 = vmatprep.subr.mxu0 0.0
    %4300 = vmatpush2.xpose.msra.mxu0 0.0
    %4301 = vmatprep.subr.mxu0 0.0
    %4302 = vmatpush2.xpose.msra.mxu0 0.0
    %4303 = vmatprep.subr.mxu0 0.0
    %4304 = vmatpush2.xpose.msra.mxu0 0.0
    %4305 = vmatprep.subr.mxu0 0.0
    %4306 = vmatpush2.xpose.msra.mxu0 0.0
    %4307 = vmatprep.subr.mxu0 0.0
    %4308 = vmatpush2.xpose.msra.mxu0 0.0
    %4309 = vmatprep.subr.mxu0 0.0
    %4310 = vmatpush2.xpose.msra.mxu0 0.0
    %4311 = vmatprep.subr.mxu0 0.0
    %4312 = vmatpush2.xpose.msra.mxu0 0.0
    %4313 = vmatprep.subr.mxu0 0.0
    %4314 = vmatpush2.xpose.msra.mxu0 0.0
    %4315 = vmatprep.subr.mxu0 0.0
    %4316 = vmatpush2.xpose.msra.mxu0 0.0
    %4317 = vmatprep.subr.mxu0 0.0
    %4318 = vmatpush2.xpose.msra.mxu0 0.0
    %4319 = vmatprep.subr.mxu0 0.0
    %4320 = vmatpush2.xpose.msra.mxu0 0.0
    %4321 = vmatprep.subr.mxu0 0.0
    %4322 = vmatpush2.xpose.msra.mxu0 0.0
    %4323 = vmatprep.subr.mxu0 0.0
    %4324 = vmatpush2.xpose.msra.mxu0 0.0
    %4325 = vmatprep.subr.mxu0 0.0
    %4326 = vmatpush2.xpose.msra.mxu0 0.0
    %4327 = vmatprep.subr.mxu0 0.0
    %4328 = vmatpush2.xpose.msra.mxu0 0.0
    %4329 = vmatprep.subr.mxu0 0.0
    %4330 = vmatpush2.xpose.msra.mxu0 0.0
    %4331 = vmatprep.mubr.f32.mxu0 0.0
    %4332 = vmatmul.mubr.f32.gmra.mxu0 %v4259
    %v4333 = vpop.f32.mrf.mxu0
    %v4334 = vadd.f32 0.0, %v4333
    %v4335 = vpop.f32.mrf.mxu0
    %4336 = vmatprep.mubr.f32.mxu0 0.0
    %4337 = vmatmul.mubr.f32.gmra.mxu0 %v4261
    %v4338 = vpop.f32.mrf.mxu0
    %v4339 = vadd.f32 0.0, %v4338
    %v4340 = vpop.f32.mrf.mxu0
    %4341 = vdwg.mxu0
    %v4342 = vmul.f32 %v4243, 0.35355338
    %v4343 = vmul.f32 %v4248, 0.35355338
    %v4344 = vmul.f32 %v4334, 0.35355338
    %v4345 = vmul.f32 %v4339, 0.35355338
    %v4346 = vsel %vm308, %v4342, -inf
    %4347 = vmax.xlane.f32.xlu0 %v4346
    %v4348 = vpop.xlane.xlu0 %4347
    %v4349 = vsel %vm308, %v4343, -inf
    %4350 = vmax.xlane.f32.xlu0 %v4349
    %v4351 = vpop.xlane.xlu0 %4350
    %v4352 = vsel %vm308, %v4344, -inf
    %4353 = vmax.xlane.f32.xlu0 %v4352
    %v4354 = vpop.xlane.xlu0 %4353
    %v4355 = vsel %vm308, %v4345, -inf
    %4356 = vmax.xlane.f32.xlu0 %v4355
    %v4357 = vpop.xlane.xlu0 %4356
    %v4358 = vsub.f32 %v4342, %v4348
    %v4359 = vsub.f32 %v4343, %v4351
    %v4360 = vsub.f32 %v4344, %v4354
    %v4361 = vsub.f32 %v4345, %v4357
    %v4362 = vmul.f32 %v4358, 1.442695
    %v4363 = vpow.pop %v4362
    %v4364 = vmul.f32 %v4359, 1.442695
    %v4365 = vpow.pop %v4364
    %v4366 = vmul.f32 %v4360, 1.442695
    %v4367 = vpow.pop %v4366
    %v4368 = vmul.f32 %v4361, 1.442695
    %v4369 = vpow.pop %v4368
    %v4370 = vsel %vm308, %v4363, 0.0
    %4371 = vadd.xlane.f32.xlu0 %v4370
    %v4372 = vpop.xlane.xlu0 %4371
    %v4373 = vsel %vm308, %v4365, 0.0
    %4374 = vadd.xlane.f32.xlu0 %v4373
    %v4375 = vpop.xlane.xlu0 %4374
    %v4376 = vsel %vm308, %v4367, 0.0
    %4377 = vadd.xlane.f32.xlu0 %v4376
    %v4378 = vpop.xlane.xlu0 %4377
    %v4379 = vsel %vm308, %v4369, 0.0
    %4380 = vadd.xlane.f32.xlu0 %v4379
    %v4381 = vpop.xlane.xlu0 %4380
    %v4382 = vrcp.pop %v4372
    %v4383 = vmul.f32 %v4363, %v4382
    %v4384 = vrcp.pop %v4375
    %v4385 = vmul.f32 %v4365, %v4384
    %v4386 = vrcp.pop %v4378
    %v4387 = vmul.f32 %v4367, %v4386
    %v4388 = vrcp.pop %v4381
    %v4389 = vmul.f32 %v4369, %v4388
    %4390 = vrot.lane.b32.xlu0 %v2890, 40
    %v4391 = vpop.permute.xlu0 %4390
    %4392 = vrot.lane.b32.xlu0 %v2895, 40
    %v4393 = vpop.permute.xlu0 %4392
    %v4397 = vsel %vm308, %v4383, 0
    %v4400 = vsel %vm308, %v4385, 0
    %4402 = vmatprep.subr.mxu0 0.0
    %4403 = vmatpush1.msra.mxu0 0.0
    %4404 = vmatprep.subr.mxu0 0.0
    %4405 = vmatpush1.msra.mxu0 0.0
    %4406 = vmatprep.subr.mxu0 0.0
    %4407 = vmatpush1.msra.mxu0 0.0
    %4408 = vmatprep.subr.mxu0 0.0
    %4409 = vmatpush1.msra.mxu0 0.0
    %4410 = vmatprep.subr.mxu0 0.0
    %4411 = vmatpush1.msra.mxu0 0.0
    %4412 = vmatprep.subr.mxu0 0.0
    %4413 = vmatpush1.msra.mxu0 0.0
    %4414 = vmatprep.subr.mxu0 0.0
    %4415 = vmatpush1.msra.mxu0 0.0
    %4416 = vmatprep.subr.mxu0 0.0
    %4417 = vmatpush1.msra.mxu0 0.0
    %4418 = vmatprep.subr.mxu0 0.0
    %4419 = vmatpush1.msra.mxu0 0.0
    %4420 = vmatprep.subr.mxu0 0.0
    %4421 = vmatpush1.msra.mxu0 0.0
    %4422 = vmatprep.subr.mxu0 0.0
    %4423 = vmatpush1.msra.mxu0 0.0
    %4424 = vmatprep.subr.mxu0 0.0
    %4425 = vmatpush1.msra.mxu0 0.0
    %4426 = vmatprep.subr.mxu0 0.0
    %4427 = vmatpush1.msra.mxu0 0.0
    %4428 = vmatprep.subr.mxu0 0.0
    %4429 = vmatpush1.msra.mxu0 0.0
    %4430 = vmatprep.subr.mxu0 0.0
    %4431 = vmatpush1.msra.mxu0 %v4393
    %4432 = vmatprep.subr.mxu0 0.0
    %4433 = vmatpush1.msra.mxu0 %v4391
    %4434 = vmatprep.subr.mxu0 0.0
    %4435 = vmatpush2.msra.mxu0 0.0
    %4436 = vmatprep.subr.mxu0 0.0
    %4437 = vmatpush2.msra.mxu0 0.0
    %4438 = vmatprep.subr.mxu0 0.0
    %4439 = vmatpush2.msra.mxu0 0.0
    %4440 = vmatprep.subr.mxu0 0.0
    %4441 = vmatpush2.msra.mxu0 0.0
    %4442 = vmatprep.subr.mxu0 0.0
    %4443 = vmatpush2.msra.mxu0 0.0
    %4444 = vmatprep.subr.mxu0 0.0
    %4445 = vmatpush2.msra.mxu0 0.0
    %4446 = vmatprep.subr.mxu0 0.0
    %4447 = vmatpush2.msra.mxu0 0.0
    %4448 = vmatprep.subr.mxu0 0.0
    %4449 = vmatpush2.msra.mxu0 0.0
    %4450 = vmatprep.subr.mxu0 0.0
    %4451 = vmatpush2.msra.mxu0 0.0
    %4452 = vmatprep.subr.mxu0 0.0
    %4453 = vmatpush2.msra.mxu0 0.0
    %4454 = vmatprep.subr.mxu0 0.0
    %4455 = vmatpush2.msra.mxu0 0.0
    %4456 = vmatprep.subr.mxu0 0.0
    %4457 = vmatpush2.msra.mxu0 0.0
    %4458 = vmatprep.subr.mxu0 0.0
    %4459 = vmatpush2.msra.mxu0 0.0
    %4460 = vmatprep.subr.mxu0 0.0
    %4461 = vmatpush2.msra.mxu0 0.0
    %4462 = vmatprep.subr.mxu0 0.0
    %4463 = vmatpush2.msra.mxu0 0.0
    %4464 = vmatprep.subr.mxu0 0.0
    %4465 = vmatpush2.msra.mxu0 0.0
    %4466 = vmatprep.mubr.f32.mxu0 0.0
    %4467 = vmatmul.mubr.f32.gmra.mxu0 %v4397
    %v4468 = vpop.f32.mrf.mxu0
    %v4469 = vadd.f32 0.0, %v4468
    %v4470 = vpop.f32.mrf.mxu0
    %4471 = vmatprep.mubr.f32.mxu0 0.0
    %4472 = vmatmul.mubr.f32.gmra.mxu0 %v4400
    %v4473 = vpop.f32.mrf.mxu0
    %v4474 = vadd.f32 0.0, %v4473
    %v4475 = vpop.f32.mrf.mxu0
    %4476 = vdwg.mxu0
    %4477 = vrot.lane.b32.xlu0 %v2900, 40
    %v4478 = vpop.permute.xlu0 %4477
    %4479 = vrot.lane.b32.xlu0 %v2905, 40
    %v4480 = vpop.permute.xlu0 %4479
    %v4484 = vsel %vm308, %v4387, 0
    %v4487 = vsel %vm308, %v4389, 0
    %4489 = vmatprep.subr.mxu0 0.0
    %4490 = vmatpush1.msra.mxu0 0.0
    %4491 = vmatprep.subr.mxu0 0.0
    %4492 = vmatpush1.msra.mxu0 0.0
    %4493 = vmatprep.subr.mxu0 0.0
    %4494 = vmatpush1.msra.mxu0 0.0
    %4495 = vmatprep.subr.mxu0 0.0
    %4496 = vmatpush1.msra.mxu0 0.0
    %4497 = vmatprep.subr.mxu0 0.0
    %4498 = vmatpush1.msra.mxu0 0.0
    %4499 = vmatprep.subr.mxu0 0.0
    %4500 = vmatpush1.msra.mxu0 0.0
    %4501 = vmatprep.subr.mxu0 0.0
    %4502 = vmatpush1.msra.mxu0 0.0
    %4503 = vmatprep.subr.mxu0 0.0
    %4504 = vmatpush1.msra.mxu0 0.0
    %4505 = vmatprep.subr.mxu0 0.0
    %4506 = vmatpush1.msra.mxu0 0.0
    %4507 = vmatprep.subr.mxu0 0.0
    %4508 = vmatpush1.msra.mxu0 0.0
    %4509 = vmatprep.subr.mxu0 0.0
    %4510 = vmatpush1.msra.mxu0 0.0
    %4511 = vmatprep.subr.mxu0 0.0
    %4512 = vmatpush1.msra.mxu0 0.0
    %4513 = vmatprep.subr.mxu0 0.0
    %4514 = vmatpush1.msra.mxu0 0.0
    %4515 = vmatprep.subr.mxu0 0.0
    %4516 = vmatpush1.msra.mxu0 0.0
    %4517 = vmatprep.subr.mxu0 0.0
    %4518 = vmatpush1.msra.mxu0 %v4480
    %4519 = vmatprep.subr.mxu0 0.0
    %4520 = vmatpush1.msra.mxu0 %v4478
    %4521 = vmatprep.subr.mxu0 0.0
    %4522 = vmatpush2.msra.mxu0 0.0
    %4523 = vmatprep.subr.mxu0 0.0
    %4524 = vmatpush2.msra.mxu0 0.0
    %4525 = vmatprep.subr.mxu0 0.0
    %4526 = vmatpush2.msra.mxu0 0.0
    %4527 = vmatprep.subr.mxu0 0.0
    %4528 = vmatpush2.msra.mxu0 0.0
    %4529 = vmatprep.subr.mxu0 0.0
    %4530 = vmatpush2.msra.mxu0 0.0
    %4531 = vmatprep.subr.mxu0 0.0
    %4532 = vmatpush2.msra.mxu0 0.0
    %4533 = vmatprep.subr.mxu0 0.0
    %4534 = vmatpush2.msra.mxu0 0.0
    %4535 = vmatprep.subr.mxu0 0.0
    %4536 = vmatpush2.msra.mxu0 0.0
    %4537 = vmatprep.subr.mxu0 0.0
    %4538 = vmatpush2.msra.mxu0 0.0
    %4539 = vmatprep.subr.mxu0 0.0
    %4540 = vmatpush2.msra.mxu0 0.0
    %4541 = vmatprep.subr.mxu0 0.0
    %4542 = vmatpush2.msra.mxu0 0.0
    %4543 = vmatprep.subr.mxu0 0.0
    %4544 = vmatpush2.msra.mxu0 0.0
    %4545 = vmatprep.subr.mxu0 0.0
    %4546 = vmatpush2.msra.mxu0 0.0
    %4547 = vmatprep.subr.mxu0 0.0
    %4548 = vmatpush2.msra.mxu0 0.0
    %4549 = vmatprep.subr.mxu0 0.0
    %4550 = vmatpush2.msra.mxu0 0.0
    %4551 = vmatprep.subr.mxu0 0.0
    %4552 = vmatpush2.msra.mxu0 0.0
    %4553 = vmatprep.mubr.f32.mxu0 0.0
    %4554 = vmatmul.mubr.f32.gmra.mxu0 %v4484
    %v4555 = vpop.f32.mrf.mxu0
    %v4556 = vadd.f32 0.0, %v4555
    %v4557 = vpop.f32.mrf.mxu0
    %4558 = vmatprep.mubr.f32.mxu0 0.0
    %4559 = vmatmul.mubr.f32.gmra.mxu0 %v4487
    %v4560 = vpop.f32.mrf.mxu0
    %v4561 = vadd.f32 0.0, %v4560
    %v4562 = vpop.f32.mrf.mxu0
    %4563 = vdwg.mxu0
    %4568 = vrot.lane.b32.xlu0 %v4469, 24
    %v4569 = vpop.permute.xlu0 %4568
    %4570 = vrot.lane.b32.xlu0 %v4474, 24
    %v4571 = vpop.permute.xlu0 %4570
    %4572 = vrot.lane.b32.xlu0 %v4556, 24
    %v4573 = vpop.permute.xlu0 %4572
    %4574 = vrot.lane.b32.xlu0 %v4561, 24
    %v4575 = vpop.permute.xlu0 %4574
    %4580 = vst.msk [vmem:[#allocation2] sm:$0xff] %vm2282, %v4569
    %4581 = vst.msk [vmem:[#allocation2 + $0x8] sm:$0xff] %vm2282, %v4571
    %4582 = vst.msk [vmem:[#allocation2 + $0x10] sm:$0xff] %vm2282, %v4573
    %4583 = vst.msk [vmem:[#allocation2 + $0x18] sm:$0xff] %vm2282, %v4575
    %v4584 = vld [vmem:[#allocation2] sm:$0xff]
    %v4585 = vld [vmem:[#allocation2 + $0x8] sm:$0xff]
    %v4586 = vld [vmem:[#allocation2 + $0x10] sm:$0xff]
    %v4587 = vld [vmem:[#allocation2 + $0x18] sm:$0xff]
    %s4588 = scalar_lea.vmem %s8, 32
    %v4589 = vld [vmem:[%s4588] sm:$0xff]
    %v4590 = vld [vmem:[%s4588 + $0x8] sm:$0xff]
    %v4591 = vld [vmem:[%s4588 + $0x10] sm:$0xff]
    %v4592 = vld [vmem:[%s4588 + $0x18] sm:$0xff]
    %s4593 = scalar_lea.vmem [#allocation15], 1
    %v4594 = vld [vmem:[%s4593] sm:$0x1]
    %v4596 = vlaneseq
    %v4597 = vshrl.u32 %v4596, 7
    %v4598 = vsub.s32 0, %v4597
    %v4599 = vrot.slane %v4594, %v4598
    %v4602 = vsel %vm425, %v4584, 0
    %v4605 = vsel %vm425, %v4585, 0
    %v4608 = vsel %vm425, %v4586, 0
    %v4611 = vsel %vm425, %v4587, 0
    %4613 = vmatprep.subr.mxu0 0.0
    %4614 = vmatpush1.msra.mxu0 0.0
    %4615 = vmatprep.subr.mxu0 0.0
    %4616 = vmatpush1.msra.mxu0 0.0
    %4617 = vmatprep.subr.mxu0 0.0
    %4618 = vmatpush1.msra.mxu0 0.0
    %4619 = vmatprep.subr.mxu0 0.0
    %4620 = vmatpush1.msra.mxu0 0.0
    %4621 = vmatprep.subr.mxu0 0.0
    %4622 = vmatpush1.msra.mxu0 0.0
    %4623 = vmatprep.subr.mxu0 0.0
    %4624 = vmatpush1.msra.mxu0 0.0
    %4625 = vmatprep.subr.mxu0 0.0
    %4626 = vmatpush1.msra.mxu0 0.0
    %4627 = vmatprep.subr.mxu0 0.0
    %4628 = vmatpush1.msra.mxu0 0.0
    %4629 = vmatprep.subr.mxu0 0.0
    %4630 = vmatpush1.msra.mxu0 0.0
    %4631 = vmatprep.subr.mxu0 0.0
    %4632 = vmatpush1.msra.mxu0 0.0
    %4633 = vmatprep.subr.mxu0 0.0
    %4634 = vmatpush1.msra.mxu0 0.0
    %4635 = vmatprep.subr.mxu0 0.0
    %4636 = vmatpush1.msra.mxu0 0.0
    %4637 = vmatprep.subr.mxu0 0.0
    %4638 = vmatpush1.msra.mxu0 %v4592
    %4639 = vmatprep.subr.mxu0 0.0
    %4640 = vmatpush1.msra.mxu0 %v4591
    %4641 = vmatprep.subr.mxu0 0.0
    %4642 = vmatpush1.msra.mxu0 %v4590
    %4643 = vmatprep.subr.mxu0 0.0
    %4644 = vmatpush1.msra.mxu0 %v4589
    %4645 = vmatprep.subr.mxu0 0.0
    %4646 = vmatpush2.msra.mxu0 0.0
    %4647 = vmatprep.subr.mxu0 0.0
    %4648 = vmatpush2.msra.mxu0 0.0
    %4649 = vmatprep.subr.mxu0 0.0
    %4650 = vmatpush2.msra.mxu0 0.0
    %4651 = vmatprep.subr.mxu0 0.0
    %4652 = vmatpush2.msra.mxu0 0.0
    %4653 = vmatprep.subr.mxu0 0.0
    %4654 = vmatpush2.msra.mxu0 0.0
    %4655 = vmatprep.subr.mxu0 0.0
    %4656 = vmatpush2.msra.mxu0 0.0
    %4657 = vmatprep.subr.mxu0 0.0
    %4658 = vmatpush2.msra.mxu0 0.0
    %4659 = vmatprep.subr.mxu0 0.0
    %4660 = vmatpush2.msra.mxu0 0.0
    %4661 = vmatprep.subr.mxu0 0.0
    %4662 = vmatpush2.msra.mxu0 0.0
    %4663 = vmatprep.subr.mxu0 0.0
    %4664 = vmatpush2.msra.mxu0 0.0
    %4665 = vmatprep.subr.mxu0 0.0
    %4666 = vmatpush2.msra.mxu0 0.0
    %4667 = vmatprep.subr.mxu0 0.0
    %4668 = vmatpush2.msra.mxu0 0.0
    %4669 = vmatprep.subr.mxu0 0.0
    %4670 = vmatpush2.msra.mxu0 0.0
    %4671 = vmatprep.subr.mxu0 0.0
    %4672 = vmatpush2.msra.mxu0 0.0
    %4673 = vmatprep.subr.mxu0 0.0
    %4674 = vmatpush2.msra.mxu0 0.0
    %4675 = vmatprep.subr.mxu0 0.0
    %4676 = vmatpush2.msra.mxu0 0.0
    %4677 = vmatprep.mubr.f32.mxu0 0.0
    %4678 = vmatmul.mubr.f32.gmra.mxu0 %v4602
    %v4679 = vpop.f32.mrf.mxu0
    %v4680 = vadd.f32 %v4599, %v4679
    %v4681 = vpop.f32.mrf.mxu0
    %4682 = vmatprep.mubr.f32.mxu0 0.0
    %4683 = vmatmul.mubr.f32.gmra.mxu0 %v4605
    %v4684 = vpop.f32.mrf.mxu0
    %v4685 = vadd.f32 %v4599, %v4684
    %v4686 = vpop.f32.mrf.mxu0
    %4687 = vmatprep.mubr.f32.mxu0 0.0
    %4688 = vmatmul.mubr.f32.gmra.mxu0 %v4608
    %v4689 = vpop.f32.mrf.mxu0
    %v4690 = vadd.f32 %v4599, %v4689
    %v4691 = vpop.f32.mrf.mxu0
    %4692 = vmatprep.mubr.f32.mxu0 0.0
    %4693 = vmatmul.mubr.f32.gmra.mxu0 %v4611
    %v4694 = vpop.f32.mrf.mxu0
    %v4695 = vadd.f32 %v4599, %v4694
    %v4696 = vpop.f32.mrf.mxu0
    %4697 = vdwg.mxu0
    %v4698 = vadd.f32 %v2718, %v4680
    %v4699 = vadd.f32 %v2719, %v4685
    %v4700 = vadd.f32 %v2720, %v4690
    %v4701 = vadd.f32 %v2721, %v4695
    %s4702 = scalar_lea.vmem [#allocation17], 1
    %v4703 = vld [vmem:[%s4702] sm:$0x1]
    %s4704 = scalar_lea.vmem [#allocation18], 1
    %v4705 = vld [vmem:[%s4704] sm:$0x1]
    %v4706 = vsel %vm425, %v4698, 0.0
    %4707 = vadd.xlane.f32.xlu0 %v4706
    %v4708 = vpop.xlane.xlu0 %4707
    %v4709 = vsel %vm425, %v4699, 0.0
    %4710 = vadd.xlane.f32.xlu0 %v4709
    %v4711 = vpop.xlane.xlu0 %4710
    %v4712 = vsel %vm425, %v4700, 0.0
    %4713 = vadd.xlane.f32.xlu0 %v4712
    %v4714 = vpop.xlane.xlu0 %4713
    %v4715 = vsel %vm425, %v4701, 0.0
    %4716 = vadd.xlane.f32.xlu0 %v4715
    %v4717 = vpop.xlane.xlu0 %4716
    %v4718 = vmul.f32 %v4708, %v438
    %v4719 = vmul.f32 %v4711, %v438
    %v4720 = vmul.f32 %v4714, %v438
    %v4721 = vmul.f32 %v4717, %v438
    %v4722 = vsub.f32 %v4698, %v4718
    %v4723 = vsub.f32 %v4699, %v4719
    %v4724 = vsub.f32 %v4700, %v4720
    %v4725 = vsub.f32 %v4701, %v4721
    %v4726 = vmul.f32 %v4722, %v4722
    %v4727 = vmul.f32 %v4723, %v4723
    %v4728 = vmul.f32 %v4724, %v4724
    %v4729 = vmul.f32 %v4725, %v4725
    %v4730 = vsel %vm425, %v4726, 0.0
    %4731 = vadd.xlane.f32.xlu0 %v4730
    %v4732 = vpop.xlane.xlu0 %4731
    %v4733 = vsel %vm425, %v4727, 0.0
    %4734 = vadd.xlane.f32.xlu0 %v4733
    %v4735 = vpop.xlane.xlu0 %4734
    %v4736 = vsel %vm425, %v4728, 0.0
    %4737 = vadd.xlane.f32.xlu0 %v4736
    %v4738 = vpop.xlane.xlu0 %4737
    %v4739 = vsel %vm425, %v4729, 0.0
    %4740 = vadd.xlane.f32.xlu0 %v4739
    %v4741 = vpop.xlane.xlu0 %4740
    %v4742 = vmul.f32 %v4732, %v438
    %v4743 = vmul.f32 %v4735, %v438
    %v4744 = vmul.f32 %v4738, %v438
    %v4745 = vmul.f32 %v4741, %v438
    %v4746 = vadd.f32 %v4742, 1e-05
    %v4747 = vadd.f32 %v4743, 1e-05
    %v4748 = vadd.f32 %v4744, 1e-05
    %v4749 = vadd.f32 %v4745, 1e-05
    %v4750 = vrsqrt.pop %v4746
    %v4751 = vrsqrt.pop %v4747
    %v4752 = vrsqrt.pop %v4748
    %v4753 = vrsqrt.pop %v4749
    %v4754 = vmul.f32 %v4722, %v4750
    %v4755 = vmul.f32 %v4723, %v4751
    %v4756 = vmul.f32 %v4724, %v4752
    %v4757 = vmul.f32 %v4725, %v4753
    %v4759 = vlaneseq
    %v4760 = vshrl.u32 %v4759, 7
    %v4761 = vsub.s32 0, %v4760
    %v4762 = vrot.slane %v4703, %v4761
    %v4764 = vmul.f32 %v4754, %v4762
    %v4765 = vmul.f32 %v4755, %v4762
    %v4766 = vmul.f32 %v4756, %v4762
    %v4767 = vmul.f32 %v4757, %v4762
    %v4769 = vlaneseq
    %v4770 = vshrl.u32 %v4769, 7
    %v4771 = vsub.s32 0, %v4770
    %v4772 = vrot.slane %v4705, %v4771
    %v4774 = vadd.f32 %v4764, %v4772
    %v4775 = vadd.f32 %v4765, %v4772
    %v4776 = vadd.f32 %v4766, %v4772
    %v4777 = vadd.f32 %v4767, %v4772
    %s4778 = scalar_lea.vmem %s12, 32
    %v4779 = vld [vmem:[%s4778] sm:$0xff]
    %v4780 = vld [vmem:[%s4778 + $0x8] sm:$0xff]
    %v4781 = vld [vmem:[%s4778 + $0x10] sm:$0xff]
    %v4782 = vld [vmem:[%s4778 + $0x18] sm:$0xff]
    %s4783 = scalar_lea.vmem [#allocation20], 1
    %v4784 = vld [vmem:[%s4783] sm:$0x1]
    %v4786 = vlaneseq
    %v4787 = vshrl.u32 %v4786, 7
    %v4788 = vsub.s32 0, %v4787
    %v4789 = vrot.slane %v4784, %v4788
    %v4792 = vsel %vm425, %v4774, 0
    %v4795 = vsel %vm425, %v4775, 0
    %v4798 = vsel %vm425, %v4776, 0
    %v4801 = vsel %vm425, %v4777, 0
    %4803 = vmatprep.subr.mxu0 0.0
    %4804 = vmatpush1.msra.mxu0 0.0
    %4805 = vmatprep.subr.mxu0 0.0
    %4806 = vmatpush1.msra.mxu0 0.0
    %4807 = vmatprep.subr.mxu0 0.0
    %4808 = vmatpush1.msra.mxu0 0.0
    %4809 = vmatprep.subr.mxu0 0.0
    %4810 = vmatpush1.msra.mxu0 0.0
    %4811 = vmatprep.subr.mxu0 0.0
    %4812 = vmatpush1.msra.mxu0 0.0
    %4813 = vmatprep.subr.mxu0 0.0
    %4814 = vmatpush1.msra.mxu0 0.0
    %4815 = vmatprep.subr.mxu0 0.0
    %4816 = vmatpush1.msra.mxu0 0.0
    %4817 = vmatprep.subr.mxu0 0.0
    %4818 = vmatpush1.msra.mxu0 0.0
    %4819 = vmatprep.subr.mxu0 0.0
    %4820 = vmatpush1.msra.mxu0 0.0
    %4821 = vmatprep.subr.mxu0 0.0
    %4822 = vmatpush1.msra.mxu0 0.0
    %4823 = vmatprep.subr.mxu0 0.0
    %4824 = vmatpush1.msra.mxu0 0.0
    %4825 = vmatprep.subr.mxu0 0.0
    %4826 = vmatpush1.msra.mxu0 0.0
    %4827 = vmatprep.subr.mxu0 0.0
    %4828 = vmatpush1.msra.mxu0 %v4782
    %4829 = vmatprep.subr.mxu0 0.0
    %4830 = vmatpush1.msra.mxu0 %v4781
    %4831 = vmatprep.subr.mxu0 0.0
    %4832 = vmatpush1.msra.mxu0 %v4780
    %4833 = vmatprep.subr.mxu0 0.0
    %4834 = vmatpush1.msra.mxu0 %v4779
    %4835 = vmatprep.subr.mxu0 0.0
    %4836 = vmatpush2.msra.mxu0 0.0
    %4837 = vmatprep.subr.mxu0 0.0
    %4838 = vmatpush2.msra.mxu0 0.0
    %4839 = vmatprep.subr.mxu0 0.0
    %4840 = vmatpush2.msra.mxu0 0.0
    %4841 = vmatprep.subr.mxu0 0.0
    %4842 = vmatpush2.msra.mxu0 0.0
    %4843 = vmatprep.subr.mxu0 0.0
    %4844 = vmatpush2.msra.mxu0 0.0
    %4845 = vmatprep.subr.mxu0 0.0
    %4846 = vmatpush2.msra.mxu0 0.0
    %4847 = vmatprep.subr.mxu0 0.0
    %4848 = vmatpush2.msra.mxu0 0.0
    %4849 = vmatprep.subr.mxu0 0.0
    %4850 = vmatpush2.msra.mxu0 0.0
    %4851 = vmatprep.subr.mxu0 0.0
    %4852 = vmatpush2.msra.mxu0 0.0
    %4853 = vmatprep.subr.mxu0 0.0
    %4854 = vmatpush2.msra.mxu0 0.0
    %4855 = vmatprep.subr.mxu0 0.0
    %4856 = vmatpush2.msra.mxu0 0.0
    %4857 = vmatprep.subr.mxu0 0.0
    %4858 = vmatpush2.msra.mxu0 0.0
    %4859 = vmatprep.subr.mxu0 0.0
    %4860 = vmatpush2.msra.mxu0 0.0
    %4861 = vmatprep.subr.mxu0 0.0
    %4862 = vmatpush2.msra.mxu0 0.0
    %4863 = vmatprep.subr.mxu0 0.0
    %4864 = vmatpush2.msra.mxu0 0.0
    %4865 = vmatprep.subr.mxu0 0.0
    %4866 = vmatpush2.msra.mxu0 0.0
    %4867 = vmatprep.mubr.f32.mxu0 0.0
    %4868 = vmatmul.mubr.f32.gmra.mxu0 %v4792
    %v4869 = vpop.f32.mrf.mxu0
    %v4870 = vadd.f32 %v4789, %v4869
    %v4871 = vpop.f32.mrf.mxu0
    %4872 = vmatprep.mubr.f32.mxu0 0.0
    %4873 = vmatmul.mubr.f32.gmra.mxu0 %v4795
    %v4874 = vpop.f32.mrf.mxu0
    %v4875 = vadd.f32 %v4789, %v4874
    %v4876 = vpop.f32.mrf.mxu0
    %4877 = vmatprep.mubr.f32.mxu0 0.0
    %4878 = vmatmul.mubr.f32.gmra.mxu0 %v4798
    %v4879 = vpop.f32.mrf.mxu0
    %v4880 = vadd.f32 %v4789, %v4879
    %v4881 = vpop.f32.mrf.mxu0
    %4882 = vmatprep.mubr.f32.mxu0 0.0
    %4883 = vmatmul.mubr.f32.gmra.mxu0 %v4801
    %v4884 = vpop.f32.mrf.mxu0
    %v4885 = vadd.f32 %v4789, %v4884
    %v4886 = vpop.f32.mrf.mxu0
    %4887 = vdwg.mxu0
    %v4888 = vmul.f32 %v4870, 0.5
    %v4889 = vmul.f32 %v4875, 0.5
    %v4890 = vmul.f32 %v4880, 0.5
    %v4891 = vmul.f32 %v4885, 0.5
    %v4892 = vmul.f32 %v4870, 0.70710677
    %v4893 = vmul.f32 %v4875, 0.70710677
    %v4894 = vmul.f32 %v4880, 0.70710677
    %v4895 = vmul.f32 %v4885, 0.70710677
    %v4896 = verf.f32.pop %v4892
    %v4897 = verf.f32.pop %v4893
    %v4898 = verf.f32.pop %v4894
    %v4899 = verf.f32.pop %v4895
    %v4900 = vadd.f32 %v4896, 1.0
    %v4901 = vadd.f32 %v4897, 1.0
    %v4902 = vadd.f32 %v4898, 1.0
    %v4903 = vadd.f32 %v4899, 1.0
    %v4904 = vmul.f32 %v4888, %v4900
    %v4905 = vmul.f32 %v4889, %v4901
    %v4906 = vmul.f32 %v4890, %v4902
    %v4907 = vmul.f32 %v4891, %v4903
    %s4908 = scalar_lea.vmem %s14, 64
    %v4909 = vld [vmem:[%s4908] sm:$0xff]
    %v4910 = vld [vmem:[%s4908 + $0x8] sm:$0xff]
    %v4911 = vld [vmem:[%s4908 + $0x10] sm:$0xff]
    %v4912 = vld [vmem:[%s4908 + $0x18] sm:$0xff]
    %v4913 = vld [vmem:[%s4908 + $0x20] sm:$0xff]
    %v4914 = vld [vmem:[%s4908 + $0x28] sm:$0xff]
    %v4915 = vld [vmem:[%s4908 + $0x30] sm:$0xff]
    %v4916 = vld [vmem:[%s4908 + $0x38] sm:$0xff]
    %s4917 = scalar_lea.vmem [#allocation21], 1
    %v4918 = vld [vmem:[%s4917] sm:$0x1]
    %v4920 = vlaneseq
    %v4921 = vshrl.u32 %v4920, 7
    %v4922 = vsub.s32 0, %v4921
    %v4923 = vrot.slane %v4918, %v4922
    %v4926 = vsel %vm2620, %v4904, 0
    %v4929 = vsel %vm2620, %v4905, 0
    %v4932 = vsel %vm2620, %v4906, 0
    %v4935 = vsel %vm2620, %v4907, 0
    %4937 = vmatprep.subr.mxu0 0.0
    %4938 = vmatpush1.msra.mxu0 0.0
    %4939 = vmatprep.subr.mxu0 0.0
    %4940 = vmatpush1.msra.mxu0 0.0
    %4941 = vmatprep.subr.mxu0 0.0
    %4942 = vmatpush1.msra.mxu0 0.0
    %4943 = vmatprep.subr.mxu0 0.0
    %4944 = vmatpush1.msra.mxu0 0.0
    %4945 = vmatprep.subr.mxu0 0.0
    %4946 = vmatpush1.msra.mxu0 0.0
    %4947 = vmatprep.subr.mxu0 0.0
    %4948 = vmatpush1.msra.mxu0 0.0
    %4949 = vmatprep.subr.mxu0 0.0
    %4950 = vmatpush1.msra.mxu0 0.0
    %4951 = vmatprep.subr.mxu0 0.0
    %4952 = vmatpush1.msra.mxu0 0.0
    %4953 = vmatprep.subr.mxu0 0.0
    %4954 = vmatpush1.msra.mxu0 %v4916
    %4955 = vmatprep.subr.mxu0 0.0
    %4956 = vmatpush1.msra.mxu0 %v4915
    %4957 = vmatprep.subr.mxu0 0.0
    %4958 = vmatpush1.msra.mxu0 %v4914
    %4959 = vmatprep.subr.mxu0 0.0
    %4960 = vmatpush1.msra.mxu0 %v4913
    %4961 = vmatprep.subr.mxu0 0.0
    %4962 = vmatpush1.msra.mxu0 %v4912
    %4963 = vmatprep.subr.mxu0 0.0
    %4964 = vmatpush1.msra.mxu0 %v4911
    %4965 = vmatprep.subr.mxu0 0.0
    %4966 = vmatpush1.msra.mxu0 %v4910
    %4967 = vmatprep.subr.mxu0 0.0
    %4968 = vmatpush1.msra.mxu0 %v4909
    %4969 = vmatprep.subr.mxu0 0.0
    %4970 = vmatpush2.msra.mxu0 0.0
    %4971 = vmatprep.subr.mxu0 0.0
    %4972 = vmatpush2.msra.mxu0 0.0
    %4973 = vmatprep.subr.mxu0 0.0
    %4974 = vmatpush2.msra.mxu0 0.0
    %4975 = vmatprep.subr.mxu0 0.0
    %4976 = vmatpush2.msra.mxu0 0.0
    %4977 = vmatprep.subr.mxu0 0.0
    %4978 = vmatpush2.msra.mxu0 0.0
    %4979 = vmatprep.subr.mxu0 0.0
    %4980 = vmatpush2.msra.mxu0 0.0
    %4981 = vmatprep.subr.mxu0 0.0
    %4982 = vmatpush2.msra.mxu0 0.0
    %4983 = vmatprep.subr.mxu0 0.0
    %4984 = vmatpush2.msra.mxu0 0.0
    %4985 = vmatprep.subr.mxu0 0.0
    %4986 = vmatpush2.msra.mxu0 0.0
    %4987 = vmatprep.subr.mxu0 0.0
    %4988 = vmatpush2.msra.mxu0 0.0
    %4989 = vmatprep.subr.mxu0 0.0
    %4990 = vmatpush2.msra.mxu0 0.0
    %4991 = vmatprep.subr.mxu0 0.0
    %4992 = vmatpush2.msra.mxu0 0.0
    %4993 = vmatprep.subr.mxu0 0.0
    %4994 = vmatpush2.msra.mxu0 0.0
    %4995 = vmatprep.subr.mxu0 0.0
    %4996 = vmatpush2.msra.mxu0 0.0
    %4997 = vmatprep.subr.mxu0 0.0
    %4998 = vmatpush2.msra.mxu0 0.0
    %4999 = vmatprep.subr.mxu0 0.0
    %5000 = vmatpush2.msra.mxu0 0.0
    %5001 = vmatprep.mubr.f32.mxu0 0.0
    %5002 = vmatmul.mubr.f32.gmra.mxu0 %v4926
    %v5003 = vpop.f32.mrf.mxu0
    %v5004 = vadd.f32 %v4923, %v5003
    %v5005 = vpop.f32.mrf.mxu0
    %5006 = vmatprep.mubr.f32.mxu0 0.0
    %5007 = vmatmul.mubr.f32.gmra.mxu0 %v4929
    %v5008 = vpop.f32.mrf.mxu0
    %v5009 = vadd.f32 %v4923, %v5008
    %v5010 = vpop.f32.mrf.mxu0
    %5011 = vmatprep.mubr.f32.mxu0 0.0
    %5012 = vmatmul.mubr.f32.gmra.mxu0 %v4932
    %v5013 = vpop.f32.mrf.mxu0
    %v5014 = vadd.f32 %v4923, %v5013
    %v5015 = vpop.f32.mrf.mxu0
    %5016 = vmatprep.mubr.f32.mxu0 0.0
    %5017 = vmatmul.mubr.f32.gmra.mxu0 %v4935
    %v5018 = vpop.f32.mrf.mxu0
    %v5019 = vadd.f32 %v4923, %v5018
    %v5020 = vpop.f32.mrf.mxu0
    %5021 = vdwg.mxu0
    %v5022 = vadd.f32 %v4698, %v5004
    %v5023 = vadd.f32 %v4699, %v5009
    %v5024 = vadd.f32 %v4700, %v5014
    %v5025 = vadd.f32 %v4701, %v5019
    %v5026 = vld [vmem:[#allocation23] sm:$0x1]
    %v5027 = vld [vmem:[#allocation24] sm:$0x1]
    %v5028 = vsel %vm425, %v5022, 0.0
    %5029 = vadd.xlane.f32.xlu0 %v5028
    %v5030 = vpop.xlane.xlu0 %5029
    %v5031 = vsel %vm425, %v5023, 0.0
    %5032 = vadd.xlane.f32.xlu0 %v5031
    %v5033 = vpop.xlane.xlu0 %5032
    %v5034 = vsel %vm425, %v5024, 0.0
    %5035 = vadd.xlane.f32.xlu0 %v5034
    %v5036 = vpop.xlane.xlu0 %5035
    %v5037 = vsel %vm425, %v5025, 0.0
    %5038 = vadd.xlane.f32.xlu0 %v5037
    %v5039 = vpop.xlane.xlu0 %5038
    %v5040 = vmul.f32 %v5030, %v438
    %v5041 = vmul.f32 %v5033, %v438
    %v5042 = vmul.f32 %v5036, %v438
    %v5043 = vmul.f32 %v5039, %v438
    %v5044 = vsub.f32 %v5022, %v5040
    %v5045 = vsub.f32 %v5023, %v5041
    %v5046 = vsub.f32 %v5024, %v5042
    %v5047 = vsub.f32 %v5025, %v5043
    %v5048 = vmul.f32 %v5044, %v5044
    %v5049 = vmul.f32 %v5045, %v5045
    %v5050 = vmul.f32 %v5046, %v5046
    %v5051 = vmul.f32 %v5047, %v5047
    %v5052 = vsel %vm425, %v5048, 0.0
    %5053 = vadd.xlane.f32.xlu0 %v5052
    %v5054 = vpop.xlane.xlu0 %5053
    %v5055 = vsel %vm425, %v5049, 0.0
    %5056 = vadd.xlane.f32.xlu0 %v5055
    %v5057 = vpop.xlane.xlu0 %5056
    %v5058 = vsel %vm425, %v5050, 0.0
    %5059 = vadd.xlane.f32.xlu0 %v5058
    %v5060 = vpop.xlane.xlu0 %5059
    %v5061 = vsel %vm425, %v5051, 0.0
    %5062 = vadd.xlane.f32.xlu0 %v5061
    %v5063 = vpop.xlane.xlu0 %5062
    %v5064 = vmul.f32 %v5054, %v438
    %v5065 = vmul.f32 %v5057, %v438
    %v5066 = vmul.f32 %v5060, %v438
    %v5067 = vmul.f32 %v5063, %v438
    %v5068 = vadd.f32 %v5064, 1e-05
    %v5069 = vadd.f32 %v5065, 1e-05
    %v5070 = vadd.f32 %v5066, 1e-05
    %v5071 = vadd.f32 %v5067, 1e-05
    %v5072 = vrsqrt.pop %v5068
    %v5073 = vrsqrt.pop %v5069
    %v5074 = vrsqrt.pop %v5070
    %v5075 = vrsqrt.pop %v5071
    %v5076 = vmul.f32 %v5044, %v5072
    %v5077 = vmul.f32 %v5045, %v5073
    %v5078 = vmul.f32 %v5046, %v5074
    %v5079 = vmul.f32 %v5047, %v5075
    %v5081 = vlaneseq
    %v5082 = vshrl.u32 %v5081, 7
    %v5083 = vsub.s32 0, %v5082
    %v5084 = vrot.slane %v5026, %v5083
    %v5086 = vmul.f32 %v5076, %v5084
    %v5087 = vmul.f32 %v5077, %v5084
    %v5088 = vmul.f32 %v5078, %v5084
    %v5089 = vmul.f32 %v5079, %v5084
    %v5091 = vlaneseq
    %v5092 = vshrl.u32 %v5091, 7
    %v5093 = vsub.s32 0, %v5092
    %v5094 = vrot.slane %v5027, %v5093
    %v5096 = vadd.f32 %v5086, %v5094
    %v5097 = vadd.f32 %v5087, %v5094
    %v5098 = vadd.f32 %v5088, %v5094
    %v5099 = vadd.f32 %v5089, %v5094
    %v5100 = vld [vmem:[%s18] sm:$0xff]
    %v5101 = vld [vmem:[%s18 + $0x8] sm:$0xff]
    %v5102 = vld [vmem:[%s18 + $0x10] sm:$0xff]
    %v5103 = vld [vmem:[%s18 + $0x18] sm:$0xff]
    %v5104 = vld [vmem:[#allocation26] sm:$0x1]
    %v5106 = vlaneseq
    %v5107 = vshrl.u32 %v5106, 7
    %v5108 = vsub.s32 0, %v5107
    %v5109 = vrot.slane %v5104, %v5108
    %v5112 = vsel %vm425, %v5096, 0
    %v5115 = vsel %vm425, %v5097, 0
    %v5118 = vsel %vm425, %v5098, 0
    %v5121 = vsel %vm425, %v5099, 0
    %5123 = vmatprep.subr.mxu0 0.0
    %5124 = vmatpush1.msra.mxu0 0.0
    %5125 = vmatprep.subr.mxu0 0.0
    %5126 = vmatpush1.msra.mxu0 0.0
    %5127 = vmatprep.subr.mxu0 0.0
    %5128 = vmatpush1.msra.mxu0 0.0
    %5129 = vmatprep.subr.mxu0 0.0
    %5130 = vmatpush1.msra.mxu0 0.0
    %5131 = vmatprep.subr.mxu0 0.0
    %5132 = vmatpush1.msra.mxu0 0.0
    %5133 = vmatprep.subr.mxu0 0.0
    %5134 = vmatpush1.msra.mxu0 0.0
    %5135 = vmatprep.subr.mxu0 0.0
    %5136 = vmatpush1.msra.mxu0 0.0
    %5137 = vmatprep.subr.mxu0 0.0
    %5138 = vmatpush1.msra.mxu0 0.0
    %5139 = vmatprep.subr.mxu0 0.0
    %5140 = vmatpush1.msra.mxu0 0.0
    %5141 = vmatprep.subr.mxu0 0.0
    %5142 = vmatpush1.msra.mxu0 0.0
    %5143 = vmatprep.subr.mxu0 0.0
    %5144 = vmatpush1.msra.mxu0 0.0
    %5145 = vmatprep.subr.mxu0 0.0
    %5146 = vmatpush1.msra.mxu0 0.0
    %5147 = vmatprep.subr.mxu0 0.0
    %5148 = vmatpush1.msra.mxu0 %v5103
    %5149 = vmatprep.subr.mxu0 0.0
    %5150 = vmatpush1.msra.mxu0 %v5102
    %5151 = vmatprep.subr.mxu0 0.0
    %5152 = vmatpush1.msra.mxu0 %v5101
    %5153 = vmatprep.subr.mxu0 0.0
    %5154 = vmatpush1.msra.mxu0 %v5100
    %5155 = vmatprep.subr.mxu0 0.0
    %5156 = vmatpush2.msra.mxu0 0.0
    %5157 = vmatprep.subr.mxu0 0.0
    %5158 = vmatpush2.msra.mxu0 0.0
    %5159 = vmatprep.subr.mxu0 0.0
    %5160 = vmatpush2.msra.mxu0 0.0
    %5161 = vmatprep.subr.mxu0 0.0
    %5162 = vmatpush2.msra.mxu0 0.0
    %5163 = vmatprep.subr.mxu0 0.0
    %5164 = vmatpush2.msra.mxu0 0.0
    %5165 = vmatprep.subr.mxu0 0.0
    %5166 = vmatpush2.msra.mxu0 0.0
    %5167 = vmatprep.subr.mxu0 0.0
    %5168 = vmatpush2.msra.mxu0 0.0
    %5169 = vmatprep.subr.mxu0 0.0
    %5170 = vmatpush2.msra.mxu0 0.0
    %5171 = vmatprep.subr.mxu0 0.0
    %5172 = vmatpush2.msra.mxu0 0.0
    %5173 = vmatprep.subr.mxu0 0.0
    %5174 = vmatpush2.msra.mxu0 0.0
    %5175 = vmatprep.subr.mxu0 0.0
    %5176 = vmatpush2.msra.mxu0 0.0
    %5177 = vmatprep.subr.mxu0 0.0
    %5178 = vmatpush2.msra.mxu0 0.0
    %5179 = vmatprep.subr.mxu0 0.0
    %5180 = vmatpush2.msra.mxu0 0.0
    %5181 = vmatprep.subr.mxu0 0.0
    %5182 = vmatpush2.msra.mxu0 0.0
    %5183 = vmatprep.subr.mxu0 0.0
    %5184 = vmatpush2.msra.mxu0 0.0
    %5185 = vmatprep.subr.mxu0 0.0
    %5186 = vmatpush2.msra.mxu0 0.0
    %5187 = vmatprep.mubr.f32.mxu0 0.0
    %5188 = vmatmul.mubr.f32.gmra.mxu0 %v5112
    %v5189 = vpop.f32.mrf.mxu0
    %v5190 = vadd.f32 %v5109, %v5189
    %v5191 = vpop.f32.mrf.mxu0
    %5192 = vmatprep.mubr.f32.mxu0 0.0
    %5193 = vmatmul.mubr.f32.gmra.mxu0 %v5115
    %v5194 = vpop.f32.mrf.mxu0
    %v5195 = vadd.f32 %v5109, %v5194
    %v5196 = vpop.f32.mrf.mxu0
    %5197 = vmatprep.mubr.f32.mxu0 0.0
    %5198 = vmatmul.mubr.f32.gmra.mxu0 %v5118
    %v5199 = vpop.f32.mrf.mxu0
    %v5200 = vadd.f32 %v5109, %v5199
    %v5201 = vpop.f32.mrf.mxu0
    %5202 = vmatprep.mubr.f32.mxu0 0.0
    %5203 = vmatmul.mubr.f32.gmra.mxu0 %v5121
    %v5204 = vpop.f32.mrf.mxu0
    %v5205 = vadd.f32 %v5109, %v5204
    %v5206 = vpop.f32.mrf.mxu0
    %5207 = vdwg.mxu0
    %v5208 = vmul.f32 %v5190, 0.5
    %v5209 = vmul.f32 %v5195, 0.5
    %v5210 = vmul.f32 %v5200, 0.5
    %v5211 = vmul.f32 %v5205, 0.5
    %v5212 = vmul.f32 %v5190, 0.70710677
    %v5213 = vmul.f32 %v5195, 0.70710677
    %v5214 = vmul.f32 %v5200, 0.70710677
    %v5215 = vmul.f32 %v5205, 0.70710677
    %v5216 = verf.f32.pop %v5212
    %v5217 = verf.f32.pop %v5213
    %v5218 = verf.f32.pop %v5214
    %v5219 = verf.f32.pop %v5215
    %v5220 = vadd.f32 %v5216, 1.0
    %v5221 = vadd.f32 %v5217, 1.0
    %v5222 = vadd.f32 %v5218, 1.0
    %v5223 = vadd.f32 %v5219, 1.0
    %v5224 = vmul.f32 %v5208, %v5220
    %v5225 = vmul.f32 %v5209, %v5221
    %v5226 = vmul.f32 %v5210, %v5222
    %v5227 = vmul.f32 %v5211, %v5223
    %v5228 = vld [vmem:[%s20] sm:$0x1]
    %v5229 = vld [vmem:[%s21] sm:$0x1]
    %v5230 = vsel %vm425, %v5224, 0.0
    %5231 = vadd.xlane.f32.xlu0 %v5230
    %v5232 = vpop.xlane.xlu0 %5231
    %v5233 = vsel %vm425, %v5225, 0.0
    %5234 = vadd.xlane.f32.xlu0 %v5233
    %v5235 = vpop.xlane.xlu0 %5234
    %v5236 = vsel %vm425, %v5226, 0.0
    %5237 = vadd.xlane.f32.xlu0 %v5236
    %v5238 = vpop.xlane.xlu0 %5237
    %v5239 = vsel %vm425, %v5227, 0.0
    %5240 = vadd.xlane.f32.xlu0 %v5239
    %v5241 = vpop.xlane.xlu0 %5240
    %v5242 = vmul.f32 %v5232, %v438
    %v5243 = vmul.f32 %v5235, %v438
    %v5244 = vmul.f32 %v5238, %v438
    %v5245 = vmul.f32 %v5241, %v438
    %v5246 = vsub.f32 %v5224, %v5242
    %v5247 = vsub.f32 %v5225, %v5243
    %v5248 = vsub.f32 %v5226, %v5244
    %v5249 = vsub.f32 %v5227, %v5245
    %v5250 = vmul.f32 %v5246, %v5246
    %v5251 = vmul.f32 %v5247, %v5247
    %v5252 = vmul.f32 %v5248, %v5248
    %v5253 = vmul.f32 %v5249, %v5249
    %v5254 = vsel %vm425, %v5250, 0.0
    %5255 = vadd.xlane.f32.xlu0 %v5254
    %v5256 = vpop.xlane.xlu0 %5255
    %v5257 = vsel %vm425, %v5251, 0.0
    %5258 = vadd.xlane.f32.xlu0 %v5257
    %v5259 = vpop.xlane.xlu0 %5258
    %v5260 = vsel %vm425, %v5252, 0.0
    %5261 = vadd.xlane.f32.xlu0 %v5260
    %v5262 = vpop.xlane.xlu0 %5261
    %v5263 = vsel %vm425, %v5253, 0.0
    %5264 = vadd.xlane.f32.xlu0 %v5263
    %v5265 = vpop.xlane.xlu0 %5264
    %v5266 = vmul.f32 %v5256, %v438
    %v5267 = vmul.f32 %v5259, %v438
    %v5268 = vmul.f32 %v5262, %v438
    %v5269 = vmul.f32 %v5265, %v438
    %v5270 = vadd.f32 %v5266, 1e-05
    %v5271 = vadd.f32 %v5267, 1e-05
    %v5272 = vadd.f32 %v5268, 1e-05
    %v5273 = vadd.f32 %v5269, 1e-05
    %v5274 = vrsqrt.pop %v5270
    %v5275 = vrsqrt.pop %v5271
    %v5276 = vrsqrt.pop %v5272
    %v5277 = vrsqrt.pop %v5273
    %v5278 = vmul.f32 %v5246, %v5274
    %v5279 = vmul.f32 %v5247, %v5275
    %v5280 = vmul.f32 %v5248, %v5276
    %v5281 = vmul.f32 %v5249, %v5277
    %v5283 = vlaneseq
    %v5284 = vshrl.u32 %v5283, 7
    %v5285 = vsub.s32 0, %v5284
    %v5286 = vrot.slane %v5228, %v5285
    %v5288 = vmul.f32 %v5278, %v5286
    %v5289 = vmul.f32 %v5279, %v5286
    %v5290 = vmul.f32 %v5280, %v5286
    %v5291 = vmul.f32 %v5281, %v5286
    %v5293 = vlaneseq
    %v5294 = vshrl.u32 %v5293, 7
    %v5295 = vsub.s32 0, %v5294
    %v5296 = vrot.slane %v5229, %v5295
    %v5298 = vadd.f32 %v5288, %v5296
    %v5299 = vadd.f32 %v5289, %v5296
    %v5300 = vadd.f32 %v5290, %v5296
    %v5301 = vadd.f32 %v5291, %v5296
    %v5302 = vld [vmem:[#allocation27] sm:$0xff]
    %v5303 = vld [vmem:[#allocation27 + $0x8] sm:$0xff]
    %v5304 = vld [vmem:[#allocation27 + $0x10] sm:$0xff]
    %v5305 = vld [vmem:[#allocation27 + $0x18] sm:$0xff]
    %v5307 = vsel %vm425, %v5298, 0
    %v5310 = vsel %vm425, %v5299, 0
    %v5313 = vsel %vm425, %v5300, 0
    %v5316 = vsel %vm425, %v5301, 0
    %5318 = vmatprep.subr.mxu0 0.0
    %5319 = vmatpush1.msra.mxu0 0.0
    %5320 = vmatprep.subr.mxu0 0.0
    %5321 = vmatpush1.msra.mxu0 0.0
    %5322 = vmatprep.subr.mxu0 0.0
    %5323 = vmatpush1.msra.mxu0 0.0
    %5324 = vmatprep.subr.mxu0 0.0
    %5325 = vmatpush1.msra.mxu0 0.0
    %5326 = vmatprep.subr.mxu0 0.0
    %5327 = vmatpush1.msra.mxu0 0.0
    %5328 = vmatprep.subr.mxu0 0.0
    %5329 = vmatpush1.msra.mxu0 0.0
    %5330 = vmatprep.subr.mxu0 0.0
    %5331 = vmatpush1.msra.mxu0 0.0
    %5332 = vmatprep.subr.mxu0 0.0
    %5333 = vmatpush1.msra.mxu0 0.0
    %5334 = vmatprep.subr.mxu0 0.0
    %5335 = vmatpush1.msra.mxu0 0.0
    %5336 = vmatprep.subr.mxu0 0.0
    %5337 = vmatpush1.msra.mxu0 0.0
    %5338 = vmatprep.subr.mxu0 0.0
    %5339 = vmatpush1.msra.mxu0 0.0
    %5340 = vmatprep.subr.mxu0 0.0
    %5341 = vmatpush1.msra.mxu0 0.0
    %5342 = vmatprep.subr.mxu0 0.0
    %5343 = vmatpush1.msra.mxu0 %v5305
    %5344 = vmatprep.subr.mxu0 0.0
    %5345 = vmatpush1.msra.mxu0 %v5304
    %5346 = vmatprep.subr.mxu0 0.0
    %5347 = vmatpush1.msra.mxu0 %v5303
    %5348 = vmatprep.subr.mxu0 0.0
    %5349 = vmatpush1.msra.mxu0 %v5302
    %5350 = vmatprep.subr.mxu0 0.0
    %5351 = vmatpush2.msra.mxu0 0.0
    %5352 = vmatprep.subr.mxu0 0.0
    %5353 = vmatpush2.msra.mxu0 0.0
    %5354 = vmatprep.subr.mxu0 0.0
    %5355 = vmatpush2.msra.mxu0 0.0
    %5356 = vmatprep.subr.mxu0 0.0
    %5357 = vmatpush2.msra.mxu0 0.0
    %5358 = vmatprep.subr.mxu0 0.0
    %5359 = vmatpush2.msra.mxu0 0.0
    %5360 = vmatprep.subr.mxu0 0.0
    %5361 = vmatpush2.msra.mxu0 0.0
    %5362 = vmatprep.subr.mxu0 0.0
    %5363 = vmatpush2.msra.mxu0 0.0
    %5364 = vmatprep.subr.mxu0 0.0
    %5365 = vmatpush2.msra.mxu0 0.0
    %5366 = vmatprep.subr.mxu0 0.0
    %5367 = vmatpush2.msra.mxu0 0.0
    %5368 = vmatprep.subr.mxu0 0.0
    %5369 = vmatpush2.msra.mxu0 0.0
    %5370 = vmatprep.subr.mxu0 0.0
    %5371 = vmatpush2.msra.mxu0 0.0
    %5372 = vmatprep.subr.mxu0 0.0
    %5373 = vmatpush2.msra.mxu0 0.0
    %5374 = vmatprep.subr.mxu0 0.0
    %5375 = vmatpush2.msra.mxu0 0.0
    %5376 = vmatprep.subr.mxu0 0.0
    %5377 = vmatpush2.msra.mxu0 0.0
    %5378 = vmatprep.subr.mxu0 0.0
    %5379 = vmatpush2.msra.mxu0 0.0
    %5380 = vmatprep.subr.mxu0 0.0
    %5381 = vmatpush2.msra.mxu0 0.0
    %5382 = vmatprep.mubr.f32.mxu0 0.0
    %5383 = vmatmul.mubr.f32.gmra.mxu0 %v5307
    %v5384 = vpop.f32.mrf.mxu0
    %v5385 = vadd.f32 0.0, %v5384
    %v5386 = vpop.f32.mrf.mxu0
    %5387 = vmatprep.mubr.f32.mxu0 0.0
    %5388 = vmatmul.mubr.f32.gmra.mxu0 %v5310
    %v5389 = vpop.f32.mrf.mxu0
    %v5390 = vadd.f32 0.0, %v5389
    %v5391 = vpop.f32.mrf.mxu0
    %5392 = vmatprep.mubr.f32.mxu0 0.0
    %5393 = vmatmul.mubr.f32.gmra.mxu0 %v5313
    %v5394 = vpop.f32.mrf.mxu0
    %v5395 = vadd.f32 0.0, %v5394
    %v5396 = vpop.f32.mrf.mxu0
    %5397 = vmatprep.mubr.f32.mxu0 0.0
    %5398 = vmatmul.mubr.f32.gmra.mxu0 %v5316
    %v5399 = vpop.f32.mrf.mxu0
    %v5400 = vadd.f32 0.0, %v5399
    %v5401 = vpop.f32.mrf.mxu0
    %5402 = vdwg.mxu0
    %v5403 = vld [vmem:[#allocation29] sm:$0xff]
    %v5404 = vld [vmem:[#allocation29 + $0x8] sm:$0xff]
    %v5405 = vadd.f32 %v5385, %v5403
    %v5406 = vadd.f32 %v5390, %v5404
    %v5407 = vadd.f32 %v5395, %v5403
    %v5408 = vadd.f32 %v5400, %v5404
    %5409 = vst.msk [vmem:[#allocation30] sm:$0xff] %vm2620, %v5405
    %5410 = vst.msk [vmem:[#allocation30 + $0x8] sm:$0xff] %vm2620, %v5406
    %5411 = vst.msk [vmem:[#allocation30 + $0x10] sm:$0xff] %vm2620, %v5407
    %5412 = vst.msk [vmem:[#allocation30 + $0x18] sm:$0xff] %vm2620, %v5408
    // Predicated region
    $region166: #{tpu_custom_call.1} parent=1 // pred_check
      _
    $region167: #{tpu_custom_call.1} parent=1 // pred_check_branch
      %5414 = sbr.rel (0) target = $region169
    $region168: #{tpu_custom_call.1} parent=1 // pred_region
      %s5416 = ssub.s32 512, 512
      %5417 = vsyncadd [#allocation5], %s5416
      %s5418 = sshll.u32 [#allocation30], 4
      %s5419 = int_to_ptr.vmem [resolvable:$true] %s5418
      %5424 = dma.vmem_to_hbm [thread:$0]  %s5419, 512, %s24, [#allocation5], 128, 128, 8
    $region169: #{tpu_custom_call.1} parent=1 // pred_fallthru
      _
    // Predicated region
    $region170: #{tpu_custom_call.1} parent=1 // pred_check
      _
    $region171: #{tpu_custom_call.1} parent=1 // pred_check_branch
      %5426 = sbr.rel (0) target = $region173
    $region172: #{tpu_custom_call.1} parent=1 // pred_region
      %5427 = dma.done [#allocation5], 512
    $region173: #{tpu_custom_call.1} parent=1 // pred_fallthru
      _
    %5428 = vsyncpa [#allocation4], 1
    %5429 = vsyncpa [#allocation7], 1
    %5430 = vsyncpa [#allocation10], 1
    %5431 = vsyncpa [#allocation13], 1
    %5432 = vsyncpa [#allocation16], 1
    %5433 = vsyncpa [#allocation19], 1
    %5434 = vsyncpa [#allocation22], 1
    %5435 = vsyncpa [#allocation25], 1
    %5436 = vsyncpa [#allocation28], 1
    %5437 = vsyncpa [#allocation5], 1

</llo_original>
